<compile_context>
chip_gen: v7x
topology: tpu7x:2x2x1
jax: 0.10.0
libtpu: 0.0.40
codegen_flags: <defaults>
</compile_context>

<pallas_src>
import math

import jax
import jax.numpy as jnp
from jax.experimental import pallas as pl
from jax.experimental.pallas import tpu as pltpu


# -----------------------------------------------------------------------------
# Kernel
# -----------------------------------------------------------------------------
def _make_conv_kernel(kh, kw, sh, sw, dh, dw, t_oh, ow_pad, use_acc):
    """One grid step computes a (batch, group, spatial-row-tile, Cout-tile)
    output block.  Cin chunks (grid axis 4) are accumulated only when needed
    (use_acc); the kh*kw taps are unrolled in-kernel as contiguous VMEM
    windows on the resident channels-last input slab."""
    m_tile = t_oh * ow_pad
    taps = [(ti, tj) for ti in range(kh) for tj in range(kw)]

    def _partial(x_ref, w_ref):
        # first output row of this spatial tile (within the phase slab)
        row0 = pl.multiple_of(pl.program_id(3) * t_oh, t_oh)
        acc = None
        for idx, (ti, tj) in enumerate(taps):
            h0, w0 = ti * dh, tj * dw
            p = (h0 % sh) * sw + (w0 % sw)         # phase slab (static)
            qh, qw = h0 // sh, w0 // sw            # offset inside the slab
            patch = x_ref[p, 0, pl.ds(row0 + qh, t_oh), pl.ds(qw, ow_pad), :]
            # ow_pad is a sublane multiple -> this reshape is a free relayout.
            patch = patch.reshape(m_tile, patch.shape[-1])
            contrib = jnp.dot(patch, w_ref[0, idx],
                              preferred_element_type=jnp.float32)
            acc = contrib if acc is None else acc + contrib
        return acc

    if use_acc:
        def kernel(x_ref, w_ref, b_ref, o_ref, acc_ref):
            kc = pl.program_id(4)

            @pl.when(kc == 0)
            def _init():
                acc_ref[...] = jnp.zeros_like(acc_ref)

            acc_ref[...] += _partial(x_ref, w_ref)

            @pl.when(kc == pl.num_programs(4) - 1)
            def _finalize():
                o_ref[0, 0] = (acc_ref[...] + b_ref[0]).astype(o_ref.dtype)
    else:
        def kernel(x_ref, w_ref, b_ref, o_ref):
            o_ref[0, 0] = (_partial(x_ref, w_ref) + b_ref[0]).astype(o_ref.dtype)

    return kernel


def _pick_tile(full_dim, candidates):
    """Full dim when it is <= the largest candidate (keeps nj / nkc at 1),
    otherwise the largest 128-multiple candidate dividing it, else full dim."""
    if full_dim <= candidates[0]:
        return full_dim
    for c in candidates:
        if full_dim % c == 0:
            return c
    return full_dim


# -----------------------------------------------------------------------------
# Conv2d forward
# -----------------------------------------------------------------------------
def conv2d_forward(x, weight, bias=None, padding=(0, 0), stride=(1, 1),
                   dilation=(1, 1), groups=1, compute_dtype=jnp.bfloat16):
    """x: (N, Cin, H, W); weight: (Cout, Cin/groups, kh, kw); bias: (Cout,).
    Returns (N, Cout, oh, ow) in x.dtype (NCHW, matching the module).
    MXU operands default to bf16; accumulation is always f32."""
    pair = lambda v: (v, v) if isinstance(v, int) else tuple(v)
    ph_, pw_ = pair(padding)
    sh, sw = pair(stride)
    dh, dw = pair(dilation)

    B, Cin, H, W = x.shape
    Cout, Cin_g, kh, kw = weight.shape
    G = groups
    assert Cin % G == 0 and Cout % G == 0 and Cin // G == Cin_g
    Cout_g = Cout // G

    if bias is None:
        bias = jnp.zeros((Cout,), jnp.float32)

    comp_dt = jnp.dtype(compute_dtype)
    out_dt = x.dtype
    out_item = jnp.dtype(out_dt).itemsize

    Hp, Wp = H + 2 * ph_, W + 2 * pw_
    oh = (Hp - dh * (kh - 1) - 1) // sh + 1
    ow = (Wp - dw * (kw - 1) - 1) // sw + 1
    assert oh > 0 and ow > 0

    qh_max = ((kh - 1) * dh) // sh
    qw_max = ((kw - 1) * dw) // sw
    P = sh * sw

    # ---------------- tiling -------------------------------------------------
    tn = _pick_tile(Cout_g, (512, 256, 128))   # N (Cout) tile: nj==1 when <=512
    tc = _pick_tile(Cin_g, (512, 256, 128))    # K (Cin) chunk, 256-friendly
    nj = Cout_g // tn
    nkc = Cin_g // tc

    # pad output width to a sublane multiple of the compute dtype
    sub = 8 if comp_dt.itemsize >= 4 else 32 // comp_dt.itemsize
    ow_pad = -(-ow // sub) * sub

    # chip-gated VMEM budget: ~75% of physical, capped at 100 MiB
    try:
        vmem_cap = pltpu.get_tpu_info().vmem_capacity_bytes
    except Exception:
        vmem_cap = 64 * 1024 * 1024
    vmem_limit = min(int(vmem_cap) * 3 // 4, 100 * 1024 * 1024)

    # spatial (output-row) tile sized against the VMEM budget
    t_oh = max(1, min(oh, max(1, 2048 // ow_pad)))
    while True:
        n_s = -(-oh // t_oh)
        oh_pad = n_s * t_oh
        Hq_pad = max(-(-Hp // sh), qh_max + oh_pad)
        Wq_pad = max(-(-Wp // sw), qw_max + ow_pad)
        m_tile = t_oh * ow_pad
        vmem_need = (2 * P * Hq_pad * Wq_pad * tc * comp_dt.itemsize   # input (2-buf)
                     + 2 * kh * kw * tc * tn * comp_dt.itemsize        # weights
                     + 2 * m_tile * tn * out_item                      # out block
                     + (m_tile * tn * 4 if nkc > 1 else 0)             # f32 acc
                     + 2 * tn * 4)                                     # bias
        if t_oh == 1 or vmem_need <= (vmem_limit * 4) // 5:
            break
        t_oh = max(1, t_oh // 2)

    # ---------------- layout glue (cheap single passes, no im2col) ----------
    # channels-last with groups split out: (B*G, Hp, Wp, Cin_g)
    x_nhwc = jnp.transpose(x.reshape(B, G, Cin_g, H, W), (0, 1, 3, 4, 2))
    x_nhwc = x_nhwc.reshape(B * G, H, W, Cin_g)
    xp = jnp.pad(x_nhwc, ((0, 0), (ph_, ph_), (pw_, pw_), (0, 0)))

    # phase decomposition of the stride: sh*sw slabs, total ~= one input copy.
    slabs = []
    for pa in range(sh):
        for pb in range(sw):
            s = xp[:, pa::sh, pb::sw, :]
            s = jnp.pad(s, ((0, 0), (0, Hq_pad - s.shape[1]),
                            (0, Wq_pad - s.shape[2]), (0, 0)))
            slabs.append(s)
    xph = jnp.stack(slabs, axis=0).astype(comp_dt)   # (P, B*G, Hq_pad, Wq_pad, Cin_g)

    # weight -> (G, kh*kw, Cin_g, Cout_g); bias -> (G, 1, Cout_g)
    w_r = jnp.transpose(weight.reshape(G, Cout_g, Cin_g, kh, kw), (0, 3, 4, 2, 1))
    w_r = w_r.reshape(G, kh * kw, Cin_g, Cout_g).astype(comp_dt)
    b_r = bias.astype(jnp.float32).reshape(G, 1, Cout_g)

    # ---------------- pallas_call -------------------------------------------
    kernel = _make_conv_kernel(kh, kw, sh, sw, dh, dw, t_oh, ow_pad,
                               use_acc=(nkc > 1))

    flops = 2 * B * (oh_pad * ow_pad) * (Cin_g * kh * kw) * Cout
    in_reads = nj * (1 if nkc == 1 else n_s)
    w_reads = 1 if nkc == 1 else B * n_s
    bytes_accessed = (xph.size * xph.dtype.itemsize * in_reads
                      + w_r.size * w_r.dtype.itemsize * w_reads
                      + b_r.size * 4
                      + B * G * oh_pad * ow_pad * Cout_g * out_item)

    scratch = [pltpu.VMEM((m_tile, tn), jnp.float32)] if nkc > 1 else []

    out = pl.pallas_call(
        kernel,
        out_shape=jax.ShapeDtypeStruct((B, G, oh_pad * ow_pad, Cout_g), out_dt),
        # grid order: weights stay resident across batch & spatial tiles
        # (their index_map ignores b, s); input slab stays resident across s.
        grid=(G, nj, B, n_s, nkc),
        in_specs=[
            # padded NHWC input (all stride phases): one (batch, group) slab,
            # one Cin chunk; constant along the spatial-tile axis -> no re-DMA.
            pl.BlockSpec((P, 1, Hq_pad, Wq_pad, tc),
                         lambda g, j, b, s, k: (0, b * G + g, 0, 0, k)),
            # weights: (group, all taps, Cin chunk, Cout tile)
            pl.BlockSpec((1, kh * kw, tc, tn),
                         lambda g, j, b, s, k: (g, 0, k, j)),
            # bias: (group, 1, Cout tile)
            pl.BlockSpec((1, 1, tn),
                         lambda g, j, b, s, k: (g, 0, j)),
        ],
        out_specs=pl.BlockSpec((1, 1, m_tile, tn),
                               lambda g, j, b, s, k: (b, g, s, j)),
        scratch_shapes=scratch,
        compiler_params=pltpu.CompilerParams(
            dimension_semantics=("parallel", "parallel", "parallel",
                                 "parallel", "arbitrary"),
            vmem_limit_bytes=vmem_limit,
        ),
        cost_estimate=pl.CostEstimate(flops=flops, transcendentals=0,
                                      bytes_accessed=bytes_accessed),
    )(xph, w_r, b_r)

    # (B, G, oh_pad*ow_pad, Cout_g) -> NCHW (module contract), dropping the
    # padded rows/cols that only ever saw zero-padded input.
    out = out.reshape(B, G, oh_pad, ow_pad, Cout_g)[:, :, :oh, :ow, :]
    out = jnp.transpose(out, (0, 1, 4, 2, 3)).reshape(B, Cout, oh, ow)
    return out


# -----------------------------------------------------------------------------
# Parameter init (mirrors Conv2d.init_parameters: final uniform(-stdv, stdv),
# stdv = 1 / sqrt(in_channels * kh * kw))
# -----------------------------------------------------------------------------
def init_conv2d_params(key, in_channels, out_channels, kernel_size, groups=1, use_bias=True):
    kh, kw = kernel_size
    stdv = 1.0 / math.sqrt(in_channels * kh * kw)
    k_w, k_b = jax.random.split(key)
    # NOTE: the reference module allocates weight with full in_channels; the
    # conv itself consumes the standard (Cout, Cin/groups, kh, kw) layout.
    weight = jax.random.uniform(
        k_w, (out_channels, in_channels // groups, kh, kw),
        dtype=jnp.float32, minval=-stdv, maxval=stdv)
    if use_bias:
        bias = jax.random.uniform(
            k_b, (out_channels,), dtype=jnp.float32, minval=-stdv, maxval=stdv)
    else:
        bias = jnp.zeros((out_channels,), jnp.float32)
    return weight, bias


def _reference_conv(x, w, b, padding, stride, dilation, groups):
    y = jax.lax.conv_general_dilated(
        x, w, window_strides=stride,
        padding=[(padding[0], padding[0]), (padding[1], padding[1])],
        rhs_dilation=dilation, feature_group_count=groups,
        dimension_numbers=("NCHW", "OIHW", "NCHW"))
    return y + b[None, :, None, None]


# -----------------------------------------------------------------------------
if __name__ == "__main__":
    key = jax.random.PRNGKey(0)
    k_x, k_p, k_x2, k_p2 = jax.random.split(key, 4)

    # Config 1: 3x3, padding 1, stride 1, groups 1 (matches the module demo).
    batch, in_ch, out_ch, hw = 2, 4, 8, 16
    pad, strd, dil, grp = (1, 1), (1, 1), (1, 1), 1
    x = jax.random.normal(k_x, (batch, in_ch, hw, hw), dtype=jnp.float32)
    w, b = init_conv2d_params(k_p, in_ch, out_ch, (3, 3), grp, True)
    y_ref = _reference_conv(x, w, b, pad, strd, dil, grp)

    # f32 MXU operands: tight check.
    y_f32 = jax.block_until_ready(
        conv2d_forward(x, w, b, pad, strd, dil, grp, compute_dtype=jnp.float32))
    assert y_f32.shape == (batch, out_ch, hw, hw), y_f32.shape
    assert jnp.allclose(y_f32, y_ref, atol=5e-3, rtol=5e-3), \
        float(jnp.max(jnp.abs(y_f32 - y_ref)))

    # Default path: bf16 MXU operands, f32 accumulation -> loose check.
    y_bf16 = jax.block_until_ready(conv2d_forward(x, w, b, pad, strd, dil, grp))
    assert jnp.allclose(y_bf16, y_ref, atol=5e-2, rtol=5e-2), \
        float(jnp.max(jnp.abs(y_bf16 - y_ref)))

    # Config 2: groups=2, stride=2, dilation=2, padding=2 (same kernel).
    in2, out2 = 8, 16
    x2 = jax.random.normal(k_x2, (batch, in2, hw, hw), dtype=jnp.float32)
    w2, b2 = init_conv2d_params(k_p2, in2, out2, (3, 3), 2, True)
    y2_ref = _reference_conv(x2, w2, b2, (2, 2), (2, 2), (2, 2), 2)
    y2 = jax.block_until_ready(
        conv2d_forward(x2, w2, b2, (2, 2), (2, 2), (2, 2), 2))
    assert y2.shape == y2_ref.shape, (y2.shape, y2_ref.shape)
    assert jnp.allclose(y2, y2_ref, atol=5e-2, rtol=5e-2), \
        float(jnp.max(jnp.abs(y2 - y2_ref)))
    y2_f32 = jax.block_until_ready(
        conv2d_forward(x2, w2, b2, (2, 2), (2, 2), (2, 2), 2,
                       compute_dtype=jnp.float32))
    assert jnp.allclose(y2_f32, y2_ref, atol=5e-3, rtol=5e-3), \
        float(jnp.max(jnp.abs(y2_f32 - y2_ref)))

    print("KERNEL_OK")
</pallas_src>

<mosaic_0001>
module attributes {stable_mosaic.version = 11 : i64} {
  func.func @kernel(%arg0: i32, %arg1: i32, %arg2: i32, %arg3: i32, %arg4: i32, %arg5: memref<1x1x18x18x4xf32, #tpu.memory_space<vmem>>, %arg6: memref<1x9x4x8xf32, #tpu.memory_space<vmem>>, %arg7: memref<1x1x8xf32, #tpu.memory_space<vmem>>, %arg8: memref<1x1x256x8xf32, #tpu.memory_space<vmem>>) attributes {dimension_semantics = [#tpu.dimension_semantics<parallel>, #tpu.dimension_semantics<parallel>, #tpu.dimension_semantics<parallel>, #tpu.dimension_semantics<parallel>, #tpu.dimension_semantics<arbitrary>], iteration_bounds = array<i64: 1, 1, 2, 1, 1>, scalar_prefetch = 0 : i64, scratch_operands = 0 : i64, tpu.core_type = #tpu.core_type<tc>, window_params = [{transform_indices = @transform_0, window_bounds = array<i64: 1, 1, 18, 18, 4>}, {transform_indices = @transform_1, window_bounds = array<i64: 1, 9, 4, 8>}, {transform_indices = @transform_2, window_bounds = array<i64: 1, 1, 8>}, {transform_indices = @transform_3, window_bounds = array<i64: 1, 1, 256, 8>}]} {
    %c16_i32 = arith.constant 16 : i32
    %0 = arith.muli %arg3, %c16_i32 : i32
    %1 = tpu.assume_multiple %0, 16 : i32
    %c0_i32 = arith.constant 0 : i32
    %2 = arith.addi %1, %c0_i32 : i32
    %c0 = arith.constant 0 : index
    %c0_0 = arith.constant 0 : index
    %3 = arith.index_cast %2 : i32 to index
    %c0_1 = arith.constant 0 : index
    %c0_2 = arith.constant 0 : index
    %4 = vector.load %arg5[%c0, %c0_0, %3, %c0_1, %c0_2] : memref<1x1x18x18x4xf32, #tpu.memory_space<vmem>>, vector<1x1x16x16x4xf32>
    %5 = vector.shape_cast %4 : vector<1x1x16x16x4xf32> to vector<16x16x4xf32>
    %6 = vector.shape_cast %5 : vector<16x16x4xf32> to vector<256x4xf32>
    %c0_3 = arith.constant 0 : index
    %c0_4 = arith.constant 0 : index
    %c0_5 = arith.constant 0 : index
    %c0_6 = arith.constant 0 : index
    %7 = vector.load %arg6[%c0_3, %c0_4, %c0_5, %c0_6] : memref<1x9x4x8xf32, #tpu.memory_space<vmem>>, vector<1x1x4x8xf32>
    %8 = vector.shape_cast %7 : vector<1x1x4x8xf32> to vector<4x8xf32>
    %cst = arith.constant dense<0.000000e+00> : vector<256x8xf32>
    %9 = tpu.matmul %6, %8, %cst {dimension_numbers = #tpu.dot_dimension_numbers<[1], [0], [0], [1], [0, 0, 1, 1], [], []>} : vector<256x4xf32>, vector<4x8xf32>, vector<256x8xf32> -> vector<256x8xf32>
    %c0_i32_7 = arith.constant 0 : i32
    %10 = arith.addi %1, %c0_i32_7 : i32
    %c0_8 = arith.constant 0 : index
    %c0_9 = arith.constant 0 : index
    %11 = arith.index_cast %10 : i32 to index
    %c1 = arith.constant 1 : index
    %c0_10 = arith.constant 0 : index
    %12 = vector.load %arg5[%c0_8, %c0_9, %11, %c1, %c0_10] : memref<1x1x18x18x4xf32, #tpu.memory_space<vmem>>, vector<1x1x16x16x4xf32>
    %13 = vector.shape_cast %12 : vector<1x1x16x16x4xf32> to vector<16x16x4xf32>
    %14 = vector.shape_cast %13 : vector<16x16x4xf32> to vector<256x4xf32>
    %c0_11 = arith.constant 0 : index
    %c1_12 = arith.constant 1 : index
    %c0_13 = arith.constant 0 : index
    %c0_14 = arith.constant 0 : index
    %15 = vector.load %arg6[%c0_11, %c1_12, %c0_13, %c0_14] : memref<1x9x4x8xf32, #tpu.memory_space<vmem>>, vector<1x1x4x8xf32>
    %16 = vector.shape_cast %15 : vector<1x1x4x8xf32> to vector<4x8xf32>
    %cst_15 = arith.constant dense<0.000000e+00> : vector<256x8xf32>
    %17 = tpu.matmul %14, %16, %cst_15 {dimension_numbers = #tpu.dot_dimension_numbers<[1], [0], [0], [1], [0, 0, 1, 1], [], []>} : vector<256x4xf32>, vector<4x8xf32>, vector<256x8xf32> -> vector<256x8xf32>
    %18 = arith.addf %9, %17 : vector<256x8xf32>
    %c0_i32_16 = arith.constant 0 : i32
    %19 = arith.addi %1, %c0_i32_16 : i32
    %c0_17 = arith.constant 0 : index
    %c0_18 = arith.constant 0 : index
    %20 = arith.index_cast %19 : i32 to index
    %c2 = arith.constant 2 : index
    %c0_19 = arith.constant 0 : index
    %21 = vector.load %arg5[%c0_17, %c0_18, %20, %c2, %c0_19] : memref<1x1x18x18x4xf32, #tpu.memory_space<vmem>>, vector<1x1x16x16x4xf32>
    %22 = vector.shape_cast %21 : vector<1x1x16x16x4xf32> to vector<16x16x4xf32>
    %23 = vector.shape_cast %22 : vector<16x16x4xf32> to vector<256x4xf32>
    %c0_20 = arith.constant 0 : index
    %c2_21 = arith.constant 2 : index
    %c0_22 = arith.constant 0 : index
    %c0_23 = arith.constant 0 : index
    %24 = vector.load %arg6[%c0_20, %c2_21, %c0_22, %c0_23] : memref<1x9x4x8xf32, #tpu.memory_space<vmem>>, vector<1x1x4x8xf32>
    %25 = vector.shape_cast %24 : vector<1x1x4x8xf32> to vector<4x8xf32>
    %cst_24 = arith.constant dense<0.000000e+00> : vector<256x8xf32>
    %26 = tpu.matmul %23, %25, %cst_24 {dimension_numbers = #tpu.dot_dimension_numbers<[1], [0], [0], [1], [0, 0, 1, 1], [], []>} : vector<256x4xf32>, vector<4x8xf32>, vector<256x8xf32> -> vector<256x8xf32>
    %27 = arith.addf %18, %26 : vector<256x8xf32>
    %c1_i32 = arith.constant 1 : i32
    %28 = arith.addi %1, %c1_i32 : i32
    %c0_25 = arith.constant 0 : index
    %c0_26 = arith.constant 0 : index
    %29 = arith.index_cast %28 : i32 to index
    %c0_27 = arith.constant 0 : index
    %c0_28 = arith.constant 0 : index
    %30 = vector.load %arg5[%c0_25, %c0_26, %29, %c0_27, %c0_28] : memref<1x1x18x18x4xf32, #tpu.memory_space<vmem>>, vector<1x1x16x16x4xf32>
    %31 = vector.shape_cast %30 : vector<1x1x16x16x4xf32> to vector<16x16x4xf32>
    %32 = vector.shape_cast %31 : vector<16x16x4xf32> to vector<256x4xf32>
    %c0_29 = arith.constant 0 : index
    %c3 = arith.constant 3 : index
    %c0_30 = arith.constant 0 : index
    %c0_31 = arith.constant 0 : index
    %33 = vector.load %arg6[%c0_29, %c3, %c0_30, %c0_31] : memref<1x9x4x8xf32, #tpu.memory_space<vmem>>, vector<1x1x4x8xf32>
    %34 = vector.shape_cast %33 : vector<1x1x4x8xf32> to vector<4x8xf32>
    %cst_32 = arith.constant dense<0.000000e+00> : vector<256x8xf32>
    %35 = tpu.matmul %32, %34, %cst_32 {dimension_numbers = #tpu.dot_dimension_numbers<[1], [0], [0], [1], [0, 0, 1, 1], [], []>} : vector<256x4xf32>, vector<4x8xf32>, vector<256x8xf32> -> vector<256x8xf32>
    %36 = arith.addf %27, %35 : vector<256x8xf32>
    %c1_i32_33 = arith.constant 1 : i32
    %37 = arith.addi %1, %c1_i32_33 : i32
    %c0_34 = arith.constant 0 : index
    %c0_35 = arith.constant 0 : index
    %38 = arith.index_cast %37 : i32 to index
    %c1_36 = arith.constant 1 : index
    %c0_37 = arith.constant 0 : index
    %39 = vector.load %arg5[%c0_34, %c0_35, %38, %c1_36, %c0_37] : memref<1x1x18x18x4xf32, #tpu.memory_space<vmem>>, vector<1x1x16x16x4xf32>
    %40 = vector.shape_cast %39 : vector<1x1x16x16x4xf32> to vector<16x16x4xf32>
    %41 = vector.shape_cast %40 : vector<16x16x4xf32> to vector<256x4xf32>
    %c0_38 = arith.constant 0 : index
    %c4 = arith.constant 4 : index
    %c0_39 = arith.constant 0 : index
    %c0_40 = arith.constant 0 : index
    %42 = vector.load %arg6[%c0_38, %c4, %c0_39, %c0_40] : memref<1x9x4x8xf32, #tpu.memory_space<vmem>>, vector<1x1x4x8xf32>
    %43 = vector.shape_cast %42 : vector<1x1x4x8xf32> to vector<4x8xf32>
    %cst_41 = arith.constant dense<0.000000e+00> : vector<256x8xf32>
    %44 = tpu.matmul %41, %43, %cst_41 {dimension_numbers = #tpu.dot_dimension_numbers<[1], [0], [0], [1], [0, 0, 1, 1], [], []>} : vector<256x4xf32>, vector<4x8xf32>, vector<256x8xf32> -> vector<256x8xf32>
    %45 = arith.addf %36, %44 : vector<256x8xf32>
    %c1_i32_42 = arith.constant 1 : i32
    %46 = arith.addi %1, %c1_i32_42 : i32
    %c0_43 = arith.constant 0 : index
    %c0_44 = arith.constant 0 : index
    %47 = arith.index_cast %46 : i32 to index
    %c2_45 = arith.constant 2 : index
    %c0_46 = arith.constant 0 : index
    %48 = vector.load %arg5[%c0_43, %c0_44, %47, %c2_45, %c0_46] : memref<1x1x18x18x4xf32, #tpu.memory_space<vmem>>, vector<1x1x16x16x4xf32>
    %49 = vector.shape_cast %48 : vector<1x1x16x16x4xf32> to vector<16x16x4xf32>
    %50 = vector.shape_cast %49 : vector<16x16x4xf32> to vector<256x4xf32>
    %c0_47 = arith.constant 0 : index
    %c5 = arith.constant 5 : index
    %c0_48 = arith.constant 0 : index
    %c0_49 = arith.constant 0 : index
    %51 = vector.load %arg6[%c0_47, %c5, %c0_48, %c0_49] : memref<1x9x4x8xf32, #tpu.memory_space<vmem>>, vector<1x1x4x8xf32>
    %52 = vector.shape_cast %51 : vector<1x1x4x8xf32> to vector<4x8xf32>
    %cst_50 = arith.constant dense<0.000000e+00> : vector<256x8xf32>
    %53 = tpu.matmul %50, %52, %cst_50 {dimension_numbers = #tpu.dot_dimension_numbers<[1], [0], [0], [1], [0, 0, 1, 1], [], []>} : vector<256x4xf32>, vector<4x8xf32>, vector<256x8xf32> -> vector<256x8xf32>
    %54 = arith.addf %45, %53 : vector<256x8xf32>
    %c2_i32 = arith.constant 2 : i32
    %55 = arith.addi %1, %c2_i32 : i32
    %c0_51 = arith.constant 0 : index
    %c0_52 = arith.constant 0 : index
    %56 = arith.index_cast %55 : i32 to index
    %c0_53 = arith.constant 0 : index
    %c0_54 = arith.constant 0 : index
    %57 = vector.load %arg5[%c0_51, %c0_52, %56, %c0_53, %c0_54] : memref<1x1x18x18x4xf32, #tpu.memory_space<vmem>>, vector<1x1x16x16x4xf32>
    %58 = vector.shape_cast %57 : vector<1x1x16x16x4xf32> to vector<16x16x4xf32>
    %59 = vector.shape_cast %58 : vector<16x16x4xf32> to vector<256x4xf32>
    %c0_55 = arith.constant 0 : index
    %c6 = arith.constant 6 : index
    %c0_56 = arith.constant 0 : index
    %c0_57 = arith.constant 0 : index
    %60 = vector.load %arg6[%c0_55, %c6, %c0_56, %c0_57] : memref<1x9x4x8xf32, #tpu.memory_space<vmem>>, vector<1x1x4x8xf32>
    %61 = vector.shape_cast %60 : vector<1x1x4x8xf32> to vector<4x8xf32>
    %cst_58 = arith.constant dense<0.000000e+00> : vector<256x8xf32>
    %62 = tpu.matmul %59, %61, %cst_58 {dimension_numbers = #tpu.dot_dimension_numbers<[1], [0], [0], [1], [0, 0, 1, 1], [], []>} : vector<256x4xf32>, vector<4x8xf32>, vector<256x8xf32> -> vector<256x8xf32>
    %63 = arith.addf %54, %62 : vector<256x8xf32>
    %c2_i32_59 = arith.constant 2 : i32
    %64 = arith.addi %1, %c2_i32_59 : i32
    %c0_60 = arith.constant 0 : index
    %c0_61 = arith.constant 0 : index
    %65 = arith.index_cast %64 : i32 to index
    %c1_62 = arith.constant 1 : index
    %c0_63 = arith.constant 0 : index
    %66 = vector.load %arg5[%c0_60, %c0_61, %65, %c1_62, %c0_63] : memref<1x1x18x18x4xf32, #tpu.memory_space<vmem>>, vector<1x1x16x16x4xf32>
    %67 = vector.shape_cast %66 : vector<1x1x16x16x4xf32> to vector<16x16x4xf32>
    %68 = vector.shape_cast %67 : vector<16x16x4xf32> to vector<256x4xf32>
    %c0_64 = arith.constant 0 : index
    %c7 = arith.constant 7 : index
    %c0_65 = arith.constant 0 : index
    %c0_66 = arith.constant 0 : index
    %69 = vector.load %arg6[%c0_64, %c7, %c0_65, %c0_66] : memref<1x9x4x8xf32, #tpu.memory_space<vmem>>, vector<1x1x4x8xf32>
    %70 = vector.shape_cast %69 : vector<1x1x4x8xf32> to vector<4x8xf32>
    %cst_67 = arith.constant dense<0.000000e+00> : vector<256x8xf32>
    %71 = tpu.matmul %68, %70, %cst_67 {dimension_numbers = #tpu.dot_dimension_numbers<[1], [0], [0], [1], [0, 0, 1, 1], [], []>} : vector<256x4xf32>, vector<4x8xf32>, vector<256x8xf32> -> vector<256x8xf32>
    %72 = arith.addf %63, %71 : vector<256x8xf32>
    %c2_i32_68 = arith.constant 2 : i32
    %73 = arith.addi %1, %c2_i32_68 : i32
    %c0_69 = arith.constant 0 : index
    %c0_70 = arith.constant 0 : index
    %74 = arith.index_cast %73 : i32 to index
    %c2_71 = arith.constant 2 : index
    %c0_72 = arith.constant 0 : index
    %75 = vector.load %arg5[%c0_69, %c0_70, %74, %c2_71, %c0_72] : memref<1x1x18x18x4xf32, #tpu.memory_space<vmem>>, vector<1x1x16x16x4xf32>
    %76 = vector.shape_cast %75 : vector<1x1x16x16x4xf32> to vector<16x16x4xf32>
    %77 = vector.shape_cast %76 : vector<16x16x4xf32> to vector<256x4xf32>
    %c0_73 = arith.constant 0 : index
    %c8 = arith.constant 8 : index
    %c0_74 = arith.constant 0 : index
    %c0_75 = arith.constant 0 : index
    %78 = vector.load %arg6[%c0_73, %c8, %c0_74, %c0_75] : memref<1x9x4x8xf32, #tpu.memory_space<vmem>>, vector<1x1x4x8xf32>
    %79 = vector.shape_cast %78 : vector<1x1x4x8xf32> to vector<4x8xf32>
    %cst_76 = arith.constant dense<0.000000e+00> : vector<256x8xf32>
    %80 = tpu.matmul %77, %79, %cst_76 {dimension_numbers = #tpu.dot_dimension_numbers<[1], [0], [0], [1], [0, 0, 1, 1], [], []>} : vector<256x4xf32>, vector<4x8xf32>, vector<256x8xf32> -> vector<256x8xf32>
    %81 = arith.addf %72, %80 : vector<256x8xf32>
    %c0_77 = arith.constant 0 : index
    %c0_78 = arith.constant 0 : index
    %c0_79 = arith.constant 0 : index
    %82 = vector.load %arg7[%c0_77, %c0_78, %c0_79] : memref<1x1x8xf32, #tpu.memory_space<vmem>>, vector<1x1x8xf32>
    %83 = vector.shape_cast %82 : vector<1x1x8xf32> to vector<1x8xf32>
    %84 = vector.broadcast %83 : vector<1x8xf32> to vector<256x8xf32>
    %85 = arith.addf %81, %84 : vector<256x8xf32>
    %c0_80 = arith.constant 0 : index
    %c0_81 = arith.constant 0 : index
    %c0_82 = arith.constant 0 : index
    %c0_83 = arith.constant 0 : index
    %86 = vector.load %arg8[%c0_80, %c0_81, %c0_82, %c0_83] : memref<1x1x256x8xf32, #tpu.memory_space<vmem>>, vector<1x1x256x8xf32>
    %87 = vector.shape_cast %86 : vector<1x1x256x8xf32> to vector<256x8xf32>
    %88 = vector.shape_cast %85 : vector<256x8xf32> to vector<1x1x256x8xf32>
    tpu.vector_store %arg8[%c0_80, %c0_81, %c0_82, %c0_83], %88 {strides = array<i32>} : memref<1x1x256x8xf32, #tpu.memory_space<vmem>>, vector<1x1x256x8xf32>,
    return
  }
  func.func @transform_0(%arg0: i32, %arg1: i32, %arg2: i32, %arg3: i32, %arg4: i32) -> (i32, i32, i32, i32, i32) {
    %c1_i32 = arith.constant 1 : i32
    %0 = arith.muli %arg2, %c1_i32 : i32
    %1 = arith.addi %0, %arg0 : i32
    %c0_i32 = arith.constant 0 : i32
    %c0_i32_0 = arith.constant 0 : i32
    %c0_i32_1 = arith.constant 0 : i32
    %c0_i32_2 = arith.constant 0 : i32
    return %c0_i32, %1, %c0_i32_0, %c0_i32_1, %arg4 : i32, i32, i32, i32, i32
  }
  func.func @transform_1(%arg0: i32, %arg1: i32, %arg2: i32, %arg3: i32, %arg4: i32) -> (i32, i32, i32, i32) {
    %c0_i32 = arith.constant 0 : i32
    %c0_i32_0 = arith.constant 0 : i32
    return %arg0, %c0_i32, %arg4, %arg1 : i32, i32, i32, i32
  }
  func.func @transform_2(%arg0: i32, %arg1: i32, %arg2: i32, %arg3: i32, %arg4: i32) -> (i32, i32, i32) {
    %c0_i32 = arith.constant 0 : i32
    %c0_i32_0 = arith.constant 0 : i32
    return %arg0, %c0_i32, %arg1 : i32, i32, i32
  }
  func.func @transform_3(%arg0: i32, %arg1: i32, %arg2: i32, %arg3: i32, %arg4: i32) -> (i32, i32, i32, i32) {
    %c0_i32 = arith.constant 0 : i32
    return %arg2, %arg0, %arg3, %arg1 : i32, i32, i32, i32
  }
}

</mosaic_0001>

<llo_original>
// kernel: tpu_custom_call.1
$region0: #{tpu_custom_call.1}
  #allocation0 [shape = 'u32[]', space=smem, size = 0x4, offset = 0x4, fixed_abs, tag = 'smem constant byte address 0x4 - core index']
  #allocation1 [shape = 'u32[144,128]{1,0:T(1,128)}', space=vmem, size = 0x12000, scoped, tag = 'internal scratch']
  %s0 = inlined_call_operand.vmem [shape: f32[1,2,18,18,4], index: 0, kind: input, shape index: {}]
  %s1 = inlined_call_operand.vmem [shape: f32[1,9,4,8], index: 1, kind: input, shape index: {}]
  %s2 = inlined_call_operand.vmem [shape: f32[1,1,8], index: 2, kind: input, shape index: {}]
  %s3 = inlined_call_operand.vmem [shape: f32[2,1,256,8], index: 3, kind: output, shape index: {}]
  %s4 = sld [smem:[#allocation0]]
  $region45: #{tpu_custom_call.1} parent=0
    _
  %s6 = ssub.s32 1, %s4
  %s7 = scalar_select 0, %s6, %s4
  loop: start=0, step=1, limit=4
  $region2: #{tpu_custom_call.1} parent=0 // loop_pre_header
    _
  $region3: #{tpu_custom_call.1} parent=0 // loop_header
    %s9 = sphi 0, %s13
    %p10 = scmp.ge.s32.totalorder %s9, 4
    %s16 = sphi 0, %s49
    %s17 = sphi 0, %s45
    %s18 = sphi 0, %s41
    %s19 = sphi 0, %s37
    %s20 = sphi 0, %s33
    %s21 = sphi 0, %s16
    %s22 = sphi 0, %s17
    %s23 = sphi 0, %s18
    %s24 = sphi 0, %s19
    %s25 = sphi 0, %s20
    %s26 = sphi 0, %s21
    %s27 = sphi 0, %s22
    %s28 = sphi 0, %s23
    %s29 = sphi 0, %s24
    %s30 = sphi 0, %s25
    %s56 = sphi 0, %s58
    %s59 = sphi 0, %s56
    %s60 = sphi 0, %s59
    %s76 = sphi 0, %s60
    %s86 = sphi 0, %s88
    %s89 = sphi 0, %s86
    %s90 = sphi 0, %s89
    %s106 = sphi 0, %s90
    %s114 = sphi 0, %s116
    %s117 = sphi 0, %s114
    %s118 = sphi 0, %s117
    %s134 = sphi 0, %s118
    %s146 = sphi 0, %s148
    %s149 = sphi 0, %s146
    %s150 = sphi 0, %s149
    %s166 = sphi 0, %s150
  $region4: #{tpu_custom_call.1} parent=0 // loop_header_branch
    %12 = sbr.rel (%p10) target = $region8
  $region5: #{tpu_custom_call.1} parent=0 // loop_body
    %s14 = ssub.s32 %s9, 1
    %s15 = ssub.s32 %s9, 2
    %s31 = sadd.s32 1, %s20
    %p32 = scmp.ge.s32.totalorder %s31, 1
    %s33 = scalar_select %p32, 0, %s31
    %s34 = sadd.s32 1, %s19
    %s35 = scalar_select %p32, %s34, %s19
    %p36 = scmp.ge.s32.totalorder %s35, 1
    %s37 = scalar_select %p36, 0, %s35
    %s38 = sadd.s32 1, %s18
    %s39 = scalar_select %p36, %s38, %s18
    %p40 = scmp.ge.s32.totalorder %s39, 2
    %s41 = scalar_select %p40, 0, %s39
    %s42 = sadd.s32 1, %s17
    %s43 = scalar_select %p40, %s42, %s17
    %p44 = scmp.ge.s32.totalorder %s43, 1
    %s45 = scalar_select %p44, 0, %s43
    %s46 = sadd.s32 1, %s16
    %s47 = scalar_select %p44, %s46, %s16
    %p48 = scmp.ge.s32.totalorder %s47, 1
    %s49 = scalar_select %p48, 0, %s47
    %s50 = sadd.s32 %s18, %s16
    %s51 = sadd.s32 %s41, %s49
    %s52 = ssub.s32 %s50, %s51
    %s53 = ssub.s32 %s20, %s33
    %s54 = sor.u32 %s52, %s53
    %p55 = scmp.eq.s32.totalorder %s54, 0
    %s57 = sadd.s32 %s56, 1
    %s58 = scalar_select %p55, %s56, %s57
    %p61 = pneg %p55
    %p62 = scmp.eq.s32.totalorder %s9, 1
    %p63 = por %p61, %p62
    %p64 = scmp.ne.s32.totalorder %s56, %s59
    %p65 = scmp.eq.s32.totalorder %s9, 0
    %p66 = por %p64, %p65
    %p67 = scmp.ne.s32.totalorder %s56, %s59
    %p68 = scmp.eq.s32.totalorder %s14, 1
    %p69 = por %p67, %p68
    %p70 = scmp.ne.s32.totalorder %s59, %s60
    %p71 = scmp.eq.s32.totalorder %s14, 0
    %p72 = por %p70, %p71
    %p73 = scmp.ne.s32.totalorder %s59, %s60
    %p74 = scmp.eq.s32.totalorder %s15, 1
    %p75 = por %p73, %p74
    %p77 = scmp.ne.s32.totalorder %s60, %s76
    %p78 = scmp.eq.s32.totalorder %s15, 0
    %p79 = por %p77, %p78
    %s80 = ssub.s32 %s16, %s49
    %s81 = ssub.s32 %s20, %s33
    %s82 = sor.u32 %s80, %s81
    %s83 = ssub.s32 %s17, %s45
    %s84 = sor.u32 %s82, %s83
    %p85 = scmp.eq.s32.totalorder %s84, 0
    %s87 = sadd.s32 %s86, 1
    %s88 = scalar_select %p85, %s86, %s87
    %p91 = pneg %p85
    %p92 = scmp.eq.s32.totalorder %s9, 1
    %p93 = por %p91, %p92
    %p94 = scmp.ne.s32.totalorder %s86, %s89
    %p95 = scmp.eq.s32.totalorder %s9, 0
    %p96 = por %p94, %p95
    %p97 = scmp.ne.s32.totalorder %s86, %s89
    %p98 = scmp.eq.s32.totalorder %s14, 1
    %p99 = por %p97, %p98
    %p100 = scmp.ne.s32.totalorder %s89, %s90
    %p101 = scmp.eq.s32.totalorder %s14, 0
    %p102 = por %p100, %p101
    %p103 = scmp.ne.s32.totalorder %s89, %s90
    %p104 = scmp.eq.s32.totalorder %s15, 1
    %p105 = por %p103, %p104
    %p107 = scmp.ne.s32.totalorder %s90, %s106
    %p108 = scmp.eq.s32.totalorder %s15, 0
    %p109 = por %p107, %p108
    %s110 = ssub.s32 %s16, %s49
    %s111 = ssub.s32 %s17, %s45
    %s112 = sor.u32 %s110, %s111
    %p113 = scmp.eq.s32.totalorder %s112, 0
    %s115 = sadd.s32 %s114, 1
    %s116 = scalar_select %p113, %s114, %s115
    %p119 = pneg %p113
    %p120 = scmp.eq.s32.totalorder %s9, 1
    %p121 = por %p119, %p120
    %p122 = scmp.ne.s32.totalorder %s114, %s117
    %p123 = scmp.eq.s32.totalorder %s9, 0
    %p124 = por %p122, %p123
    %p125 = scmp.ne.s32.totalorder %s114, %s117
    %p126 = scmp.eq.s32.totalorder %s14, 1
    %p127 = por %p125, %p126
    %p128 = scmp.ne.s32.totalorder %s117, %s118
    %p129 = scmp.eq.s32.totalorder %s14, 0
    %p130 = por %p128, %p129
    %p131 = scmp.ne.s32.totalorder %s117, %s118
    %p132 = scmp.eq.s32.totalorder %s15, 1
    %p133 = por %p131, %p132
    %p135 = scmp.ne.s32.totalorder %s118, %s134
    %p136 = scmp.eq.s32.totalorder %s15, 0
    %p137 = por %p135, %p136
    %s138 = ssub.s32 %s18, %s41
    %s139 = ssub.s32 %s16, %s49
    %s140 = sor.u32 %s138, %s139
    %s141 = ssub.s32 %s19, %s37
    %s142 = sor.u32 %s140, %s141
    %s143 = ssub.s32 %s17, %s45
    %s144 = sor.u32 %s142, %s143
    %p145 = scmp.eq.s32.totalorder %s144, 0
    %s147 = sadd.s32 %s146, 1
    %s148 = scalar_select %p145, %s146, %s147
    %p151 = pneg %p145
    %p152 = scmp.eq.s32.totalorder %s9, 1
    %p153 = por %p151, %p152
    %p154 = scmp.ne.s32.totalorder %s146, %s149
    %p155 = scmp.eq.s32.totalorder %s9, 0
    %p156 = por %p154, %p155
    %p157 = scmp.ne.s32.totalorder %s146, %s149
    %p158 = scmp.eq.s32.totalorder %s14, 1
    %p159 = por %p157, %p158
    %p160 = scmp.ne.s32.totalorder %s149, %s150
    %p161 = scmp.eq.s32.totalorder %s14, 0
    %p162 = por %p160, %p161
    %p163 = scmp.ne.s32.totalorder %s149, %s150
    %p164 = scmp.eq.s32.totalorder %s15, 1
    %p165 = por %p163, %p164
    %p167 = scmp.ne.s32.totalorder %s150, %s166
    %p168 = scmp.eq.s32.totalorder %s15, 0
    %p169 = por %p167, %p168
    %p170 = scmp.le.s32.totalorder 1, %s9
    %p171 = scmp.lt.s32.totalorder %s9, 3
    %p172 = pnand %p170, %p171
    %p173 = pneg %p172
    // Predicated region
    $region9: #{tpu_custom_call.1} parent=5 // pred_check
      _
    $region10: #{tpu_custom_call.1} parent=5 // pred_check_branch
      %175 = sbr.rel (%p172) target = $region12
    $region11: #{tpu_custom_call.1} parent=5 // pred_region
      %s176 = ssub.s32 %s9, 1
      // Predicated region
      $region13: #{tpu_custom_call.1} parent=11 // pred_check
        %p177 = pneg %p102
      $region14: #{tpu_custom_call.1} parent=11 // pred_check_branch
        %179 = sbr.rel (%p177) target = $region16
      $region15: #{tpu_custom_call.1} parent=11 // pred_region
        %p180 = scmp.lt.s32.totalorder %s21, 0
        %s181 = scalar_select %p180, %s21, 0
        %p182 = scmp.lt.s32.totalorder %s25, 0
        %s183 = scalar_select %p182, %s25, 0
        %p184 = scmp.lt.s32.totalorder %s22, 0
        %s185 = scalar_select %p184, %s22, 0
        %s186 = sadd.s32 %s185, %s183
        %s187 = smul.addr %s181, 9
        %s188 = sadd.s32 %s186, %s187
        %s189 = smul.addr %s188, 4
        %s190 = scalar_lea.vmem %s1, %s189
      $region16: #{tpu_custom_call.1} parent=11 // pred_fallthru
        _
      // Predicated region
      $region17: #{tpu_custom_call.1} parent=11 // pred_check
        %p191 = pneg %p130
      $region18: #{tpu_custom_call.1} parent=11 // pred_check_branch
        %193 = sbr.rel (%p191) target = $region20
      $region19: #{tpu_custom_call.1} parent=11 // pred_region
        %p194 = scmp.lt.s32.totalorder %s21, 0
        %s195 = scalar_select %p194, %s21, 0
        %p196 = scmp.lt.s32.totalorder %s22, 0
        %s197 = scalar_select %p196, %s22, 0
        %s198 = sadd.s32 %s197, %s195
        %s199 = scalar_lea.vmem %s2, %s198
      $region20: #{tpu_custom_call.1} parent=11 // pred_fallthru
        _
    $region12: #{tpu_custom_call.1} parent=5 // pred_fallthru
      _
    %p200 = scmp.lt.s32.totalorder %s9, 2
    // Predicated region
    $region21: #{tpu_custom_call.1} parent=5 // pred_check
      %p201 = pneg %p200
    $region22: #{tpu_custom_call.1} parent=5 // pred_check_branch
      %203 = sbr.rel (%p201) target = $region24
    $region23: #{tpu_custom_call.1} parent=5 // pred_region
      // Predicated region
      $region25: #{tpu_custom_call.1} parent=23 // pred_check
        %p204 = pneg %p66
      $region26: #{tpu_custom_call.1} parent=23 // pred_check_branch
        %206 = sbr.rel (%p204) target = $region28
      $region27: #{tpu_custom_call.1} parent=23 // pred_region
        %s207 = sadd.s32 %s18, %s16
        %p208 = scmp.lt.s32.totalorder %s207, 1
        %s209 = scalar_select %p208, %s207, 1
        %p210 = scmp.lt.s32.totalorder %s20, 0
        %s211 = scalar_select %p210, %s20, 0
        %s212 = smul.addr %s209, 54
        %s213 = sadd.s32 %s211, %s212
        %s214 = smul.addr %s213, 8
        %s215 = scalar_lea.vmem %s0, %s214
        %s216 = sadd.s32 %s18, %s16
      $region28: #{tpu_custom_call.1} parent=23 // pred_fallthru
        _
    $region24: #{tpu_custom_call.1} parent=5 // pred_fallthru
      _
    %p217 = scmp.le.s32.totalorder 1, %s9
    %p218 = scmp.lt.s32.totalorder %s9, 3
    %p219 = pnand %p217, %p218
    %p220 = pneg %p219
    // Predicated region
    $region29: #{tpu_custom_call.1} parent=5 // pred_check
      _
    $region30: #{tpu_custom_call.1} parent=5 // pred_check_branch
      %222 = sbr.rel (%p219) target = $region32
    $region31: #{tpu_custom_call.1} parent=5 // pred_region
      %s223 = ssub.s32 %s9, 1
      %s224 = sadd.s32 %s23, %s21
      %p225 = scmp.lt.s32.totalorder %s224, 1
      %s226 = scalar_select %p225, %s224, 1
      %p227 = scmp.lt.s32.totalorder %s25, 0
      %s228 = scalar_select %p227, %s25, 0
      %s229 = smul.addr %s226, 54
      %s230 = sadd.s32 %s228, %s229
      %s231 = smul.addr %s230, 8
      %s232 = scalar_lea.vmem %s0, %s231
      %p233 = pneg %p72
      %p234 = pneg %p69
      %p235 = scmp.lt.s32.totalorder %s21, 0
      %s236 = scalar_select %p235, %s21, 0
      %p237 = scmp.lt.s32.totalorder %s25, 0
      %s238 = scalar_select %p237, %s25, 0
      %p239 = scmp.lt.s32.totalorder %s22, 0
      %s240 = scalar_select %p239, %s22, 0
      %s241 = sadd.s32 %s240, %s238
      %s242 = smul.addr %s236, 9
      %s243 = sadd.s32 %s241, %s242
      %s244 = smul.addr %s243, 4
      %s245 = scalar_lea.vmem %s1, %s244
      %p246 = pneg %p102
      %p247 = pneg %p99
      %p248 = scmp.lt.s32.totalorder %s21, 0
      %s249 = scalar_select %p248, %s21, 0
      %p250 = scmp.lt.s32.totalorder %s22, 0
      %s251 = scalar_select %p250, %s22, 0
      %s252 = sadd.s32 %s251, %s249
      %s253 = scalar_lea.vmem %s2, %s252
      %p254 = pneg %p130
      %p255 = pneg %p127
      %p256 = pneg %p162
      %p257 = pneg %p159
      %s258 = smul.u32 32, %s24
      %p259 = scmp.lt.s32.totalorder %s23, 1
      %s260 = scalar_select %p259, %s23, 1
      %p261 = scmp.lt.s32.totalorder %s21, 0
      %s262 = scalar_select %p261, %s21, 0
      %p263 = scmp.lt.s32.totalorder %s258, 31
      %s264 = scalar_select %p263, %s258, 31
      %p265 = scmp.lt.s32.totalorder %s22, 0
      %s266 = scalar_select %p265, %s22, 0
      %s267 = sadd.s32 %s266, %s264
      %s268 = smul.addr %s262, 32
      %s269 = sadd.s32 %s267, %s268
      %s270 = smul.addr %s260, 32
      %s271 = sadd.s32 %s269, %s270
      %s272 = smul.addr %s271, 8
      %s273 = scalar_lea.vmem %s3, %s272
      %s274 = sadd.s32 %s23, %s21
      %p275 = scmp.lt.s32.totalorder %s274, 1
      %s276 = scalar_select %p275, %s274, 1
      %p277 = scmp.lt.s32.totalorder %s25, 0
      %s278 = scalar_select %p277, %s25, 0
      %s279 = smul.addr %s276, 54
      %s280 = sadd.s32 %s278, %s279
      %s281 = smul.addr %s280, 8
      %s282 = scalar_lea.vmem %s0, %s281
      %s283 = sadd.s32 %s23, %s21
      %p284 = scmp.lt.s32.totalorder %s21, 0
      %s285 = scalar_select %p284, %s21, 0
      %p286 = scmp.lt.s32.totalorder %s25, 0
      %s287 = scalar_select %p286, %s25, 0
      %p288 = scmp.lt.s32.totalorder %s22, 0
      %s289 = scalar_select %p288, %s22, 0
      %s290 = sadd.s32 %s289, %s287
      %s291 = smul.addr %s285, 9
      %s292 = sadd.s32 %s290, %s291
      %s293 = smul.addr %s292, 4
      %s294 = scalar_lea.vmem %s1, %s293
      %p295 = scmp.lt.s32.totalorder %s21, 0
      %s296 = scalar_select %p295, %s21, 0
      %p297 = scmp.lt.s32.totalorder %s22, 0
      %s298 = scalar_select %p297, %s22, 0
      %s299 = sadd.s32 %s298, %s296
      %s300 = scalar_lea.vmem %s2, %s299
      %s301 = smul.u32 32, %s24
      %p302 = scmp.lt.s32.totalorder %s23, 1
      %s303 = scalar_select %p302, %s23, 1
      %p304 = scmp.lt.s32.totalorder %s21, 0
      %s305 = scalar_select %p304, %s21, 0
      %p306 = scmp.lt.s32.totalorder %s301, 31
      %s307 = scalar_select %p306, %s301, 31
      %p308 = scmp.lt.s32.totalorder %s22, 0
      %s309 = scalar_select %p308, %s22, 0
      %s310 = sadd.s32 %s309, %s307
      %s311 = smul.addr %s305, 32
      %s312 = sadd.s32 %s310, %s311
      %s313 = smul.addr %s303, 32
      %s314 = sadd.s32 %s312, %s313
      %s315 = smul.addr %s314, 8
      %s316 = scalar_lea.vmem %s3, %s315
      %s317 = smul.u32 32, %s24
      %s318 = smul.u32 %s24, 16
      %s319 = smul.u32 %s318, 24
      %s320 = scalar_lea.vmem %s282, %s319
      %v321 = vld [vmem:[%s320] sm:$0xff]
      %v322 = vld [vmem:[%s320 + $0x8] sm:$0xff]
      %v323 = vld [vmem:[%s320 + $0x18] sm:$0xff]
      %v324 = vld [vmem:[%s320 + $0x20] sm:$0xff]
      %v325 = vld [vmem:[%s320 + $0x30] sm:$0xff]
      %v326 = vld [vmem:[%s320 + $0x38] sm:$0xff]
      %v327 = vld [vmem:[%s320 + $0x48] sm:$0xff]
      %v328 = vld [vmem:[%s320 + $0x50] sm:$0xff]
      %v329 = vld [vmem:[%s320 + $0x60] sm:$0xff]
      %v330 = vld [vmem:[%s320 + $0x68] sm:$0xff]
      %v331 = vld [vmem:[%s320 + $0x78] sm:$0xff]
      %v332 = vld [vmem:[%s320 + $0x80] sm:$0xff]
      %v333 = vld [vmem:[%s320 + $0x90] sm:$0xff]
      %v334 = vld [vmem:[%s320 + $0x98] sm:$0xff]
      %v335 = vld [vmem:[%s320 + $0xa8] sm:$0xff]
      %v336 = vld [vmem:[%s320 + $0xb0] sm:$0xff]
      %v337 = vld [vmem:[%s320 + $0xc0] sm:$0xff]
      %v338 = vld [vmem:[%s320 + $0xc8] sm:$0xff]
      %v339 = vld [vmem:[%s320 + $0xd8] sm:$0xff]
      %v340 = vld [vmem:[%s320 + $0xe0] sm:$0xff]
      %v341 = vld [vmem:[%s320 + $0xf0] sm:$0xff]
      %v342 = vld [vmem:[%s320 + $0xf8] sm:$0xff]
      %v343 = vld [vmem:[%s320 + $0x108] sm:$0xff]
      %v344 = vld [vmem:[%s320 + $0x110] sm:$0xff]
      %v345 = vld [vmem:[%s320 + $0x120] sm:$0xff]
      %v346 = vld [vmem:[%s320 + $0x128] sm:$0xff]
      %v347 = vld [vmem:[%s320 + $0x138] sm:$0xff]
      %v348 = vld [vmem:[%s320 + $0x140] sm:$0xff]
      %v349 = vld [vmem:[%s320 + $0x150] sm:$0xff]
      %v350 = vld [vmem:[%s320 + $0x158] sm:$0xff]
      %v351 = vld [vmem:[%s320 + $0x168] sm:$0xff]
      %v352 = vld [vmem:[%s320 + $0x170] sm:$0xff]
      %v353 = vld [vmem:[%s294] sm:$0xf]
      %v354 = vld [vmem:[%s320 + $0x1] sm:$0xff]
      %v355 = vld [vmem:[%s320 + $0x9] sm:$0xff]
      %v356 = vld [vmem:[%s320 + $0x19] sm:$0xff]
      %v357 = vld [vmem:[%s320 + $0x21] sm:$0xff]
      %v358 = vld [vmem:[%s320 + $0x31] sm:$0xff]
      %v359 = vld [vmem:[%s320 + $0x39] sm:$0xff]
      %v360 = vld [vmem:[%s320 + $0x49] sm:$0xff]
      %v361 = vld [vmem:[%s320 + $0x51] sm:$0xff]
      %v362 = vld [vmem:[%s320 + $0x61] sm:$0xff]
      %v363 = vld [vmem:[%s320 + $0x69] sm:$0xff]
      %v364 = vld [vmem:[%s320 + $0x79] sm:$0xff]
      %v365 = vld [vmem:[%s320 + $0x81] sm:$0xff]
      %v366 = vld [vmem:[%s320 + $0x91] sm:$0xff]
      %v367 = vld [vmem:[%s320 + $0x99] sm:$0xff]
      %v368 = vld [vmem:[%s320 + $0xa9] sm:$0xff]
      %v369 = vld [vmem:[%s320 + $0xb1] sm:$0xff]
      %v370 = vld [vmem:[%s320 + $0xc1] sm:$0xff]
      %v371 = vld [vmem:[%s320 + $0xc9] sm:$0xff]
      %v372 = vld [vmem:[%s320 + $0xd9] sm:$0xff]
      %v373 = vld [vmem:[%s320 + $0xe1] sm:$0xff]
      %v374 = vld [vmem:[%s320 + $0xf1] sm:$0xff]
      %v375 = vld [vmem:[%s320 + $0xf9] sm:$0xff]
      %v376 = vld [vmem:[%s320 + $0x109] sm:$0xff]
      %v377 = vld [vmem:[%s320 + $0x111] sm:$0xff]
      %v378 = vld [vmem:[%s320 + $0x121] sm:$0xff]
      %v379 = vld [vmem:[%s320 + $0x129] sm:$0xff]
      %v380 = vld [vmem:[%s320 + $0x139] sm:$0xff]
      %v381 = vld [vmem:[%s320 + $0x141] sm:$0xff]
      %v382 = vld [vmem:[%s320 + $0x151] sm:$0xff]
      %v383 = vld [vmem:[%s320 + $0x159] sm:$0xff]
      %v384 = vld [vmem:[%s320 + $0x169] sm:$0xff]
      %v385 = vld [vmem:[%s320 + $0x171] sm:$0xff]
      %s386 = scalar_lea.vmem %s294, 4
      %v387 = vld [vmem:[%s386] sm:$0xf]
      %vm388 = vcmask 31744
      %v390 = vsel %vm388, %v354, 0
      %v393 = vsel %vm388, %v355, 0
      %v396 = vsel %vm388, %v356, 0
      %v399 = vsel %vm388, %v357, 0
      %v402 = vsel %vm388, %v358, 0
      %v405 = vsel %vm388, %v359, 0
      %v408 = vsel %vm388, %v360, 0
      %v411 = vsel %vm388, %v361, 0
      %v414 = vsel %vm388, %v362, 0
      %v417 = vsel %vm388, %v363, 0
      %v420 = vsel %vm388, %v364, 0
      %v423 = vsel %vm388, %v365, 0
      %v426 = vsel %vm388, %v366, 0
      %v429 = vsel %vm388, %v367, 0
      %v432 = vsel %vm388, %v368, 0
      %v435 = vsel %vm388, %v369, 0
      %v438 = vsel %vm388, %v370, 0
      %v441 = vsel %vm388, %v371, 0
      %v444 = vsel %vm388, %v372, 0
      %v447 = vsel %vm388, %v373, 0
      %v450 = vsel %vm388, %v374, 0
      %v453 = vsel %vm388, %v375, 0
      %v456 = vsel %vm388, %v376, 0
      %v459 = vsel %vm388, %v377, 0
      %v462 = vsel %vm388, %v378, 0
      %v465 = vsel %vm388, %v379, 0
      %v468 = vsel %vm388, %v380, 0
      %v471 = vsel %vm388, %v381, 0
      %v474 = vsel %vm388, %v382, 0
      %v477 = vsel %vm388, %v383, 0
      %v480 = vsel %vm388, %v384, 0
      %v483 = vsel %vm388, %v385, 0
      %vm485 = vcmask 1043456
      %v487 = vsel %vm485, %v387, 0
      %489 = vmatprep.subr.mxu0 0.0
      %490 = vmatpush1.msra.mxu0 %v487
      %491 = vmatprep.subr.mxu0 0.0
      %492 = vmatpush1.msra.mxu0 0.0
      %493 = vmatprep.subr.mxu0 0.0
      %494 = vmatpush1.msra.mxu0 0.0
      %495 = vmatprep.subr.mxu0 0.0
      %496 = vmatpush1.msra.mxu0 0.0
      %497 = vmatprep.subr.mxu0 0.0
      %498 = vmatpush1.msra.mxu0 0.0
      %499 = vmatprep.subr.mxu0 0.0
      %500 = vmatpush1.msra.mxu0 0.0
      %501 = vmatprep.subr.mxu0 0.0
      %502 = vmatpush1.msra.mxu0 0.0
      %503 = vmatprep.subr.mxu0 0.0
      %504 = vmatpush1.msra.mxu0 0.0
      %505 = vmatprep.subr.mxu0 0.0
      %506 = vmatpush1.msra.mxu0 0.0
      %507 = vmatprep.subr.mxu0 0.0
      %508 = vmatpush1.msra.mxu0 0.0
      %509 = vmatprep.subr.mxu0 0.0
      %510 = vmatpush1.msra.mxu0 0.0
      %511 = vmatprep.subr.mxu0 0.0
      %512 = vmatpush1.msra.mxu0 0.0
      %513 = vmatprep.subr.mxu0 0.0
      %514 = vmatpush1.msra.mxu0 0.0
      %515 = vmatprep.subr.mxu0 0.0
      %516 = vmatpush1.msra.mxu0 0.0
      %517 = vmatprep.subr.mxu0 0.0
      %518 = vmatpush1.msra.mxu0 0.0
      %519 = vmatprep.subr.mxu0 0.0
      %520 = vmatpush1.msra.mxu0 0.0
      %521 = vmatprep.subr.mxu0 0.0
      %522 = vmatpush1.msra.mxu0 0.0
      %523 = vmatprep.subr.mxu0 0.0
      %524 = vmatpush1.msra.mxu0 0.0
      %525 = vmatprep.subr.mxu0 0.0
      %526 = vmatpush1.msra.mxu0 0.0
      %527 = vmatprep.subr.mxu0 0.0
      %528 = vmatpush1.msra.mxu0 0.0
      %529 = vmatprep.subr.mxu0 0.0
      %530 = vmatpush1.msra.mxu0 0.0
      %531 = vmatprep.subr.mxu0 0.0
      %532 = vmatpush1.msra.mxu0 0.0
      %533 = vmatprep.subr.mxu0 0.0
      %534 = vmatpush1.msra.mxu0 0.0
      %535 = vmatprep.subr.mxu0 0.0
      %536 = vmatpush1.msra.mxu0 0.0
      %537 = vmatprep.subr.mxu0 0.0
      %538 = vmatpush1.msra.mxu0 0.0
      %539 = vmatprep.subr.mxu0 0.0
      %540 = vmatpush1.msra.mxu0 0.0
      %541 = vmatprep.subr.mxu0 0.0
      %542 = vmatpush1.msra.mxu0 0.0
      %543 = vmatprep.subr.mxu0 0.0
      %544 = vmatpush1.msra.mxu0 0.0
      %545 = vmatprep.subr.mxu0 0.0
      %546 = vmatpush1.msra.mxu0 0.0
      %547 = vmatprep.subr.mxu0 0.0
      %548 = vmatpush1.msra.mxu0 0.0
      %549 = vmatprep.subr.mxu0 0.0
      %550 = vmatpush1.msra.mxu0 0.0
      %551 = vmatprep.subr.mxu0 0.0
      %552 = vmatpush1.msra.mxu0 0.0
      %553 = vmatprep.mubr.f32.mxu0 0.0
      %554 = vmatmul.mubr.f32.gmra.mrb[0].mxu0 %v390
      %v555 = vpop.f32.mrb[0].mxu0
      %v556 = vadd.f32 0.0, %v555
      %v557 = vpop.f32.mrb[0].mxu0
      %558 = vmatprep.mubr.f32.mxu0 0.0
      %559 = vmatmul.mubr.f32.gmra.mrb[0].mxu0 %v393
      %v560 = vpop.f32.mrb[0].mxu0
      %v561 = vadd.f32 0.0, %v560
      %v562 = vpop.f32.mrb[0].mxu0
      %563 = vmatprep.mubr.f32.mxu0 0.0
      %564 = vmatmul.mubr.f32.gmra.mrb[0].mxu0 %v396
      %v565 = vpop.f32.mrb[0].mxu0
      %v566 = vadd.f32 0.0, %v565
      %v567 = vpop.f32.mrb[0].mxu0
      %568 = vmatprep.mubr.f32.mxu0 0.0
      %569 = vmatmul.mubr.f32.gmra.mrb[0].mxu0 %v399
      %v570 = vpop.f32.mrb[0].mxu0
      %v571 = vadd.f32 0.0, %v570
      %v572 = vpop.f32.mrb[0].mxu0
      %573 = vmatprep.mubr.f32.mxu0 0.0
      %574 = vmatmul.mubr.f32.gmra.mrb[0].mxu0 %v402
      %v575 = vpop.f32.mrb[0].mxu0
      %v576 = vadd.f32 0.0, %v575
      %v577 = vpop.f32.mrb[0].mxu0
      %578 = vmatprep.mubr.f32.mxu0 0.0
      %579 = vmatmul.mubr.f32.gmra.mrb[0].mxu0 %v405
      %v580 = vpop.f32.mrb[0].mxu0
      %v581 = vadd.f32 0.0, %v580
      %v582 = vpop.f32.mrb[0].mxu0
      %583 = vmatprep.mubr.f32.mxu0 0.0
      %584 = vmatmul.mubr.f32.gmra.mrb[0].mxu0 %v408
      %v585 = vpop.f32.mrb[0].mxu0
      %v586 = vadd.f32 0.0, %v585
      %v587 = vpop.f32.mrb[0].mxu0
      %588 = vmatprep.mubr.f32.mxu0 0.0
      %589 = vmatmul.mubr.f32.gmra.mrb[0].mxu0 %v411
      %v590 = vpop.f32.mrb[0].mxu0
      %v591 = vadd.f32 0.0, %v590
      %v592 = vpop.f32.mrb[0].mxu0
      %593 = vmatprep.mubr.f32.mxu0 0.0
      %594 = vmatmul.mubr.f32.gmra.mrb[0].mxu0 %v414
      %v595 = vpop.f32.mrb[0].mxu0
      %v596 = vadd.f32 0.0, %v595
      %v597 = vpop.f32.mrb[0].mxu0
      %598 = vmatprep.mubr.f32.mxu0 0.0
      %599 = vmatmul.mubr.f32.gmra.mrb[0].mxu0 %v417
      %v600 = vpop.f32.mrb[0].mxu0
      %v601 = vadd.f32 0.0, %v600
      %v602 = vpop.f32.mrb[0].mxu0
      %603 = vmatprep.mubr.f32.mxu0 0.0
      %604 = vmatmul.mubr.f32.gmra.mrb[0].mxu0 %v420
      %v605 = vpop.f32.mrb[0].mxu0
      %v606 = vadd.f32 0.0, %v605
      %v607 = vpop.f32.mrb[0].mxu0
      %608 = vmatprep.mubr.f32.mxu0 0.0
      %609 = vmatmul.mubr.f32.gmra.mrb[0].mxu0 %v423
      %v610 = vpop.f32.mrb[0].mxu0
      %v611 = vadd.f32 0.0, %v610
      %v612 = vpop.f32.mrb[0].mxu0
      %613 = vmatprep.mubr.f32.mxu0 0.0
      %614 = vmatmul.mubr.f32.gmra.mrb[0].mxu0 %v426
      %v615 = vpop.f32.mrb[0].mxu0
      %v616 = vadd.f32 0.0, %v615
      %v617 = vpop.f32.mrb[0].mxu0
      %618 = vmatprep.mubr.f32.mxu0 0.0
      %619 = vmatmul.mubr.f32.gmra.mrb[0].mxu0 %v429
      %v620 = vpop.f32.mrb[0].mxu0
      %v621 = vadd.f32 0.0, %v620
      %v622 = vpop.f32.mrb[0].mxu0
      %623 = vmatprep.mubr.f32.mxu0 0.0
      %624 = vmatmul.mubr.f32.gmra.mrb[0].mxu0 %v432
      %v625 = vpop.f32.mrb[0].mxu0
      %v626 = vadd.f32 0.0, %v625
      %v627 = vpop.f32.mrb[0].mxu0
      %628 = vmatprep.mubr.f32.mxu0 0.0
      %629 = vmatmul.mubr.f32.gmra.mrb[0].mxu0 %v435
      %v630 = vpop.f32.mrb[0].mxu0
      %v631 = vadd.f32 0.0, %v630
      %v632 = vpop.f32.mrb[0].mxu0
      %633 = vmatprep.mubr.f32.mxu0 0.0
      %634 = vmatmul.mubr.f32.gmra.mrb[0].mxu0 %v438
      %v635 = vpop.f32.mrb[0].mxu0
      %v636 = vadd.f32 0.0, %v635
      %v637 = vpop.f32.mrb[0].mxu0
      %638 = vmatprep.mubr.f32.mxu0 0.0
      %639 = vmatmul.mubr.f32.gmra.mrb[0].mxu0 %v441
      %v640 = vpop.f32.mrb[0].mxu0
      %v641 = vadd.f32 0.0, %v640
      %v642 = vpop.f32.mrb[0].mxu0
      %643 = vmatprep.mubr.f32.mxu0 0.0
      %644 = vmatmul.mubr.f32.gmra.mrb[0].mxu0 %v444
      %v645 = vpop.f32.mrb[0].mxu0
      %v646 = vadd.f32 0.0, %v645
      %v647 = vpop.f32.mrb[0].mxu0
      %648 = vmatprep.mubr.f32.mxu0 0.0
      %649 = vmatmul.mubr.f32.gmra.mrb[0].mxu0 %v447
      %v650 = vpop.f32.mrb[0].mxu0
      %v651 = vadd.f32 0.0, %v650
      %v652 = vpop.f32.mrb[0].mxu0
      %653 = vmatprep.mubr.f32.mxu0 0.0
      %654 = vmatmul.mubr.f32.gmra.mrb[0].mxu0 %v450
      %v655 = vpop.f32.mrb[0].mxu0
      %v656 = vadd.f32 0.0, %v655
      %v657 = vpop.f32.mrb[0].mxu0
      %658 = vmatprep.mubr.f32.mxu0 0.0
      %659 = vmatmul.mubr.f32.gmra.mrb[0].mxu0 %v453
      %v660 = vpop.f32.mrb[0].mxu0
      %v661 = vadd.f32 0.0, %v660
      %v662 = vpop.f32.mrb[0].mxu0
      %663 = vmatprep.mubr.f32.mxu0 0.0
      %664 = vmatmul.mubr.f32.gmra.mrb[0].mxu0 %v456
      %v665 = vpop.f32.mrb[0].mxu0
      %v666 = vadd.f32 0.0, %v665
      %v667 = vpop.f32.mrb[0].mxu0
      %668 = vmatprep.mubr.f32.mxu0 0.0
      %669 = vmatmul.mubr.f32.gmra.mrb[0].mxu0 %v459
      %v670 = vpop.f32.mrb[0].mxu0
      %v671 = vadd.f32 0.0, %v670
      %v672 = vpop.f32.mrb[0].mxu0
      %673 = vmatprep.mubr.f32.mxu0 0.0
      %674 = vmatmul.mubr.f32.gmra.mrb[0].mxu0 %v462
      %v675 = vpop.f32.mrb[0].mxu0
      %v676 = vadd.f32 0.0, %v675
      %v677 = vpop.f32.mrb[0].mxu0
      %678 = vmatprep.mubr.f32.mxu0 0.0
      %679 = vmatmul.mubr.f32.gmra.mrb[0].mxu0 %v465
      %v680 = vpop.f32.mrb[0].mxu0
      %v681 = vadd.f32 0.0, %v680
      %v682 = vpop.f32.mrb[0].mxu0
      %683 = vmatprep.mubr.f32.mxu0 0.0
      %684 = vmatmul.mubr.f32.gmra.mrb[0].mxu0 %v468
      %v685 = vpop.f32.mrb[0].mxu0
      %v686 = vadd.f32 0.0, %v685
      %v687 = vpop.f32.mrb[0].mxu0
      %688 = vmatprep.mubr.f32.mxu0 0.0
      %689 = vmatmul.mubr.f32.gmra.mrb[0].mxu0 %v471
      %v690 = vpop.f32.mrb[0].mxu0
      %v691 = vadd.f32 0.0, %v690
      %v692 = vpop.f32.mrb[0].mxu0
      %693 = vmatprep.mubr.f32.mxu0 0.0
      %694 = vmatmul.mubr.f32.gmra.mrb[0].mxu0 %v474
      %v695 = vpop.f32.mrb[0].mxu0
      %v696 = vadd.f32 0.0, %v695
      %v697 = vpop.f32.mrb[0].mxu0
      %698 = vmatprep.mubr.f32.mxu0 0.0
      %699 = vmatmul.mubr.f32.gmra.mrb[0].mxu0 %v477
      %v700 = vpop.f32.mrb[0].mxu0
      %v701 = vadd.f32 0.0, %v700
      %v702 = vpop.f32.mrb[0].mxu0
      %703 = vmatprep.mubr.f32.mxu0 0.0
      %704 = vmatmul.mubr.f32.gmra.mrb[0].mxu0 %v480
      %v705 = vpop.f32.mrb[0].mxu0
      %v706 = vadd.f32 0.0, %v705
      %v707 = vpop.f32.mrb[0].mxu0
      %708 = vmatprep.mubr.f32.mxu0 0.0
      %709 = vmatmul.mubr.f32.gmra.mrb[0].mxu0 %v483
      %v710 = vpop.f32.mrb[0].mxu0
      %v711 = vadd.f32 0.0, %v710
      %v712 = vpop.f32.mrb[0].mxu0
      %713 = vdwg.mxu0
      %v715 = vsel %vm388, %v321, 0
      %v718 = vsel %vm388, %v322, 0
      %v721 = vsel %vm388, %v323, 0
      %v724 = vsel %vm388, %v324, 0
      %v727 = vsel %vm388, %v325, 0
      %v730 = vsel %vm388, %v326, 0
      %v733 = vsel %vm388, %v327, 0
      %v736 = vsel %vm388, %v328, 0
      %v739 = vsel %vm388, %v329, 0
      %v742 = vsel %vm388, %v330, 0
      %v745 = vsel %vm388, %v331, 0
      %v748 = vsel %vm388, %v332, 0
      %v751 = vsel %vm388, %v333, 0
      %v754 = vsel %vm388, %v334, 0
      %v757 = vsel %vm388, %v335, 0
      %v760 = vsel %vm388, %v336, 0
      %v763 = vsel %vm388, %v337, 0
      %v766 = vsel %vm388, %v338, 0
      %v769 = vsel %vm388, %v339, 0
      %v772 = vsel %vm388, %v340, 0
      %v775 = vsel %vm388, %v341, 0
      %v778 = vsel %vm388, %v342, 0
      %v781 = vsel %vm388, %v343, 0
      %v784 = vsel %vm388, %v344, 0
      %v787 = vsel %vm388, %v345, 0
      %v790 = vsel %vm388, %v346, 0
      %v793 = vsel %vm388, %v347, 0
      %v796 = vsel %vm388, %v348, 0
      %v799 = vsel %vm388, %v349, 0
      %v802 = vsel %vm388, %v350, 0
      %v805 = vsel %vm388, %v351, 0
      %v808 = vsel %vm388, %v352, 0
      %v811 = vsel %vm485, %v353, 0
      %813 = vmatprep.subr.mxu0 0.0
      %814 = vmatpush1.msra.mxu0 %v811
      %815 = vmatprep.subr.mxu0 0.0
      %816 = vmatpush1.msra.mxu0 0.0
      %817 = vmatprep.subr.mxu0 0.0
      %818 = vmatpush1.msra.mxu0 0.0
      %819 = vmatprep.subr.mxu0 0.0
      %820 = vmatpush1.msra.mxu0 0.0
      %821 = vmatprep.subr.mxu0 0.0
      %822 = vmatpush1.msra.mxu0 0.0
      %823 = vmatprep.subr.mxu0 0.0
      %824 = vmatpush1.msra.mxu0 0.0
      %825 = vmatprep.subr.mxu0 0.0
      %826 = vmatpush1.msra.mxu0 0.0
      %827 = vmatprep.subr.mxu0 0.0
      %828 = vmatpush1.msra.mxu0 0.0
      %829 = vmatprep.subr.mxu0 0.0
      %830 = vmatpush1.msra.mxu0 0.0
      %831 = vmatprep.subr.mxu0 0.0
      %832 = vmatpush1.msra.mxu0 0.0
      %833 = vmatprep.subr.mxu0 0.0
      %834 = vmatpush1.msra.mxu0 0.0
      %835 = vmatprep.subr.mxu0 0.0
      %836 = vmatpush1.msra.mxu0 0.0
      %837 = vmatprep.subr.mxu0 0.0
      %838 = vmatpush1.msra.mxu0 0.0
      %839 = vmatprep.subr.mxu0 0.0
      %840 = vmatpush1.msra.mxu0 0.0
      %841 = vmatprep.subr.mxu0 0.0
      %842 = vmatpush1.msra.mxu0 0.0
      %843 = vmatprep.subr.mxu0 0.0
      %844 = vmatpush1.msra.mxu0 0.0
      %845 = vmatprep.subr.mxu0 0.0
      %846 = vmatpush1.msra.mxu0 0.0
      %847 = vmatprep.subr.mxu0 0.0
      %848 = vmatpush1.msra.mxu0 0.0
      %849 = vmatprep.subr.mxu0 0.0
      %850 = vmatpush1.msra.mxu0 0.0
      %851 = vmatprep.subr.mxu0 0.0
      %852 = vmatpush1.msra.mxu0 0.0
      %853 = vmatprep.subr.mxu0 0.0
      %854 = vmatpush1.msra.mxu0 0.0
      %855 = vmatprep.subr.mxu0 0.0
      %856 = vmatpush1.msra.mxu0 0.0
      %857 = vmatprep.subr.mxu0 0.0
      %858 = vmatpush1.msra.mxu0 0.0
      %859 = vmatprep.subr.mxu0 0.0
      %860 = vmatpush1.msra.mxu0 0.0
      %861 = vmatprep.subr.mxu0 0.0
      %862 = vmatpush1.msra.mxu0 0.0
      %863 = vmatprep.subr.mxu0 0.0
      %864 = vmatpush1.msra.mxu0 0.0
      %865 = vmatprep.subr.mxu0 0.0
      %866 = vmatpush1.msra.mxu0 0.0
      %867 = vmatprep.subr.mxu0 0.0
      %868 = vmatpush1.msra.mxu0 0.0
      %869 = vmatprep.subr.mxu0 0.0
      %870 = vmatpush1.msra.mxu0 0.0
      %871 = vmatprep.subr.mxu0 0.0
      %872 = vmatpush1.msra.mxu0 0.0
      %873 = vmatprep.subr.mxu0 0.0
      %874 = vmatpush1.msra.mxu0 0.0
      %875 = vmatprep.subr.mxu0 0.0
      %876 = vmatpush1.msra.mxu0 0.0
      %877 = vmatprep.mubr.f32.mxu0 0.0
      %878 = vmatmul.mubr.f32.gmra.mrb[0].mxu0 %v715
      %v879 = vpop.f32.mrb[0].mxu0
      %v880 = vadd.f32 %v556, %v879
      %v881 = vpop.f32.mrb[0].mxu0
      %882 = vmatprep.mubr.f32.mxu0 0.0
      %883 = vmatmul.mubr.f32.gmra.mrb[0].mxu0 %v718
      %v884 = vpop.f32.mrb[0].mxu0
      %v885 = vadd.f32 %v561, %v884
      %v886 = vpop.f32.mrb[0].mxu0
      %887 = vmatprep.mubr.f32.mxu0 0.0
      %888 = vmatmul.mubr.f32.gmra.mrb[0].mxu0 %v721
      %v889 = vpop.f32.mrb[0].mxu0
      %v890 = vadd.f32 %v566, %v889
      %v891 = vpop.f32.mrb[0].mxu0
      %892 = vmatprep.mubr.f32.mxu0 0.0
      %893 = vmatmul.mubr.f32.gmra.mrb[0].mxu0 %v724
      %v894 = vpop.f32.mrb[0].mxu0
      %v895 = vadd.f32 %v571, %v894
      %v896 = vpop.f32.mrb[0].mxu0
      %897 = vmatprep.mubr.f32.mxu0 0.0
      %898 = vmatmul.mubr.f32.gmra.mrb[0].mxu0 %v727
      %v899 = vpop.f32.mrb[0].mxu0
      %v900 = vadd.f32 %v576, %v899
      %v901 = vpop.f32.mrb[0].mxu0
      %902 = vmatprep.mubr.f32.mxu0 0.0
      %903 = vmatmul.mubr.f32.gmra.mrb[0].mxu0 %v730
      %v904 = vpop.f32.mrb[0].mxu0
      %v905 = vadd.f32 %v581, %v904
      %v906 = vpop.f32.mrb[0].mxu0
      %907 = vmatprep.mubr.f32.mxu0 0.0
      %908 = vmatmul.mubr.f32.gmra.mrb[0].mxu0 %v733
      %v909 = vpop.f32.mrb[0].mxu0
      %v910 = vadd.f32 %v586, %v909
      %v911 = vpop.f32.mrb[0].mxu0
      %912 = vmatprep.mubr.f32.mxu0 0.0
      %913 = vmatmul.mubr.f32.gmra.mrb[0].mxu0 %v736
      %v914 = vpop.f32.mrb[0].mxu0
      %v915 = vadd.f32 %v591, %v914
      %v916 = vpop.f32.mrb[0].mxu0
      %917 = vmatprep.mubr.f32.mxu0 0.0
      %918 = vmatmul.mubr.f32.gmra.mrb[0].mxu0 %v739
      %v919 = vpop.f32.mrb[0].mxu0
      %v920 = vadd.f32 %v596, %v919
      %v921 = vpop.f32.mrb[0].mxu0
      %922 = vmatprep.mubr.f32.mxu0 0.0
      %923 = vmatmul.mubr.f32.gmra.mrb[0].mxu0 %v742
      %v924 = vpop.f32.mrb[0].mxu0
      %v925 = vadd.f32 %v601, %v924
      %v926 = vpop.f32.mrb[0].mxu0
      %927 = vmatprep.mubr.f32.mxu0 0.0
      %928 = vmatmul.mubr.f32.gmra.mrb[0].mxu0 %v745
      %v929 = vpop.f32.mrb[0].mxu0
      %v930 = vadd.f32 %v606, %v929
      %v931 = vpop.f32.mrb[0].mxu0
      %932 = vmatprep.mubr.f32.mxu0 0.0
      %933 = vmatmul.mubr.f32.gmra.mrb[0].mxu0 %v748
      %v934 = vpop.f32.mrb[0].mxu0
      %v935 = vadd.f32 %v611, %v934
      %v936 = vpop.f32.mrb[0].mxu0
      %937 = vmatprep.mubr.f32.mxu0 0.0
      %938 = vmatmul.mubr.f32.gmra.mrb[0].mxu0 %v751
      %v939 = vpop.f32.mrb[0].mxu0
      %v940 = vadd.f32 %v616, %v939
      %v941 = vpop.f32.mrb[0].mxu0
      %942 = vmatprep.mubr.f32.mxu0 0.0
      %943 = vmatmul.mubr.f32.gmra.mrb[0].mxu0 %v754
      %v944 = vpop.f32.mrb[0].mxu0
      %v945 = vadd.f32 %v621, %v944
      %v946 = vpop.f32.mrb[0].mxu0
      %947 = vmatprep.mubr.f32.mxu0 0.0
      %948 = vmatmul.mubr.f32.gmra.mrb[0].mxu0 %v757
      %v949 = vpop.f32.mrb[0].mxu0
      %v950 = vadd.f32 %v626, %v949
      %v951 = vpop.f32.mrb[0].mxu0
      %952 = vmatprep.mubr.f32.mxu0 0.0
      %953 = vmatmul.mubr.f32.gmra.mrb[0].mxu0 %v760
      %v954 = vpop.f32.mrb[0].mxu0
      %v955 = vadd.f32 %v631, %v954
      %v956 = vpop.f32.mrb[0].mxu0
      %957 = vmatprep.mubr.f32.mxu0 0.0
      %958 = vmatmul.mubr.f32.gmra.mrb[0].mxu0 %v763
      %v959 = vpop.f32.mrb[0].mxu0
      %v960 = vadd.f32 %v636, %v959
      %v961 = vpop.f32.mrb[0].mxu0
      %962 = vmatprep.mubr.f32.mxu0 0.0
      %963 = vmatmul.mubr.f32.gmra.mrb[0].mxu0 %v766
      %v964 = vpop.f32.mrb[0].mxu0
      %v965 = vadd.f32 %v641, %v964
      %v966 = vpop.f32.mrb[0].mxu0
      %967 = vmatprep.mubr.f32.mxu0 0.0
      %968 = vmatmul.mubr.f32.gmra.mrb[0].mxu0 %v769
      %v969 = vpop.f32.mrb[0].mxu0
      %v970 = vadd.f32 %v646, %v969
      %v971 = vpop.f32.mrb[0].mxu0
      %972 = vmatprep.mubr.f32.mxu0 0.0
      %973 = vmatmul.mubr.f32.gmra.mrb[0].mxu0 %v772
      %v974 = vpop.f32.mrb[0].mxu0
      %v975 = vadd.f32 %v651, %v974
      %v976 = vpop.f32.mrb[0].mxu0
      %977 = vmatprep.mubr.f32.mxu0 0.0
      %978 = vmatmul.mubr.f32.gmra.mrb[0].mxu0 %v775
      %v979 = vpop.f32.mrb[0].mxu0
      %v980 = vadd.f32 %v656, %v979
      %v981 = vpop.f32.mrb[0].mxu0
      %982 = vmatprep.mubr.f32.mxu0 0.0
      %983 = vmatmul.mubr.f32.gmra.mrb[0].mxu0 %v778
      %v984 = vpop.f32.mrb[0].mxu0
      %v985 = vadd.f32 %v661, %v984
      %v986 = vpop.f32.mrb[0].mxu0
      %987 = vmatprep.mubr.f32.mxu0 0.0
      %988 = vmatmul.mubr.f32.gmra.mrb[0].mxu0 %v781
      %v989 = vpop.f32.mrb[0].mxu0
      %v990 = vadd.f32 %v666, %v989
      %v991 = vpop.f32.mrb[0].mxu0
      %992 = vmatprep.mubr.f32.mxu0 0.0
      %993 = vmatmul.mubr.f32.gmra.mrb[0].mxu0 %v784
      %v994 = vpop.f32.mrb[0].mxu0
      %v995 = vadd.f32 %v671, %v994
      %v996 = vpop.f32.mrb[0].mxu0
      %997 = vmatprep.mubr.f32.mxu0 0.0
      %998 = vmatmul.mubr.f32.gmra.mrb[0].mxu0 %v787
      %v999 = vpop.f32.mrb[0].mxu0
      %v1000 = vadd.f32 %v676, %v999
      %v1001 = vpop.f32.mrb[0].mxu0
      %1002 = vmatprep.mubr.f32.mxu0 0.0
      %1003 = vmatmul.mubr.f32.gmra.mrb[0].mxu0 %v790
      %v1004 = vpop.f32.mrb[0].mxu0
      %v1005 = vadd.f32 %v681, %v1004
      %v1006 = vpop.f32.mrb[0].mxu0
      %1007 = vmatprep.mubr.f32.mxu0 0.0
      %1008 = vmatmul.mubr.f32.gmra.mrb[0].mxu0 %v793
      %v1009 = vpop.f32.mrb[0].mxu0
      %v1010 = vadd.f32 %v686, %v1009
      %v1011 = vpop.f32.mrb[0].mxu0
      %1012 = vmatprep.mubr.f32.mxu0 0.0
      %1013 = vmatmul.mubr.f32.gmra.mrb[0].mxu0 %v796
      %v1014 = vpop.f32.mrb[0].mxu0
      %v1015 = vadd.f32 %v691, %v1014
      %v1016 = vpop.f32.mrb[0].mxu0
      %1017 = vmatprep.mubr.f32.mxu0 0.0
      %1018 = vmatmul.mubr.f32.gmra.mrb[0].mxu0 %v799
      %v1019 = vpop.f32.mrb[0].mxu0
      %v1020 = vadd.f32 %v696, %v1019
      %v1021 = vpop.f32.mrb[0].mxu0
      %1022 = vmatprep.mubr.f32.mxu0 0.0
      %1023 = vmatmul.mubr.f32.gmra.mrb[0].mxu0 %v802
      %v1024 = vpop.f32.mrb[0].mxu0
      %v1025 = vadd.f32 %v701, %v1024
      %v1026 = vpop.f32.mrb[0].mxu0
      %1027 = vmatprep.mubr.f32.mxu0 0.0
      %1028 = vmatmul.mubr.f32.gmra.mrb[0].mxu0 %v805
      %v1029 = vpop.f32.mrb[0].mxu0
      %v1030 = vadd.f32 %v706, %v1029
      %v1031 = vpop.f32.mrb[0].mxu0
      %1032 = vmatprep.mubr.f32.mxu0 0.0
      %1033 = vmatmul.mubr.f32.gmra.mrb[0].mxu0 %v808
      %v1034 = vpop.f32.mrb[0].mxu0
      %v1035 = vadd.f32 %v711, %v1034
      %v1036 = vpop.f32.mrb[0].mxu0
      %1037 = vdwg.mxu0
      %v1038 = vld [vmem:[%s320 + $0x2] sm:$0xff]
      %v1039 = vld [vmem:[%s320 + $0xa] sm:$0xff]
      %v1040 = vld [vmem:[%s320 + $0x1a] sm:$0xff]
      %v1041 = vld [vmem:[%s320 + $0x22] sm:$0xff]
      %v1042 = vld [vmem:[%s320 + $0x32] sm:$0xff]
      %v1043 = vld [vmem:[%s320 + $0x3a] sm:$0xff]
      %v1044 = vld [vmem:[%s320 + $0x4a] sm:$0xff]
      %v1045 = vld [vmem:[%s320 + $0x52] sm:$0xff]
      %v1046 = vld [vmem:[%s320 + $0x62] sm:$0xff]
      %v1047 = vld [vmem:[%s320 + $0x6a] sm:$0xff]
      %v1048 = vld [vmem:[%s320 + $0x7a] sm:$0xff]
      %v1049 = vld [vmem:[%s320 + $0x82] sm:$0xff]
      %v1050 = vld [vmem:[%s320 + $0x92] sm:$0xff]
      %v1051 = vld [vmem:[%s320 + $0x9a] sm:$0xff]
      %v1052 = vld [vmem:[%s320 + $0xaa] sm:$0xff]
      %v1053 = vld [vmem:[%s320 + $0xb2] sm:$0xff]
      %v1054 = vld [vmem:[%s320 + $0xc2] sm:$0xff]
      %v1055 = vld [vmem:[%s320 + $0xca] sm:$0xff]
      %v1056 = vld [vmem:[%s320 + $0xda] sm:$0xff]
      %v1057 = vld [vmem:[%s320 + $0xe2] sm:$0xff]
      %v1058 = vld [vmem:[%s320 + $0xf2] sm:$0xff]
      %v1059 = vld [vmem:[%s320 + $0xfa] sm:$0xff]
      %v1060 = vld [vmem:[%s320 + $0x10a] sm:$0xff]
      %v1061 = vld [vmem:[%s320 + $0x112] sm:$0xff]
      %v1062 = vld [vmem:[%s320 + $0x122] sm:$0xff]
      %v1063 = vld [vmem:[%s320 + $0x12a] sm:$0xff]
      %v1064 = vld [vmem:[%s320 + $0x13a] sm:$0xff]
      %v1065 = vld [vmem:[%s320 + $0x142] sm:$0xff]
      %v1066 = vld [vmem:[%s320 + $0x152] sm:$0xff]
      %v1067 = vld [vmem:[%s320 + $0x15a] sm:$0xff]
      %v1068 = vld [vmem:[%s320 + $0x16a] sm:$0xff]
      %v1069 = vld [vmem:[%s320 + $0x172] sm:$0xff]
      %s1070 = scalar_lea.vmem %s294, 8
      %v1071 = vld [vmem:[%s1070] sm:$0xf]
      %v1073 = vsel %vm388, %v1038, 0
      %v1076 = vsel %vm388, %v1039, 0
      %v1079 = vsel %vm388, %v1040, 0
      %v1082 = vsel %vm388, %v1041, 0
      %v1085 = vsel %vm388, %v1042, 0
      %v1088 = vsel %vm388, %v1043, 0
      %v1091 = vsel %vm388, %v1044, 0
      %v1094 = vsel %vm388, %v1045, 0
      %v1097 = vsel %vm388, %v1046, 0
      %v1100 = vsel %vm388, %v1047, 0
      %v1103 = vsel %vm388, %v1048, 0
      %v1106 = vsel %vm388, %v1049, 0
      %v1109 = vsel %vm388, %v1050, 0
      %v1112 = vsel %vm388, %v1051, 0
      %v1115 = vsel %vm388, %v1052, 0
      %v1118 = vsel %vm388, %v1053, 0
      %v1121 = vsel %vm388, %v1054, 0
      %v1124 = vsel %vm388, %v1055, 0
      %v1127 = vsel %vm388, %v1056, 0
      %v1130 = vsel %vm388, %v1057, 0
      %v1133 = vsel %vm388, %v1058, 0
      %v1136 = vsel %vm388, %v1059, 0
      %v1139 = vsel %vm388, %v1060, 0
      %v1142 = vsel %vm388, %v1061, 0
      %v1145 = vsel %vm388, %v1062, 0
      %v1148 = vsel %vm388, %v1063, 0
      %v1151 = vsel %vm388, %v1064, 0
      %v1154 = vsel %vm388, %v1065, 0
      %v1157 = vsel %vm388, %v1066, 0
      %v1160 = vsel %vm388, %v1067, 0
      %v1163 = vsel %vm388, %v1068, 0
      %v1166 = vsel %vm388, %v1069, 0
      %v1169 = vsel %vm485, %v1071, 0
      %1171 = vmatprep.subr.mxu0 0.0
      %1172 = vmatpush1.msra.mxu0 %v1169
      %1173 = vmatprep.subr.mxu0 0.0
      %1174 = vmatpush1.msra.mxu0 0.0
      %1175 = vmatprep.subr.mxu0 0.0
      %1176 = vmatpush1.msra.mxu0 0.0
      %1177 = vmatprep.subr.mxu0 0.0
      %1178 = vmatpush1.msra.mxu0 0.0
      %1179 = vmatprep.subr.mxu0 0.0
      %1180 = vmatpush1.msra.mxu0 0.0
      %1181 = vmatprep.subr.mxu0 0.0
      %1182 = vmatpush1.msra.mxu0 0.0
      %1183 = vmatprep.subr.mxu0 0.0
      %1184 = vmatpush1.msra.mxu0 0.0
      %1185 = vmatprep.subr.mxu0 0.0
      %1186 = vmatpush1.msra.mxu0 0.0
      %1187 = vmatprep.subr.mxu0 0.0
      %1188 = vmatpush1.msra.mxu0 0.0
      %1189 = vmatprep.subr.mxu0 0.0
      %1190 = vmatpush1.msra.mxu0 0.0
      %1191 = vmatprep.subr.mxu0 0.0
      %1192 = vmatpush1.msra.mxu0 0.0
      %1193 = vmatprep.subr.mxu0 0.0
      %1194 = vmatpush1.msra.mxu0 0.0
      %1195 = vmatprep.subr.mxu0 0.0
      %1196 = vmatpush1.msra.mxu0 0.0
      %1197 = vmatprep.subr.mxu0 0.0
      %1198 = vmatpush1.msra.mxu0 0.0
      %1199 = vmatprep.subr.mxu0 0.0
      %1200 = vmatpush1.msra.mxu0 0.0
      %1201 = vmatprep.subr.mxu0 0.0
      %1202 = vmatpush1.msra.mxu0 0.0
      %1203 = vmatprep.subr.mxu0 0.0
      %1204 = vmatpush1.msra.mxu0 0.0
      %1205 = vmatprep.subr.mxu0 0.0
      %1206 = vmatpush1.msra.mxu0 0.0
      %1207 = vmatprep.subr.mxu0 0.0
      %1208 = vmatpush1.msra.mxu0 0.0
      %1209 = vmatprep.subr.mxu0 0.0
      %1210 = vmatpush1.msra.mxu0 0.0
      %1211 = vmatprep.subr.mxu0 0.0
      %1212 = vmatpush1.msra.mxu0 0.0
      %1213 = vmatprep.subr.mxu0 0.0
      %1214 = vmatpush1.msra.mxu0 0.0
      %1215 = vmatprep.subr.mxu0 0.0
      %1216 = vmatpush1.msra.mxu0 0.0
      %1217 = vmatprep.subr.mxu0 0.0
      %1218 = vmatpush1.msra.mxu0 0.0
      %1219 = vmatprep.subr.mxu0 0.0
      %1220 = vmatpush1.msra.mxu0 0.0
      %1221 = vmatprep.subr.mxu0 0.0
      %1222 = vmatpush1.msra.mxu0 0.0
      %1223 = vmatprep.subr.mxu0 0.0
      %1224 = vmatpush1.msra.mxu0 0.0
      %1225 = vmatprep.subr.mxu0 0.0
      %1226 = vmatpush1.msra.mxu0 0.0
      %1227 = vmatprep.subr.mxu0 0.0
      %1228 = vmatpush1.msra.mxu0 0.0
      %1229 = vmatprep.subr.mxu0 0.0
      %1230 = vmatpush1.msra.mxu0 0.0
      %1231 = vmatprep.subr.mxu0 0.0
      %1232 = vmatpush1.msra.mxu0 0.0
      %1233 = vmatprep.subr.mxu0 0.0
      %1234 = vmatpush1.msra.mxu0 0.0
      %1235 = vmatprep.mubr.f32.mxu0 0.0
      %1236 = vmatmul.mubr.f32.gmra.mrb[0].mxu0 %v1073
      %v1237 = vpop.f32.mrb[0].mxu0
      %v1238 = vadd.f32 0.0, %v1237
      %v1239 = vpop.f32.mrb[0].mxu0
      %1240 = vmatprep.mubr.f32.mxu0 0.0
      %1241 = vmatmul.mubr.f32.gmra.mrb[0].mxu0 %v1076
      %v1242 = vpop.f32.mrb[0].mxu0
      %v1243 = vadd.f32 0.0, %v1242
      %v1244 = vpop.f32.mrb[0].mxu0
      %1245 = vmatprep.mubr.f32.mxu0 0.0
      %1246 = vmatmul.mubr.f32.gmra.mrb[0].mxu0 %v1079
      %v1247 = vpop.f32.mrb[0].mxu0
      %v1248 = vadd.f32 0.0, %v1247
      %v1249 = vpop.f32.mrb[0].mxu0
      %1250 = vmatprep.mubr.f32.mxu0 0.0
      %1251 = vmatmul.mubr.f32.gmra.mrb[0].mxu0 %v1082
      %v1252 = vpop.f32.mrb[0].mxu0
      %v1253 = vadd.f32 0.0, %v1252
      %v1254 = vpop.f32.mrb[0].mxu0
      %1255 = vmatprep.mubr.f32.mxu0 0.0
      %1256 = vmatmul.mubr.f32.gmra.mrb[0].mxu0 %v1085
      %v1257 = vpop.f32.mrb[0].mxu0
      %v1258 = vadd.f32 0.0, %v1257
      %v1259 = vpop.f32.mrb[0].mxu0
      %1260 = vmatprep.mubr.f32.mxu0 0.0
      %1261 = vmatmul.mubr.f32.gmra.mrb[0].mxu0 %v1088
      %v1262 = vpop.f32.mrb[0].mxu0
      %v1263 = vadd.f32 0.0, %v1262
      %v1264 = vpop.f32.mrb[0].mxu0
      %1265 = vmatprep.mubr.f32.mxu0 0.0
      %1266 = vmatmul.mubr.f32.gmra.mrb[0].mxu0 %v1091
      %v1267 = vpop.f32.mrb[0].mxu0
      %v1268 = vadd.f32 0.0, %v1267
      %v1269 = vpop.f32.mrb[0].mxu0
      %1270 = vmatprep.mubr.f32.mxu0 0.0
      %1271 = vmatmul.mubr.f32.gmra.mrb[0].mxu0 %v1094
      %v1272 = vpop.f32.mrb[0].mxu0
      %v1273 = vadd.f32 0.0, %v1272
      %v1274 = vpop.f32.mrb[0].mxu0
      %1275 = vmatprep.mubr.f32.mxu0 0.0
      %1276 = vmatmul.mubr.f32.gmra.mrb[0].mxu0 %v1097
      %v1277 = vpop.f32.mrb[0].mxu0
      %v1278 = vadd.f32 0.0, %v1277
      %v1279 = vpop.f32.mrb[0].mxu0
      %1280 = vmatprep.mubr.f32.mxu0 0.0
      %1281 = vmatmul.mubr.f32.gmra.mrb[0].mxu0 %v1100
      %v1282 = vpop.f32.mrb[0].mxu0
      %v1283 = vadd.f32 0.0, %v1282
      %v1284 = vpop.f32.mrb[0].mxu0
      %1285 = vmatprep.mubr.f32.mxu0 0.0
      %1286 = vmatmul.mubr.f32.gmra.mrb[0].mxu0 %v1103
      %v1287 = vpop.f32.mrb[0].mxu0
      %v1288 = vadd.f32 0.0, %v1287
      %v1289 = vpop.f32.mrb[0].mxu0
      %1290 = vmatprep.mubr.f32.mxu0 0.0
      %1291 = vmatmul.mubr.f32.gmra.mrb[0].mxu0 %v1106
      %v1292 = vpop.f32.mrb[0].mxu0
      %v1293 = vadd.f32 0.0, %v1292
      %v1294 = vpop.f32.mrb[0].mxu0
      %1295 = vmatprep.mubr.f32.mxu0 0.0
      %1296 = vmatmul.mubr.f32.gmra.mrb[0].mxu0 %v1109
      %v1297 = vpop.f32.mrb[0].mxu0
      %v1298 = vadd.f32 0.0, %v1297
      %v1299 = vpop.f32.mrb[0].mxu0
      %1300 = vmatprep.mubr.f32.mxu0 0.0
      %1301 = vmatmul.mubr.f32.gmra.mrb[0].mxu0 %v1112
      %v1302 = vpop.f32.mrb[0].mxu0
      %v1303 = vadd.f32 0.0, %v1302
      %v1304 = vpop.f32.mrb[0].mxu0
      %1305 = vmatprep.mubr.f32.mxu0 0.0
      %1306 = vmatmul.mubr.f32.gmra.mrb[0].mxu0 %v1115
      %v1307 = vpop.f32.mrb[0].mxu0
      %v1308 = vadd.f32 0.0, %v1307
      %v1309 = vpop.f32.mrb[0].mxu0
      %1310 = vmatprep.mubr.f32.mxu0 0.0
      %1311 = vmatmul.mubr.f32.gmra.mrb[0].mxu0 %v1118
      %v1312 = vpop.f32.mrb[0].mxu0
      %v1313 = vadd.f32 0.0, %v1312
      %v1314 = vpop.f32.mrb[0].mxu0
      %1315 = vmatprep.mubr.f32.mxu0 0.0
      %1316 = vmatmul.mubr.f32.gmra.mrb[0].mxu0 %v1121
      %v1317 = vpop.f32.mrb[0].mxu0
      %v1318 = vadd.f32 0.0, %v1317
      %v1319 = vpop.f32.mrb[0].mxu0
      %1320 = vmatprep.mubr.f32.mxu0 0.0
      %1321 = vmatmul.mubr.f32.gmra.mrb[0].mxu0 %v1124
      %v1322 = vpop.f32.mrb[0].mxu0
      %v1323 = vadd.f32 0.0, %v1322
      %v1324 = vpop.f32.mrb[0].mxu0
      %1325 = vmatprep.mubr.f32.mxu0 0.0
      %1326 = vmatmul.mubr.f32.gmra.mrb[0].mxu0 %v1127
      %v1327 = vpop.f32.mrb[0].mxu0
      %v1328 = vadd.f32 0.0, %v1327
      %v1329 = vpop.f32.mrb[0].mxu0
      %1330 = vmatprep.mubr.f32.mxu0 0.0
      %1331 = vmatmul.mubr.f32.gmra.mrb[0].mxu0 %v1130
      %v1332 = vpop.f32.mrb[0].mxu0
      %v1333 = vadd.f32 0.0, %v1332
      %v1334 = vpop.f32.mrb[0].mxu0
      %1335 = vmatprep.mubr.f32.mxu0 0.0
      %1336 = vmatmul.mubr.f32.gmra.mrb[0].mxu0 %v1133
      %v1337 = vpop.f32.mrb[0].mxu0
      %v1338 = vadd.f32 0.0, %v1337
      %v1339 = vpop.f32.mrb[0].mxu0
      %1340 = vmatprep.mubr.f32.mxu0 0.0
      %1341 = vmatmul.mubr.f32.gmra.mrb[0].mxu0 %v1136
      %v1342 = vpop.f32.mrb[0].mxu0
      %v1343 = vadd.f32 0.0, %v1342
      %v1344 = vpop.f32.mrb[0].mxu0
      %1345 = vmatprep.mubr.f32.mxu0 0.0
      %1346 = vmatmul.mubr.f32.gmra.mrb[0].mxu0 %v1139
      %v1347 = vpop.f32.mrb[0].mxu0
      %v1348 = vadd.f32 0.0, %v1347
      %v1349 = vpop.f32.mrb[0].mxu0
      %1350 = vmatprep.mubr.f32.mxu0 0.0
      %1351 = vmatmul.mubr.f32.gmra.mrb[0].mxu0 %v1142
      %v1352 = vpop.f32.mrb[0].mxu0
      %v1353 = vadd.f32 0.0, %v1352
      %v1354 = vpop.f32.mrb[0].mxu0
      %1355 = vmatprep.mubr.f32.mxu0 0.0
      %1356 = vmatmul.mubr.f32.gmra.mrb[0].mxu0 %v1145
      %v1357 = vpop.f32.mrb[0].mxu0
      %v1358 = vadd.f32 0.0, %v1357
      %v1359 = vpop.f32.mrb[0].mxu0
      %1360 = vmatprep.mubr.f32.mxu0 0.0
      %1361 = vmatmul.mubr.f32.gmra.mrb[0].mxu0 %v1148
      %v1362 = vpop.f32.mrb[0].mxu0
      %v1363 = vadd.f32 0.0, %v1362
      %v1364 = vpop.f32.mrb[0].mxu0
      %1365 = vmatprep.mubr.f32.mxu0 0.0
      %1366 = vmatmul.mubr.f32.gmra.mrb[0].mxu0 %v1151
      %v1367 = vpop.f32.mrb[0].mxu0
      %v1368 = vadd.f32 0.0, %v1367
      %v1369 = vpop.f32.mrb[0].mxu0
      %1370 = vmatprep.mubr.f32.mxu0 0.0
      %1371 = vmatmul.mubr.f32.gmra.mrb[0].mxu0 %v1154
      %v1372 = vpop.f32.mrb[0].mxu0
      %v1373 = vadd.f32 0.0, %v1372
      %v1374 = vpop.f32.mrb[0].mxu0
      %1375 = vmatprep.mubr.f32.mxu0 0.0
      %1376 = vmatmul.mubr.f32.gmra.mrb[0].mxu0 %v1157
      %v1377 = vpop.f32.mrb[0].mxu0
      %v1378 = vadd.f32 0.0, %v1377
      %v1379 = vpop.f32.mrb[0].mxu0
      %1380 = vmatprep.mubr.f32.mxu0 0.0
      %1381 = vmatmul.mubr.f32.gmra.mrb[0].mxu0 %v1160
      %v1382 = vpop.f32.mrb[0].mxu0
      %v1383 = vadd.f32 0.0, %v1382
      %v1384 = vpop.f32.mrb[0].mxu0
      %1385 = vmatprep.mubr.f32.mxu0 0.0
      %1386 = vmatmul.mubr.f32.gmra.mrb[0].mxu0 %v1163
      %v1387 = vpop.f32.mrb[0].mxu0
      %v1388 = vadd.f32 0.0, %v1387
      %v1389 = vpop.f32.mrb[0].mxu0
      %1390 = vmatprep.mubr.f32.mxu0 0.0
      %1391 = vmatmul.mubr.f32.gmra.mrb[0].mxu0 %v1166
      %v1392 = vpop.f32.mrb[0].mxu0
      %v1393 = vadd.f32 0.0, %v1392
      %v1394 = vpop.f32.mrb[0].mxu0
      %1395 = vdwg.mxu0
      %v1396 = vadd.f32 %v880, %v1238
      %v1397 = vadd.f32 %v885, %v1243
      %v1398 = vadd.f32 %v890, %v1248
      %v1399 = vadd.f32 %v895, %v1253
      %v1400 = vadd.f32 %v900, %v1258
      %v1401 = vadd.f32 %v905, %v1263
      %v1402 = vadd.f32 %v910, %v1268
      %v1403 = vadd.f32 %v915, %v1273
      %v1404 = vadd.f32 %v920, %v1278
      %v1405 = vadd.f32 %v925, %v1283
      %v1406 = vadd.f32 %v930, %v1288
      %v1407 = vadd.f32 %v935, %v1293
      %v1408 = vadd.f32 %v940, %v1298
      %v1409 = vadd.f32 %v945, %v1303
      %v1410 = vadd.f32 %v950, %v1308
      %v1411 = vadd.f32 %v955, %v1313
      %v1412 = vadd.f32 %v960, %v1318
      %v1413 = vadd.f32 %v965, %v1323
      %v1414 = vadd.f32 %v970, %v1328
      %v1415 = vadd.f32 %v975, %v1333
      %v1416 = vadd.f32 %v980, %v1338
      %v1417 = vadd.f32 %v985, %v1343
      %v1418 = vadd.f32 %v990, %v1348
      %v1419 = vadd.f32 %v995, %v1353
      %v1420 = vadd.f32 %v1000, %v1358
      %v1421 = vadd.f32 %v1005, %v1363
      %v1422 = vadd.f32 %v1010, %v1368
      %v1423 = vadd.f32 %v1015, %v1373
      %v1424 = vadd.f32 %v1020, %v1378
      %v1425 = vadd.f32 %v1025, %v1383
      %v1426 = vadd.f32 %v1030, %v1388
      %v1427 = vadd.f32 %v1035, %v1393
      %s1428 = sadd.s32 %s318, 1
      %s1429 = smul.u32 %s1428, 24
      %s1430 = scalar_lea.vmem %s282, %s1429
      %v1431 = vld [vmem:[%s1430] sm:$0xff]
      %v1432 = vld [vmem:[%s1430 + $0x8] sm:$0xff]
      %v1433 = vld [vmem:[%s1430 + $0x18] sm:$0xff]
      %v1434 = vld [vmem:[%s1430 + $0x20] sm:$0xff]
      %v1435 = vld [vmem:[%s1430 + $0x30] sm:$0xff]
      %v1436 = vld [vmem:[%s1430 + $0x38] sm:$0xff]
      %v1437 = vld [vmem:[%s1430 + $0x48] sm:$0xff]
      %v1438 = vld [vmem:[%s1430 + $0x50] sm:$0xff]
      %v1439 = vld [vmem:[%s1430 + $0x60] sm:$0xff]
      %v1440 = vld [vmem:[%s1430 + $0x68] sm:$0xff]
      %v1441 = vld [vmem:[%s1430 + $0x78] sm:$0xff]
      %v1442 = vld [vmem:[%s1430 + $0x80] sm:$0xff]
      %v1443 = vld [vmem:[%s1430 + $0x90] sm:$0xff]
      %v1444 = vld [vmem:[%s1430 + $0x98] sm:$0xff]
      %v1445 = vld [vmem:[%s1430 + $0xa8] sm:$0xff]
      %v1446 = vld [vmem:[%s1430 + $0xb0] sm:$0xff]
      %v1447 = vld [vmem:[%s1430 + $0xc0] sm:$0xff]
      %v1448 = vld [vmem:[%s1430 + $0xc8] sm:$0xff]
      %v1449 = vld [vmem:[%s1430 + $0xd8] sm:$0xff]
      %v1450 = vld [vmem:[%s1430 + $0xe0] sm:$0xff]
      %v1451 = vld [vmem:[%s1430 + $0xf0] sm:$0xff]
      %v1452 = vld [vmem:[%s1430 + $0xf8] sm:$0xff]
      %v1453 = vld [vmem:[%s1430 + $0x108] sm:$0xff]
      %v1454 = vld [vmem:[%s1430 + $0x110] sm:$0xff]
      %v1455 = vld [vmem:[%s1430 + $0x120] sm:$0xff]
      %v1456 = vld [vmem:[%s1430 + $0x128] sm:$0xff]
      %v1457 = vld [vmem:[%s1430 + $0x138] sm:$0xff]
      %v1458 = vld [vmem:[%s1430 + $0x140] sm:$0xff]
      %v1459 = vld [vmem:[%s1430 + $0x150] sm:$0xff]
      %v1460 = vld [vmem:[%s1430 + $0x158] sm:$0xff]
      %v1461 = vld [vmem:[%s1430 + $0x168] sm:$0xff]
      %v1462 = vld [vmem:[%s1430 + $0x170] sm:$0xff]
      %s1463 = scalar_lea.vmem %s294, 12
      %v1464 = vld [vmem:[%s1463] sm:$0xf]
      %v1466 = vsel %vm388, %v1431, 0
      %v1469 = vsel %vm388, %v1432, 0
      %v1472 = vsel %vm388, %v1433, 0
      %v1475 = vsel %vm388, %v1434, 0
      %v1478 = vsel %vm388, %v1435, 0
      %v1481 = vsel %vm388, %v1436, 0
      %v1484 = vsel %vm388, %v1437, 0
      %v1487 = vsel %vm388, %v1438, 0
      %v1490 = vsel %vm388, %v1439, 0
      %v1493 = vsel %vm388, %v1440, 0
      %v1496 = vsel %vm388, %v1441, 0
      %v1499 = vsel %vm388, %v1442, 0
      %v1502 = vsel %vm388, %v1443, 0
      %v1505 = vsel %vm388, %v1444, 0
      %v1508 = vsel %vm388, %v1445, 0
      %v1511 = vsel %vm388, %v1446, 0
      %v1514 = vsel %vm388, %v1447, 0
      %v1517 = vsel %vm388, %v1448, 0
      %v1520 = vsel %vm388, %v1449, 0
      %v1523 = vsel %vm388, %v1450, 0
      %v1526 = vsel %vm388, %v1451, 0
      %v1529 = vsel %vm388, %v1452, 0
      %v1532 = vsel %vm388, %v1453, 0
      %v1535 = vsel %vm388, %v1454, 0
      %v1538 = vsel %vm388, %v1455, 0
      %v1541 = vsel %vm388, %v1456, 0
      %v1544 = vsel %vm388, %v1457, 0
      %v1547 = vsel %vm388, %v1458, 0
      %v1550 = vsel %vm388, %v1459, 0
      %v1553 = vsel %vm388, %v1460, 0
      %v1556 = vsel %vm388, %v1461, 0
      %v1559 = vsel %vm388, %v1462, 0
      %v1562 = vsel %vm485, %v1464, 0
      %1564 = vmatprep.subr.mxu0 0.0
      %1565 = vmatpush1.msra.mxu0 %v1562
      %1566 = vmatprep.subr.mxu0 0.0
      %1567 = vmatpush1.msra.mxu0 0.0
      %1568 = vmatprep.subr.mxu0 0.0
      %1569 = vmatpush1.msra.mxu0 0.0
      %1570 = vmatprep.subr.mxu0 0.0
      %1571 = vmatpush1.msra.mxu0 0.0
      %1572 = vmatprep.subr.mxu0 0.0
      %1573 = vmatpush1.msra.mxu0 0.0
      %1574 = vmatprep.subr.mxu0 0.0
      %1575 = vmatpush1.msra.mxu0 0.0
      %1576 = vmatprep.subr.mxu0 0.0
      %1577 = vmatpush1.msra.mxu0 0.0
      %1578 = vmatprep.subr.mxu0 0.0
      %1579 = vmatpush1.msra.mxu0 0.0
      %1580 = vmatprep.subr.mxu0 0.0
      %1581 = vmatpush1.msra.mxu0 0.0
      %1582 = vmatprep.subr.mxu0 0.0
      %1583 = vmatpush1.msra.mxu0 0.0
      %1584 = vmatprep.subr.mxu0 0.0
      %1585 = vmatpush1.msra.mxu0 0.0
      %1586 = vmatprep.subr.mxu0 0.0
      %1587 = vmatpush1.msra.mxu0 0.0
      %1588 = vmatprep.subr.mxu0 0.0
      %1589 = vmatpush1.msra.mxu0 0.0
      %1590 = vmatprep.subr.mxu0 0.0
      %1591 = vmatpush1.msra.mxu0 0.0
      %1592 = vmatprep.subr.mxu0 0.0
      %1593 = vmatpush1.msra.mxu0 0.0
      %1594 = vmatprep.subr.mxu0 0.0
      %1595 = vmatpush1.msra.mxu0 0.0
      %1596 = vmatprep.subr.mxu0 0.0
      %1597 = vmatpush1.msra.mxu0 0.0
      %1598 = vmatprep.subr.mxu0 0.0
      %1599 = vmatpush1.msra.mxu0 0.0
      %1600 = vmatprep.subr.mxu0 0.0
      %1601 = vmatpush1.msra.mxu0 0.0
      %1602 = vmatprep.subr.mxu0 0.0
      %1603 = vmatpush1.msra.mxu0 0.0
      %1604 = vmatprep.subr.mxu0 0.0
      %1605 = vmatpush1.msra.mxu0 0.0
      %1606 = vmatprep.subr.mxu0 0.0
      %1607 = vmatpush1.msra.mxu0 0.0
      %1608 = vmatprep.subr.mxu0 0.0
      %1609 = vmatpush1.msra.mxu0 0.0
      %1610 = vmatprep.subr.mxu0 0.0
      %1611 = vmatpush1.msra.mxu0 0.0
      %1612 = vmatprep.subr.mxu0 0.0
      %1613 = vmatpush1.msra.mxu0 0.0
      %1614 = vmatprep.subr.mxu0 0.0
      %1615 = vmatpush1.msra.mxu0 0.0
      %1616 = vmatprep.subr.mxu0 0.0
      %1617 = vmatpush1.msra.mxu0 0.0
      %1618 = vmatprep.subr.mxu0 0.0
      %1619 = vmatpush1.msra.mxu0 0.0
      %1620 = vmatprep.subr.mxu0 0.0
      %1621 = vmatpush1.msra.mxu0 0.0
      %1622 = vmatprep.subr.mxu0 0.0
      %1623 = vmatpush1.msra.mxu0 0.0
      %1624 = vmatprep.subr.mxu0 0.0
      %1625 = vmatpush1.msra.mxu0 0.0
      %1626 = vmatprep.subr.mxu0 0.0
      %1627 = vmatpush1.msra.mxu0 0.0
      %1628 = vmatprep.mubr.f32.mxu0 0.0
      %1629 = vmatmul.mubr.f32.gmra.mrb[0].mxu0 %v1466
      %v1630 = vpop.f32.mrb[0].mxu0
      %v1631 = vadd.f32 0.0, %v1630
      %v1632 = vpop.f32.mrb[0].mxu0
      %1633 = vmatprep.mubr.f32.mxu0 0.0
      %1634 = vmatmul.mubr.f32.gmra.mrb[0].mxu0 %v1469
      %v1635 = vpop.f32.mrb[0].mxu0
      %v1636 = vadd.f32 0.0, %v1635
      %v1637 = vpop.f32.mrb[0].mxu0
      %1638 = vmatprep.mubr.f32.mxu0 0.0
      %1639 = vmatmul.mubr.f32.gmra.mrb[0].mxu0 %v1472
      %v1640 = vpop.f32.mrb[0].mxu0
      %v1641 = vadd.f32 0.0, %v1640
      %v1642 = vpop.f32.mrb[0].mxu0
      %1643 = vmatprep.mubr.f32.mxu0 0.0
      %1644 = vmatmul.mubr.f32.gmra.mrb[0].mxu0 %v1475
      %v1645 = vpop.f32.mrb[0].mxu0
      %v1646 = vadd.f32 0.0, %v1645
      %v1647 = vpop.f32.mrb[0].mxu0
      %1648 = vmatprep.mubr.f32.mxu0 0.0
      %1649 = vmatmul.mubr.f32.gmra.mrb[0].mxu0 %v1478
      %v1650 = vpop.f32.mrb[0].mxu0
      %v1651 = vadd.f32 0.0, %v1650
      %v1652 = vpop.f32.mrb[0].mxu0
      %1653 = vmatprep.mubr.f32.mxu0 0.0
      %1654 = vmatmul.mubr.f32.gmra.mrb[0].mxu0 %v1481
      %v1655 = vpop.f32.mrb[0].mxu0
      %v1656 = vadd.f32 0.0, %v1655
      %v1657 = vpop.f32.mrb[0].mxu0
      %1658 = vmatprep.mubr.f32.mxu0 0.0
      %1659 = vmatmul.mubr.f32.gmra.mrb[0].mxu0 %v1484
      %v1660 = vpop.f32.mrb[0].mxu0
      %v1661 = vadd.f32 0.0, %v1660
      %v1662 = vpop.f32.mrb[0].mxu0
      %1663 = vmatprep.mubr.f32.mxu0 0.0
      %1664 = vmatmul.mubr.f32.gmra.mrb[0].mxu0 %v1487
      %v1665 = vpop.f32.mrb[0].mxu0
      %v1666 = vadd.f32 0.0, %v1665
      %v1667 = vpop.f32.mrb[0].mxu0
      %1668 = vmatprep.mubr.f32.mxu0 0.0
      %1669 = vmatmul.mubr.f32.gmra.mrb[0].mxu0 %v1490
      %v1670 = vpop.f32.mrb[0].mxu0
      %v1671 = vadd.f32 0.0, %v1670
      %v1672 = vpop.f32.mrb[0].mxu0
      %1673 = vmatprep.mubr.f32.mxu0 0.0
      %1674 = vmatmul.mubr.f32.gmra.mrb[0].mxu0 %v1493
      %v1675 = vpop.f32.mrb[0].mxu0
      %v1676 = vadd.f32 0.0, %v1675
      %v1677 = vpop.f32.mrb[0].mxu0
      %1678 = vmatprep.mubr.f32.mxu0 0.0
      %1679 = vmatmul.mubr.f32.gmra.mrb[0].mxu0 %v1496
      %v1680 = vpop.f32.mrb[0].mxu0
      %v1681 = vadd.f32 0.0, %v1680
      %v1682 = vpop.f32.mrb[0].mxu0
      %1683 = vmatprep.mubr.f32.mxu0 0.0
      %1684 = vmatmul.mubr.f32.gmra.mrb[0].mxu0 %v1499
      %v1685 = vpop.f32.mrb[0].mxu0
      %v1686 = vadd.f32 0.0, %v1685
      %v1687 = vpop.f32.mrb[0].mxu0
      %1688 = vmatprep.mubr.f32.mxu0 0.0
      %1689 = vmatmul.mubr.f32.gmra.mrb[0].mxu0 %v1502
      %v1690 = vpop.f32.mrb[0].mxu0
      %v1691 = vadd.f32 0.0, %v1690
      %v1692 = vpop.f32.mrb[0].mxu0
      %1693 = vmatprep.mubr.f32.mxu0 0.0
      %1694 = vmatmul.mubr.f32.gmra.mrb[0].mxu0 %v1505
      %v1695 = vpop.f32.mrb[0].mxu0
      %v1696 = vadd.f32 0.0, %v1695
      %v1697 = vpop.f32.mrb[0].mxu0
      %1698 = vmatprep.mubr.f32.mxu0 0.0
      %1699 = vmatmul.mubr.f32.gmra.mrb[0].mxu0 %v1508
      %v1700 = vpop.f32.mrb[0].mxu0
      %v1701 = vadd.f32 0.0, %v1700
      %v1702 = vpop.f32.mrb[0].mxu0
      %1703 = vmatprep.mubr.f32.mxu0 0.0
      %1704 = vmatmul.mubr.f32.gmra.mrb[0].mxu0 %v1511
      %v1705 = vpop.f32.mrb[0].mxu0
      %v1706 = vadd.f32 0.0, %v1705
      %v1707 = vpop.f32.mrb[0].mxu0
      %1708 = vmatprep.mubr.f32.mxu0 0.0
      %1709 = vmatmul.mubr.f32.gmra.mrb[0].mxu0 %v1514
      %v1710 = vpop.f32.mrb[0].mxu0
      %v1711 = vadd.f32 0.0, %v1710
      %v1712 = vpop.f32.mrb[0].mxu0
      %1713 = vmatprep.mubr.f32.mxu0 0.0
      %1714 = vmatmul.mubr.f32.gmra.mrb[0].mxu0 %v1517
      %v1715 = vpop.f32.mrb[0].mxu0
      %v1716 = vadd.f32 0.0, %v1715
      %v1717 = vpop.f32.mrb[0].mxu0
      %1718 = vmatprep.mubr.f32.mxu0 0.0
      %1719 = vmatmul.mubr.f32.gmra.mrb[0].mxu0 %v1520
      %v1720 = vpop.f32.mrb[0].mxu0
      %v1721 = vadd.f32 0.0, %v1720
      %v1722 = vpop.f32.mrb[0].mxu0
      %1723 = vmatprep.mubr.f32.mxu0 0.0
      %1724 = vmatmul.mubr.f32.gmra.mrb[0].mxu0 %v1523
      %v1725 = vpop.f32.mrb[0].mxu0
      %v1726 = vadd.f32 0.0, %v1725
      %v1727 = vpop.f32.mrb[0].mxu0
      %1728 = vmatprep.mubr.f32.mxu0 0.0
      %1729 = vmatmul.mubr.f32.gmra.mrb[0].mxu0 %v1526
      %v1730 = vpop.f32.mrb[0].mxu0
      %v1731 = vadd.f32 0.0, %v1730
      %v1732 = vpop.f32.mrb[0].mxu0
      %1733 = vmatprep.mubr.f32.mxu0 0.0
      %1734 = vmatmul.mubr.f32.gmra.mrb[0].mxu0 %v1529
      %v1735 = vpop.f32.mrb[0].mxu0
      %v1736 = vadd.f32 0.0, %v1735
      %v1737 = vpop.f32.mrb[0].mxu0
      %1738 = vmatprep.mubr.f32.mxu0 0.0
      %1739 = vmatmul.mubr.f32.gmra.mrb[0].mxu0 %v1532
      %v1740 = vpop.f32.mrb[0].mxu0
      %v1741 = vadd.f32 0.0, %v1740
      %v1742 = vpop.f32.mrb[0].mxu0
      %1743 = vmatprep.mubr.f32.mxu0 0.0
      %1744 = vmatmul.mubr.f32.gmra.mrb[0].mxu0 %v1535
      %v1745 = vpop.f32.mrb[0].mxu0
      %v1746 = vadd.f32 0.0, %v1745
      %v1747 = vpop.f32.mrb[0].mxu0
      %1748 = vmatprep.mubr.f32.mxu0 0.0
      %1749 = vmatmul.mubr.f32.gmra.mrb[0].mxu0 %v1538
      %v1750 = vpop.f32.mrb[0].mxu0
      %v1751 = vadd.f32 0.0, %v1750
      %v1752 = vpop.f32.mrb[0].mxu0
      %1753 = vmatprep.mubr.f32.mxu0 0.0
      %1754 = vmatmul.mubr.f32.gmra.mrb[0].mxu0 %v1541
      %v1755 = vpop.f32.mrb[0].mxu0
      %v1756 = vadd.f32 0.0, %v1755
      %v1757 = vpop.f32.mrb[0].mxu0
      %1758 = vmatprep.mubr.f32.mxu0 0.0
      %1759 = vmatmul.mubr.f32.gmra.mrb[0].mxu0 %v1544
      %v1760 = vpop.f32.mrb[0].mxu0
      %v1761 = vadd.f32 0.0, %v1760
      %v1762 = vpop.f32.mrb[0].mxu0
      %1763 = vmatprep.mubr.f32.mxu0 0.0
      %1764 = vmatmul.mubr.f32.gmra.mrb[0].mxu0 %v1547
      %v1765 = vpop.f32.mrb[0].mxu0
      %v1766 = vadd.f32 0.0, %v1765
      %v1767 = vpop.f32.mrb[0].mxu0
      %1768 = vmatprep.mubr.f32.mxu0 0.0
      %1769 = vmatmul.mubr.f32.gmra.mrb[0].mxu0 %v1550
      %v1770 = vpop.f32.mrb[0].mxu0
      %v1771 = vadd.f32 0.0, %v1770
      %v1772 = vpop.f32.mrb[0].mxu0
      %1773 = vmatprep.mubr.f32.mxu0 0.0
      %1774 = vmatmul.mubr.f32.gmra.mrb[0].mxu0 %v1553
      %v1775 = vpop.f32.mrb[0].mxu0
      %v1776 = vadd.f32 0.0, %v1775
      %v1777 = vpop.f32.mrb[0].mxu0
      %1778 = vmatprep.mubr.f32.mxu0 0.0
      %1779 = vmatmul.mubr.f32.gmra.mrb[0].mxu0 %v1556
      %v1780 = vpop.f32.mrb[0].mxu0
      %v1781 = vadd.f32 0.0, %v1780
      %v1782 = vpop.f32.mrb[0].mxu0
      %1783 = vmatprep.mubr.f32.mxu0 0.0
      %1784 = vmatmul.mubr.f32.gmra.mrb[0].mxu0 %v1559
      %v1785 = vpop.f32.mrb[0].mxu0
      %v1786 = vadd.f32 0.0, %v1785
      %v1787 = vpop.f32.mrb[0].mxu0
      %1788 = vdwg.mxu0
      %v1789 = vadd.f32 %v1396, %v1631
      %v1790 = vadd.f32 %v1397, %v1636
      %v1791 = vadd.f32 %v1398, %v1641
      %v1792 = vadd.f32 %v1399, %v1646
      %v1793 = vadd.f32 %v1400, %v1651
      %v1794 = vadd.f32 %v1401, %v1656
      %v1795 = vadd.f32 %v1402, %v1661
      %v1796 = vadd.f32 %v1403, %v1666
      %v1797 = vadd.f32 %v1404, %v1671
      %v1798 = vadd.f32 %v1405, %v1676
      %v1799 = vadd.f32 %v1406, %v1681
      %v1800 = vadd.f32 %v1407, %v1686
      %v1801 = vadd.f32 %v1408, %v1691
      %v1802 = vadd.f32 %v1409, %v1696
      %v1803 = vadd.f32 %v1410, %v1701
      %v1804 = vadd.f32 %v1411, %v1706
      %v1805 = vadd.f32 %v1412, %v1711
      %v1806 = vadd.f32 %v1413, %v1716
      %v1807 = vadd.f32 %v1414, %v1721
      %v1808 = vadd.f32 %v1415, %v1726
      %v1809 = vadd.f32 %v1416, %v1731
      %v1810 = vadd.f32 %v1417, %v1736
      %v1811 = vadd.f32 %v1418, %v1741
      %v1812 = vadd.f32 %v1419, %v1746
      %v1813 = vadd.f32 %v1420, %v1751
      %v1814 = vadd.f32 %v1421, %v1756
      %v1815 = vadd.f32 %v1422, %v1761
      %v1816 = vadd.f32 %v1423, %v1766
      %v1817 = vadd.f32 %v1424, %v1771
      %v1818 = vadd.f32 %v1425, %v1776
      %v1819 = vadd.f32 %v1426, %v1781
      %v1820 = vadd.f32 %v1427, %v1786
      %v1821 = vld [vmem:[%s1430 + $0x1] sm:$0xff]
      %v1822 = vld [vmem:[%s1430 + $0x9] sm:$0xff]
      %v1823 = vld [vmem:[%s1430 + $0x19] sm:$0xff]
      %v1824 = vld [vmem:[%s1430 + $0x21] sm:$0xff]
      %v1825 = vld [vmem:[%s1430 + $0x31] sm:$0xff]
      %v1826 = vld [vmem:[%s1430 + $0x39] sm:$0xff]
      %v1827 = vld [vmem:[%s1430 + $0x49] sm:$0xff]
      %v1828 = vld [vmem:[%s1430 + $0x51] sm:$0xff]
      %v1829 = vld [vmem:[%s1430 + $0x61] sm:$0xff]
      %v1830 = vld [vmem:[%s1430 + $0x69] sm:$0xff]
      %v1831 = vld [vmem:[%s1430 + $0x79] sm:$0xff]
      %v1832 = vld [vmem:[%s1430 + $0x81] sm:$0xff]
      %v1833 = vld [vmem:[%s1430 + $0x91] sm:$0xff]
      %v1834 = vld [vmem:[%s1430 + $0x99] sm:$0xff]
      %v1835 = vld [vmem:[%s1430 + $0xa9] sm:$0xff]
      %v1836 = vld [vmem:[%s1430 + $0xb1] sm:$0xff]
      %v1837 = vld [vmem:[%s1430 + $0xc1] sm:$0xff]
      %v1838 = vld [vmem:[%s1430 + $0xc9] sm:$0xff]
      %v1839 = vld [vmem:[%s1430 + $0xd9] sm:$0xff]
      %v1840 = vld [vmem:[%s1430 + $0xe1] sm:$0xff]
      %v1841 = vld [vmem:[%s1430 + $0xf1] sm:$0xff]
      %v1842 = vld [vmem:[%s1430 + $0xf9] sm:$0xff]
      %v1843 = vld [vmem:[%s1430 + $0x109] sm:$0xff]
      %v1844 = vld [vmem:[%s1430 + $0x111] sm:$0xff]
      %v1845 = vld [vmem:[%s1430 + $0x121] sm:$0xff]
      %v1846 = vld [vmem:[%s1430 + $0x129] sm:$0xff]
      %v1847 = vld [vmem:[%s1430 + $0x139] sm:$0xff]
      %v1848 = vld [vmem:[%s1430 + $0x141] sm:$0xff]
      %v1849 = vld [vmem:[%s1430 + $0x151] sm:$0xff]
      %v1850 = vld [vmem:[%s1430 + $0x159] sm:$0xff]
      %v1851 = vld [vmem:[%s1430 + $0x169] sm:$0xff]
      %v1852 = vld [vmem:[%s1430 + $0x171] sm:$0xff]
      %s1853 = scalar_lea.vmem %s294, 16
      %v1854 = vld [vmem:[%s1853] sm:$0xf]
      %v1856 = vsel %vm388, %v1821, 0
      %v1859 = vsel %vm388, %v1822, 0
      %v1862 = vsel %vm388, %v1823, 0
      %v1865 = vsel %vm388, %v1824, 0
      %v1868 = vsel %vm388, %v1825, 0
      %v1871 = vsel %vm388, %v1826, 0
      %v1874 = vsel %vm388, %v1827, 0
      %v1877 = vsel %vm388, %v1828, 0
      %v1880 = vsel %vm388, %v1829, 0
      %v1883 = vsel %vm388, %v1830, 0
      %v1886 = vsel %vm388, %v1831, 0
      %v1889 = vsel %vm388, %v1832, 0
      %v1892 = vsel %vm388, %v1833, 0
      %v1895 = vsel %vm388, %v1834, 0
      %v1898 = vsel %vm388, %v1835, 0
      %v1901 = vsel %vm388, %v1836, 0
      %v1904 = vsel %vm388, %v1837, 0
      %v1907 = vsel %vm388, %v1838, 0
      %v1910 = vsel %vm388, %v1839, 0
      %v1913 = vsel %vm388, %v1840, 0
      %v1916 = vsel %vm388, %v1841, 0
      %v1919 = vsel %vm388, %v1842, 0
      %v1922 = vsel %vm388, %v1843, 0
      %v1925 = vsel %vm388, %v1844, 0
      %v1928 = vsel %vm388, %v1845, 0
      %v1931 = vsel %vm388, %v1846, 0
      %v1934 = vsel %vm388, %v1847, 0
      %v1937 = vsel %vm388, %v1848, 0
      %v1940 = vsel %vm388, %v1849, 0
      %v1943 = vsel %vm388, %v1850, 0
      %v1946 = vsel %vm388, %v1851, 0
      %v1949 = vsel %vm388, %v1852, 0
      %v1952 = vsel %vm485, %v1854, 0
      %1954 = vmatprep.subr.mxu0 0.0
      %1955 = vmatpush1.msra.mxu0 %v1952
      %1956 = vmatprep.subr.mxu0 0.0
      %1957 = vmatpush1.msra.mxu0 0.0
      %1958 = vmatprep.subr.mxu0 0.0
      %1959 = vmatpush1.msra.mxu0 0.0
      %1960 = vmatprep.subr.mxu0 0.0
      %1961 = vmatpush1.msra.mxu0 0.0
      %1962 = vmatprep.subr.mxu0 0.0
      %1963 = vmatpush1.msra.mxu0 0.0
      %1964 = vmatprep.subr.mxu0 0.0
      %1965 = vmatpush1.msra.mxu0 0.0
      %1966 = vmatprep.subr.mxu0 0.0
      %1967 = vmatpush1.msra.mxu0 0.0
      %1968 = vmatprep.subr.mxu0 0.0
      %1969 = vmatpush1.msra.mxu0 0.0
      %1970 = vmatprep.subr.mxu0 0.0
      %1971 = vmatpush1.msra.mxu0 0.0
      %1972 = vmatprep.subr.mxu0 0.0
      %1973 = vmatpush1.msra.mxu0 0.0
      %1974 = vmatprep.subr.mxu0 0.0
      %1975 = vmatpush1.msra.mxu0 0.0
      %1976 = vmatprep.subr.mxu0 0.0
      %1977 = vmatpush1.msra.mxu0 0.0
      %1978 = vmatprep.subr.mxu0 0.0
      %1979 = vmatpush1.msra.mxu0 0.0
      %1980 = vmatprep.subr.mxu0 0.0
      %1981 = vmatpush1.msra.mxu0 0.0
      %1982 = vmatprep.subr.mxu0 0.0
      %1983 = vmatpush1.msra.mxu0 0.0
      %1984 = vmatprep.subr.mxu0 0.0
      %1985 = vmatpush1.msra.mxu0 0.0
      %1986 = vmatprep.subr.mxu0 0.0
      %1987 = vmatpush1.msra.mxu0 0.0
      %1988 = vmatprep.subr.mxu0 0.0
      %1989 = vmatpush1.msra.mxu0 0.0
      %1990 = vmatprep.subr.mxu0 0.0
      %1991 = vmatpush1.msra.mxu0 0.0
      %1992 = vmatprep.subr.mxu0 0.0
      %1993 = vmatpush1.msra.mxu0 0.0
      %1994 = vmatprep.subr.mxu0 0.0
      %1995 = vmatpush1.msra.mxu0 0.0
      %1996 = vmatprep.subr.mxu0 0.0
      %1997 = vmatpush1.msra.mxu0 0.0
      %1998 = vmatprep.subr.mxu0 0.0
      %1999 = vmatpush1.msra.mxu0 0.0
      %2000 = vmatprep.subr.mxu0 0.0
      %2001 = vmatpush1.msra.mxu0 0.0
      %2002 = vmatprep.subr.mxu0 0.0
      %2003 = vmatpush1.msra.mxu0 0.0
      %2004 = vmatprep.subr.mxu0 0.0
      %2005 = vmatpush1.msra.mxu0 0.0
      %2006 = vmatprep.subr.mxu0 0.0
      %2007 = vmatpush1.msra.mxu0 0.0
      %2008 = vmatprep.subr.mxu0 0.0
      %2009 = vmatpush1.msra.mxu0 0.0
      %2010 = vmatprep.subr.mxu0 0.0
      %2011 = vmatpush1.msra.mxu0 0.0
      %2012 = vmatprep.subr.mxu0 0.0
      %2013 = vmatpush1.msra.mxu0 0.0
      %2014 = vmatprep.subr.mxu0 0.0
      %2015 = vmatpush1.msra.mxu0 0.0
      %2016 = vmatprep.subr.mxu0 0.0
      %2017 = vmatpush1.msra.mxu0 0.0
      %2018 = vmatprep.mubr.f32.mxu0 0.0
      %2019 = vmatmul.mubr.f32.gmra.mrb[0].mxu0 %v1856
      %v2020 = vpop.f32.mrb[0].mxu0
      %v2021 = vadd.f32 0.0, %v2020
      %v2022 = vpop.f32.mrb[0].mxu0
      %2023 = vmatprep.mubr.f32.mxu0 0.0
      %2024 = vmatmul.mubr.f32.gmra.mrb[0].mxu0 %v1859
      %v2025 = vpop.f32.mrb[0].mxu0
      %v2026 = vadd.f32 0.0, %v2025
      %v2027 = vpop.f32.mrb[0].mxu0
      %2028 = vmatprep.mubr.f32.mxu0 0.0
      %2029 = vmatmul.mubr.f32.gmra.mrb[0].mxu0 %v1862
      %v2030 = vpop.f32.mrb[0].mxu0
      %v2031 = vadd.f32 0.0, %v2030
      %v2032 = vpop.f32.mrb[0].mxu0
      %2033 = vmatprep.mubr.f32.mxu0 0.0
      %2034 = vmatmul.mubr.f32.gmra.mrb[0].mxu0 %v1865
      %v2035 = vpop.f32.mrb[0].mxu0
      %v2036 = vadd.f32 0.0, %v2035
      %v2037 = vpop.f32.mrb[0].mxu0
      %2038 = vmatprep.mubr.f32.mxu0 0.0
      %2039 = vmatmul.mubr.f32.gmra.mrb[0].mxu0 %v1868
      %v2040 = vpop.f32.mrb[0].mxu0
      %v2041 = vadd.f32 0.0, %v2040
      %v2042 = vpop.f32.mrb[0].mxu0
      %2043 = vmatprep.mubr.f32.mxu0 0.0
      %2044 = vmatmul.mubr.f32.gmra.mrb[0].mxu0 %v1871
      %v2045 = vpop.f32.mrb[0].mxu0
      %v2046 = vadd.f32 0.0, %v2045
      %v2047 = vpop.f32.mrb[0].mxu0
      %2048 = vmatprep.mubr.f32.mxu0 0.0
      %2049 = vmatmul.mubr.f32.gmra.mrb[0].mxu0 %v1874
      %v2050 = vpop.f32.mrb[0].mxu0
      %v2051 = vadd.f32 0.0, %v2050
      %v2052 = vpop.f32.mrb[0].mxu0
      %2053 = vmatprep.mubr.f32.mxu0 0.0
      %2054 = vmatmul.mubr.f32.gmra.mrb[0].mxu0 %v1877
      %v2055 = vpop.f32.mrb[0].mxu0
      %v2056 = vadd.f32 0.0, %v2055
      %v2057 = vpop.f32.mrb[0].mxu0
      %2058 = vmatprep.mubr.f32.mxu0 0.0
      %2059 = vmatmul.mubr.f32.gmra.mrb[0].mxu0 %v1880
      %v2060 = vpop.f32.mrb[0].mxu0
      %v2061 = vadd.f32 0.0, %v2060
      %v2062 = vpop.f32.mrb[0].mxu0
      %2063 = vmatprep.mubr.f32.mxu0 0.0
      %2064 = vmatmul.mubr.f32.gmra.mrb[0].mxu0 %v1883
      %v2065 = vpop.f32.mrb[0].mxu0
      %v2066 = vadd.f32 0.0, %v2065
      %v2067 = vpop.f32.mrb[0].mxu0
      %2068 = vmatprep.mubr.f32.mxu0 0.0
      %2069 = vmatmul.mubr.f32.gmra.mrb[0].mxu0 %v1886
      %v2070 = vpop.f32.mrb[0].mxu0
      %v2071 = vadd.f32 0.0, %v2070
      %v2072 = vpop.f32.mrb[0].mxu0
      %2073 = vmatprep.mubr.f32.mxu0 0.0
      %2074 = vmatmul.mubr.f32.gmra.mrb[0].mxu0 %v1889
      %v2075 = vpop.f32.mrb[0].mxu0
      %v2076 = vadd.f32 0.0, %v2075
      %v2077 = vpop.f32.mrb[0].mxu0
      %2078 = vmatprep.mubr.f32.mxu0 0.0
      %2079 = vmatmul.mubr.f32.gmra.mrb[0].mxu0 %v1892
      %v2080 = vpop.f32.mrb[0].mxu0
      %v2081 = vadd.f32 0.0, %v2080
      %v2082 = vpop.f32.mrb[0].mxu0
      %2083 = vmatprep.mubr.f32.mxu0 0.0
      %2084 = vmatmul.mubr.f32.gmra.mrb[0].mxu0 %v1895
      %v2085 = vpop.f32.mrb[0].mxu0
      %v2086 = vadd.f32 0.0, %v2085
      %v2087 = vpop.f32.mrb[0].mxu0
      %2088 = vmatprep.mubr.f32.mxu0 0.0
      %2089 = vmatmul.mubr.f32.gmra.mrb[0].mxu0 %v1898
      %v2090 = vpop.f32.mrb[0].mxu0
      %v2091 = vadd.f32 0.0, %v2090
      %v2092 = vpop.f32.mrb[0].mxu0
      %2093 = vmatprep.mubr.f32.mxu0 0.0
      %2094 = vmatmul.mubr.f32.gmra.mrb[0].mxu0 %v1901
      %v2095 = vpop.f32.mrb[0].mxu0
      %v2096 = vadd.f32 0.0, %v2095
      %v2097 = vpop.f32.mrb[0].mxu0
      %2098 = vmatprep.mubr.f32.mxu0 0.0
      %2099 = vmatmul.mubr.f32.gmra.mrb[0].mxu0 %v1904
      %v2100 = vpop.f32.mrb[0].mxu0
      %v2101 = vadd.f32 0.0, %v2100
      %v2102 = vpop.f32.mrb[0].mxu0
      %2103 = vmatprep.mubr.f32.mxu0 0.0
      %2104 = vmatmul.mubr.f32.gmra.mrb[0].mxu0 %v1907
      %v2105 = vpop.f32.mrb[0].mxu0
      %v2106 = vadd.f32 0.0, %v2105
      %v2107 = vpop.f32.mrb[0].mxu0
      %2108 = vmatprep.mubr.f32.mxu0 0.0
      %2109 = vmatmul.mubr.f32.gmra.mrb[0].mxu0 %v1910
      %v2110 = vpop.f32.mrb[0].mxu0
      %v2111 = vadd.f32 0.0, %v2110
      %v2112 = vpop.f32.mrb[0].mxu0
      %2113 = vmatprep.mubr.f32.mxu0 0.0
      %2114 = vmatmul.mubr.f32.gmra.mrb[0].mxu0 %v1913
      %v2115 = vpop.f32.mrb[0].mxu0
      %v2116 = vadd.f32 0.0, %v2115
      %v2117 = vpop.f32.mrb[0].mxu0
      %2118 = vmatprep.mubr.f32.mxu0 0.0
      %2119 = vmatmul.mubr.f32.gmra.mrb[0].mxu0 %v1916
      %v2120 = vpop.f32.mrb[0].mxu0
      %v2121 = vadd.f32 0.0, %v2120
      %v2122 = vpop.f32.mrb[0].mxu0
      %2123 = vmatprep.mubr.f32.mxu0 0.0
      %2124 = vmatmul.mubr.f32.gmra.mrb[0].mxu0 %v1919
      %v2125 = vpop.f32.mrb[0].mxu0
      %v2126 = vadd.f32 0.0, %v2125
      %v2127 = vpop.f32.mrb[0].mxu0
      %2128 = vmatprep.mubr.f32.mxu0 0.0
      %2129 = vmatmul.mubr.f32.gmra.mrb[0].mxu0 %v1922
      %v2130 = vpop.f32.mrb[0].mxu0
      %v2131 = vadd.f32 0.0, %v2130
      %v2132 = vpop.f32.mrb[0].mxu0
      %2133 = vmatprep.mubr.f32.mxu0 0.0
      %2134 = vmatmul.mubr.f32.gmra.mrb[0].mxu0 %v1925
      %v2135 = vpop.f32.mrb[0].mxu0
      %v2136 = vadd.f32 0.0, %v2135
      %v2137 = vpop.f32.mrb[0].mxu0
      %2138 = vmatprep.mubr.f32.mxu0 0.0
      %2139 = vmatmul.mubr.f32.gmra.mrb[0].mxu0 %v1928
      %v2140 = vpop.f32.mrb[0].mxu0
      %v2141 = vadd.f32 0.0, %v2140
      %v2142 = vpop.f32.mrb[0].mxu0
      %2143 = vmatprep.mubr.f32.mxu0 0.0
      %2144 = vmatmul.mubr.f32.gmra.mrb[0].mxu0 %v1931
      %v2145 = vpop.f32.mrb[0].mxu0
      %v2146 = vadd.f32 0.0, %v2145
      %v2147 = vpop.f32.mrb[0].mxu0
      %2148 = vmatprep.mubr.f32.mxu0 0.0
      %2149 = vmatmul.mubr.f32.gmra.mrb[0].mxu0 %v1934
      %v2150 = vpop.f32.mrb[0].mxu0
      %v2151 = vadd.f32 0.0, %v2150
      %v2152 = vpop.f32.mrb[0].mxu0
      %2153 = vmatprep.mubr.f32.mxu0 0.0
      %2154 = vmatmul.mubr.f32.gmra.mrb[0].mxu0 %v1937
      %v2155 = vpop.f32.mrb[0].mxu0
      %v2156 = vadd.f32 0.0, %v2155
      %v2157 = vpop.f32.mrb[0].mxu0
      %2158 = vmatprep.mubr.f32.mxu0 0.0
      %2159 = vmatmul.mubr.f32.gmra.mrb[0].mxu0 %v1940
      %v2160 = vpop.f32.mrb[0].mxu0
      %v2161 = vadd.f32 0.0, %v2160
      %v2162 = vpop.f32.mrb[0].mxu0
      %2163 = vmatprep.mubr.f32.mxu0 0.0
      %2164 = vmatmul.mubr.f32.gmra.mrb[0].mxu0 %v1943
      %v2165 = vpop.f32.mrb[0].mxu0
      %v2166 = vadd.f32 0.0, %v2165
      %v2167 = vpop.f32.mrb[0].mxu0
      %2168 = vmatprep.mubr.f32.mxu0 0.0
      %2169 = vmatmul.mubr.f32.gmra.mrb[0].mxu0 %v1946
      %v2170 = vpop.f32.mrb[0].mxu0
      %v2171 = vadd.f32 0.0, %v2170
      %v2172 = vpop.f32.mrb[0].mxu0
      %2173 = vmatprep.mubr.f32.mxu0 0.0
      %2174 = vmatmul.mubr.f32.gmra.mrb[0].mxu0 %v1949
      %v2175 = vpop.f32.mrb[0].mxu0
      %v2176 = vadd.f32 0.0, %v2175
      %v2177 = vpop.f32.mrb[0].mxu0
      %2178 = vdwg.mxu0
      %v2179 = vadd.f32 %v1789, %v2021
      %v2180 = vadd.f32 %v1790, %v2026
      %v2181 = vadd.f32 %v1791, %v2031
      %v2182 = vadd.f32 %v1792, %v2036
      %v2183 = vadd.f32 %v1793, %v2041
      %v2184 = vadd.f32 %v1794, %v2046
      %v2185 = vadd.f32 %v1795, %v2051
      %v2186 = vadd.f32 %v1796, %v2056
      %v2187 = vadd.f32 %v1797, %v2061
      %v2188 = vadd.f32 %v1798, %v2066
      %v2189 = vadd.f32 %v1799, %v2071
      %v2190 = vadd.f32 %v1800, %v2076
      %v2191 = vadd.f32 %v1801, %v2081
      %v2192 = vadd.f32 %v1802, %v2086
      %v2193 = vadd.f32 %v1803, %v2091
      %v2194 = vadd.f32 %v1804, %v2096
      %v2195 = vadd.f32 %v1805, %v2101
      %v2196 = vadd.f32 %v1806, %v2106
      %v2197 = vadd.f32 %v1807, %v2111
      %v2198 = vadd.f32 %v1808, %v2116
      %v2199 = vadd.f32 %v1809, %v2121
      %v2200 = vadd.f32 %v1810, %v2126
      %v2201 = vadd.f32 %v1811, %v2131
      %v2202 = vadd.f32 %v1812, %v2136
      %v2203 = vadd.f32 %v1813, %v2141
      %v2204 = vadd.f32 %v1814, %v2146
      %v2205 = vadd.f32 %v1815, %v2151
      %v2206 = vadd.f32 %v1816, %v2156
      %v2207 = vadd.f32 %v1817, %v2161
      %v2208 = vadd.f32 %v1818, %v2166
      %v2209 = vadd.f32 %v1819, %v2171
      %v2210 = vadd.f32 %v1820, %v2176
      %v2211 = vld [vmem:[%s1430 + $0x2] sm:$0xff]
      %v2212 = vld [vmem:[%s1430 + $0xa] sm:$0xff]
      %v2213 = vld [vmem:[%s1430 + $0x1a] sm:$0xff]
      %v2214 = vld [vmem:[%s1430 + $0x22] sm:$0xff]
      %v2215 = vld [vmem:[%s1430 + $0x32] sm:$0xff]
      %v2216 = vld [vmem:[%s1430 + $0x3a] sm:$0xff]
      %v2217 = vld [vmem:[%s1430 + $0x4a] sm:$0xff]
      %v2218 = vld [vmem:[%s1430 + $0x52] sm:$0xff]
      %v2219 = vld [vmem:[%s1430 + $0x62] sm:$0xff]
      %v2220 = vld [vmem:[%s1430 + $0x6a] sm:$0xff]
      %v2221 = vld [vmem:[%s1430 + $0x7a] sm:$0xff]
      %v2222 = vld [vmem:[%s1430 + $0x82] sm:$0xff]
      %v2223 = vld [vmem:[%s1430 + $0x92] sm:$0xff]
      %v2224 = vld [vmem:[%s1430 + $0x9a] sm:$0xff]
      %v2225 = vld [vmem:[%s1430 + $0xaa] sm:$0xff]
      %v2226 = vld [vmem:[%s1430 + $0xb2] sm:$0xff]
      %v2227 = vld [vmem:[%s1430 + $0xc2] sm:$0xff]
      %v2228 = vld [vmem:[%s1430 + $0xca] sm:$0xff]
      %v2229 = vld [vmem:[%s1430 + $0xda] sm:$0xff]
      %v2230 = vld [vmem:[%s1430 + $0xe2] sm:$0xff]
      %v2231 = vld [vmem:[%s1430 + $0xf2] sm:$0xff]
      %v2232 = vld [vmem:[%s1430 + $0xfa] sm:$0xff]
      %v2233 = vld [vmem:[%s1430 + $0x10a] sm:$0xff]
      %v2234 = vld [vmem:[%s1430 + $0x112] sm:$0xff]
      %v2235 = vld [vmem:[%s1430 + $0x122] sm:$0xff]
      %v2236 = vld [vmem:[%s1430 + $0x12a] sm:$0xff]
      %v2237 = vld [vmem:[%s1430 + $0x13a] sm:$0xff]
      %v2238 = vld [vmem:[%s1430 + $0x142] sm:$0xff]
      %v2239 = vld [vmem:[%s1430 + $0x152] sm:$0xff]
      %v2240 = vld [vmem:[%s1430 + $0x15a] sm:$0xff]
      %v2241 = vld [vmem:[%s1430 + $0x16a] sm:$0xff]
      %v2242 = vld [vmem:[%s1430 + $0x172] sm:$0xff]
      %s2243 = scalar_lea.vmem %s294, 20
      %v2244 = vld [vmem:[%s2243] sm:$0xf]
      %v2246 = vsel %vm388, %v2211, 0
      %v2249 = vsel %vm388, %v2212, 0
      %v2252 = vsel %vm388, %v2213, 0
      %v2255 = vsel %vm388, %v2214, 0
      %v2258 = vsel %vm388, %v2215, 0
      %v2261 = vsel %vm388, %v2216, 0
      %v2264 = vsel %vm388, %v2217, 0
      %v2267 = vsel %vm388, %v2218, 0
      %v2270 = vsel %vm388, %v2219, 0
      %v2273 = vsel %vm388, %v2220, 0
      %v2276 = vsel %vm388, %v2221, 0
      %v2279 = vsel %vm388, %v2222, 0
      %v2282 = vsel %vm388, %v2223, 0
      %v2285 = vsel %vm388, %v2224, 0
      %v2288 = vsel %vm388, %v2225, 0
      %v2291 = vsel %vm388, %v2226, 0
      %v2294 = vsel %vm388, %v2227, 0
      %v2297 = vsel %vm388, %v2228, 0
      %v2300 = vsel %vm388, %v2229, 0
      %v2303 = vsel %vm388, %v2230, 0
      %v2306 = vsel %vm388, %v2231, 0
      %v2309 = vsel %vm388, %v2232, 0
      %v2312 = vsel %vm388, %v2233, 0
      %v2315 = vsel %vm388, %v2234, 0
      %v2318 = vsel %vm388, %v2235, 0
      %v2321 = vsel %vm388, %v2236, 0
      %v2324 = vsel %vm388, %v2237, 0
      %v2327 = vsel %vm388, %v2238, 0
      %v2330 = vsel %vm388, %v2239, 0
      %v2333 = vsel %vm388, %v2240, 0
      %v2336 = vsel %vm388, %v2241, 0
      %v2339 = vsel %vm388, %v2242, 0
      %v2342 = vsel %vm485, %v2244, 0
      %2344 = vmatprep.subr.mxu0 0.0
      %2345 = vmatpush1.msra.mxu0 %v2342
      %2346 = vmatprep.subr.mxu0 0.0
      %2347 = vmatpush1.msra.mxu0 0.0
      %2348 = vmatprep.subr.mxu0 0.0
      %2349 = vmatpush1.msra.mxu0 0.0
      %2350 = vmatprep.subr.mxu0 0.0
      %2351 = vmatpush1.msra.mxu0 0.0
      %2352 = vmatprep.subr.mxu0 0.0
      %2353 = vmatpush1.msra.mxu0 0.0
      %2354 = vmatprep.subr.mxu0 0.0
      %2355 = vmatpush1.msra.mxu0 0.0
      %2356 = vmatprep.subr.mxu0 0.0
      %2357 = vmatpush1.msra.mxu0 0.0
      %2358 = vmatprep.subr.mxu0 0.0
      %2359 = vmatpush1.msra.mxu0 0.0
      %2360 = vmatprep.subr.mxu0 0.0
      %2361 = vmatpush1.msra.mxu0 0.0
      %2362 = vmatprep.subr.mxu0 0.0
      %2363 = vmatpush1.msra.mxu0 0.0
      %2364 = vmatprep.subr.mxu0 0.0
      %2365 = vmatpush1.msra.mxu0 0.0
      %2366 = vmatprep.subr.mxu0 0.0
      %2367 = vmatpush1.msra.mxu0 0.0
      %2368 = vmatprep.subr.mxu0 0.0
      %2369 = vmatpush1.msra.mxu0 0.0
      %2370 = vmatprep.subr.mxu0 0.0
      %2371 = vmatpush1.msra.mxu0 0.0
      %2372 = vmatprep.subr.mxu0 0.0
      %2373 = vmatpush1.msra.mxu0 0.0
      %2374 = vmatprep.subr.mxu0 0.0
      %2375 = vmatpush1.msra.mxu0 0.0
      %2376 = vmatprep.subr.mxu0 0.0
      %2377 = vmatpush1.msra.mxu0 0.0
      %2378 = vmatprep.subr.mxu0 0.0
      %2379 = vmatpush1.msra.mxu0 0.0
      %2380 = vmatprep.subr.mxu0 0.0
      %2381 = vmatpush1.msra.mxu0 0.0
      %2382 = vmatprep.subr.mxu0 0.0
      %2383 = vmatpush1.msra.mxu0 0.0
      %2384 = vmatprep.subr.mxu0 0.0
      %2385 = vmatpush1.msra.mxu0 0.0
      %2386 = vmatprep.subr.mxu0 0.0
      %2387 = vmatpush1.msra.mxu0 0.0
      %2388 = vmatprep.subr.mxu0 0.0
      %2389 = vmatpush1.msra.mxu0 0.0
      %2390 = vmatprep.subr.mxu0 0.0
      %2391 = vmatpush1.msra.mxu0 0.0
      %2392 = vmatprep.subr.mxu0 0.0
      %2393 = vmatpush1.msra.mxu0 0.0
      %2394 = vmatprep.subr.mxu0 0.0
      %2395 = vmatpush1.msra.mxu0 0.0
      %2396 = vmatprep.subr.mxu0 0.0
      %2397 = vmatpush1.msra.mxu0 0.0
      %2398 = vmatprep.subr.mxu0 0.0
      %2399 = vmatpush1.msra.mxu0 0.0
      %2400 = vmatprep.subr.mxu0 0.0
      %2401 = vmatpush1.msra.mxu0 0.0
      %2402 = vmatprep.subr.mxu0 0.0
      %2403 = vmatpush1.msra.mxu0 0.0
      %2404 = vmatprep.subr.mxu0 0.0
      %2405 = vmatpush1.msra.mxu0 0.0
      %2406 = vmatprep.subr.mxu0 0.0
      %2407 = vmatpush1.msra.mxu0 0.0
      %2408 = vmatprep.mubr.f32.mxu0 0.0
      %2409 = vmatmul.mubr.f32.gmra.mrb[0].mxu0 %v2246
      %v2410 = vpop.f32.mrb[0].mxu0
      %v2411 = vadd.f32 0.0, %v2410
      %v2412 = vpop.f32.mrb[0].mxu0
      %2413 = vmatprep.mubr.f32.mxu0 0.0
      %2414 = vmatmul.mubr.f32.gmra.mrb[0].mxu0 %v2249
      %v2415 = vpop.f32.mrb[0].mxu0
      %v2416 = vadd.f32 0.0, %v2415
      %v2417 = vpop.f32.mrb[0].mxu0
      %2418 = vmatprep.mubr.f32.mxu0 0.0
      %2419 = vmatmul.mubr.f32.gmra.mrb[0].mxu0 %v2252
      %v2420 = vpop.f32.mrb[0].mxu0
      %v2421 = vadd.f32 0.0, %v2420
      %v2422 = vpop.f32.mrb[0].mxu0
      %2423 = vmatprep.mubr.f32.mxu0 0.0
      %2424 = vmatmul.mubr.f32.gmra.mrb[0].mxu0 %v2255
      %v2425 = vpop.f32.mrb[0].mxu0
      %v2426 = vadd.f32 0.0, %v2425
      %v2427 = vpop.f32.mrb[0].mxu0
      %2428 = vmatprep.mubr.f32.mxu0 0.0
      %2429 = vmatmul.mubr.f32.gmra.mrb[0].mxu0 %v2258
      %v2430 = vpop.f32.mrb[0].mxu0
      %v2431 = vadd.f32 0.0, %v2430
      %v2432 = vpop.f32.mrb[0].mxu0
      %2433 = vmatprep.mubr.f32.mxu0 0.0
      %2434 = vmatmul.mubr.f32.gmra.mrb[0].mxu0 %v2261
      %v2435 = vpop.f32.mrb[0].mxu0
      %v2436 = vadd.f32 0.0, %v2435
      %v2437 = vpop.f32.mrb[0].mxu0
      %2438 = vmatprep.mubr.f32.mxu0 0.0
      %2439 = vmatmul.mubr.f32.gmra.mrb[0].mxu0 %v2264
      %v2440 = vpop.f32.mrb[0].mxu0
      %v2441 = vadd.f32 0.0, %v2440
      %v2442 = vpop.f32.mrb[0].mxu0
      %2443 = vmatprep.mubr.f32.mxu0 0.0
      %2444 = vmatmul.mubr.f32.gmra.mrb[0].mxu0 %v2267
      %v2445 = vpop.f32.mrb[0].mxu0
      %v2446 = vadd.f32 0.0, %v2445
      %v2447 = vpop.f32.mrb[0].mxu0
      %2448 = vmatprep.mubr.f32.mxu0 0.0
      %2449 = vmatmul.mubr.f32.gmra.mrb[0].mxu0 %v2270
      %v2450 = vpop.f32.mrb[0].mxu0
      %v2451 = vadd.f32 0.0, %v2450
      %v2452 = vpop.f32.mrb[0].mxu0
      %2453 = vmatprep.mubr.f32.mxu0 0.0
      %2454 = vmatmul.mubr.f32.gmra.mrb[0].mxu0 %v2273
      %v2455 = vpop.f32.mrb[0].mxu0
      %v2456 = vadd.f32 0.0, %v2455
      %v2457 = vpop.f32.mrb[0].mxu0
      %2458 = vmatprep.mubr.f32.mxu0 0.0
      %2459 = vmatmul.mubr.f32.gmra.mrb[0].mxu0 %v2276
      %v2460 = vpop.f32.mrb[0].mxu0
      %v2461 = vadd.f32 0.0, %v2460
      %v2462 = vpop.f32.mrb[0].mxu0
      %2463 = vmatprep.mubr.f32.mxu0 0.0
      %2464 = vmatmul.mubr.f32.gmra.mrb[0].mxu0 %v2279
      %v2465 = vpop.f32.mrb[0].mxu0
      %v2466 = vadd.f32 0.0, %v2465
      %v2467 = vpop.f32.mrb[0].mxu0
      %2468 = vmatprep.mubr.f32.mxu0 0.0
      %2469 = vmatmul.mubr.f32.gmra.mrb[0].mxu0 %v2282
      %v2470 = vpop.f32.mrb[0].mxu0
      %v2471 = vadd.f32 0.0, %v2470
      %v2472 = vpop.f32.mrb[0].mxu0
      %2473 = vmatprep.mubr.f32.mxu0 0.0
      %2474 = vmatmul.mubr.f32.gmra.mrb[0].mxu0 %v2285
      %v2475 = vpop.f32.mrb[0].mxu0
      %v2476 = vadd.f32 0.0, %v2475
      %v2477 = vpop.f32.mrb[0].mxu0
      %2478 = vmatprep.mubr.f32.mxu0 0.0
      %2479 = vmatmul.mubr.f32.gmra.mrb[0].mxu0 %v2288
      %v2480 = vpop.f32.mrb[0].mxu0
      %v2481 = vadd.f32 0.0, %v2480
      %v2482 = vpop.f32.mrb[0].mxu0
      %2483 = vmatprep.mubr.f32.mxu0 0.0
      %2484 = vmatmul.mubr.f32.gmra.mrb[0].mxu0 %v2291
      %v2485 = vpop.f32.mrb[0].mxu0
      %v2486 = vadd.f32 0.0, %v2485
      %v2487 = vpop.f32.mrb[0].mxu0
      %2488 = vmatprep.mubr.f32.mxu0 0.0
      %2489 = vmatmul.mubr.f32.gmra.mrb[0].mxu0 %v2294
      %v2490 = vpop.f32.mrb[0].mxu0
      %v2491 = vadd.f32 0.0, %v2490
      %v2492 = vpop.f32.mrb[0].mxu0
      %2493 = vmatprep.mubr.f32.mxu0 0.0
      %2494 = vmatmul.mubr.f32.gmra.mrb[0].mxu0 %v2297
      %v2495 = vpop.f32.mrb[0].mxu0
      %v2496 = vadd.f32 0.0, %v2495
      %v2497 = vpop.f32.mrb[0].mxu0
      %2498 = vmatprep.mubr.f32.mxu0 0.0
      %2499 = vmatmul.mubr.f32.gmra.mrb[0].mxu0 %v2300
      %v2500 = vpop.f32.mrb[0].mxu0
      %v2501 = vadd.f32 0.0, %v2500
      %v2502 = vpop.f32.mrb[0].mxu0
      %2503 = vmatprep.mubr.f32.mxu0 0.0
      %2504 = vmatmul.mubr.f32.gmra.mrb[0].mxu0 %v2303
      %v2505 = vpop.f32.mrb[0].mxu0
      %v2506 = vadd.f32 0.0, %v2505
      %v2507 = vpop.f32.mrb[0].mxu0
      %2508 = vmatprep.mubr.f32.mxu0 0.0
      %2509 = vmatmul.mubr.f32.gmra.mrb[0].mxu0 %v2306
      %v2510 = vpop.f32.mrb[0].mxu0
      %v2511 = vadd.f32 0.0, %v2510
      %v2512 = vpop.f32.mrb[0].mxu0
      %2513 = vmatprep.mubr.f32.mxu0 0.0
      %2514 = vmatmul.mubr.f32.gmra.mrb[0].mxu0 %v2309
      %v2515 = vpop.f32.mrb[0].mxu0
      %v2516 = vadd.f32 0.0, %v2515
      %v2517 = vpop.f32.mrb[0].mxu0
      %2518 = vmatprep.mubr.f32.mxu0 0.0
      %2519 = vmatmul.mubr.f32.gmra.mrb[0].mxu0 %v2312
      %v2520 = vpop.f32.mrb[0].mxu0
      %v2521 = vadd.f32 0.0, %v2520
      %v2522 = vpop.f32.mrb[0].mxu0
      %2523 = vmatprep.mubr.f32.mxu0 0.0
      %2524 = vmatmul.mubr.f32.gmra.mrb[0].mxu0 %v2315
      %v2525 = vpop.f32.mrb[0].mxu0
      %v2526 = vadd.f32 0.0, %v2525
      %v2527 = vpop.f32.mrb[0].mxu0
      %2528 = vmatprep.mubr.f32.mxu0 0.0
      %2529 = vmatmul.mubr.f32.gmra.mrb[0].mxu0 %v2318
      %v2530 = vpop.f32.mrb[0].mxu0
      %v2531 = vadd.f32 0.0, %v2530
      %v2532 = vpop.f32.mrb[0].mxu0
      %2533 = vmatprep.mubr.f32.mxu0 0.0
      %2534 = vmatmul.mubr.f32.gmra.mrb[0].mxu0 %v2321
      %v2535 = vpop.f32.mrb[0].mxu0
      %v2536 = vadd.f32 0.0, %v2535
      %v2537 = vpop.f32.mrb[0].mxu0
      %2538 = vmatprep.mubr.f32.mxu0 0.0
      %2539 = vmatmul.mubr.f32.gmra.mrb[0].mxu0 %v2324
      %v2540 = vpop.f32.mrb[0].mxu0
      %v2541 = vadd.f32 0.0, %v2540
      %v2542 = vpop.f32.mrb[0].mxu0
      %2543 = vmatprep.mubr.f32.mxu0 0.0
      %2544 = vmatmul.mubr.f32.gmra.mrb[0].mxu0 %v2327
      %v2545 = vpop.f32.mrb[0].mxu0
      %v2546 = vadd.f32 0.0, %v2545
      %v2547 = vpop.f32.mrb[0].mxu0
      %2548 = vmatprep.mubr.f32.mxu0 0.0
      %2549 = vmatmul.mubr.f32.gmra.mrb[0].mxu0 %v2330
      %v2550 = vpop.f32.mrb[0].mxu0
      %v2551 = vadd.f32 0.0, %v2550
      %v2552 = vpop.f32.mrb[0].mxu0
      %2553 = vmatprep.mubr.f32.mxu0 0.0
      %2554 = vmatmul.mubr.f32.gmra.mrb[0].mxu0 %v2333
      %v2555 = vpop.f32.mrb[0].mxu0
      %v2556 = vadd.f32 0.0, %v2555
      %v2557 = vpop.f32.mrb[0].mxu0
      %2558 = vmatprep.mubr.f32.mxu0 0.0
      %2559 = vmatmul.mubr.f32.gmra.mrb[0].mxu0 %v2336
      %v2560 = vpop.f32.mrb[0].mxu0
      %v2561 = vadd.f32 0.0, %v2560
      %v2562 = vpop.f32.mrb[0].mxu0
      %2563 = vmatprep.mubr.f32.mxu0 0.0
      %2564 = vmatmul.mubr.f32.gmra.mrb[0].mxu0 %v2339
      %v2565 = vpop.f32.mrb[0].mxu0
      %v2566 = vadd.f32 0.0, %v2565
      %v2567 = vpop.f32.mrb[0].mxu0
      %2568 = vdwg.mxu0
      %v2569 = vadd.f32 %v2179, %v2411
      %v2570 = vadd.f32 %v2180, %v2416
      %v2571 = vadd.f32 %v2181, %v2421
      %v2572 = vadd.f32 %v2182, %v2426
      %v2573 = vadd.f32 %v2183, %v2431
      %v2574 = vadd.f32 %v2184, %v2436
      %v2575 = vadd.f32 %v2185, %v2441
      %v2576 = vadd.f32 %v2186, %v2446
      %v2577 = vadd.f32 %v2187, %v2451
      %v2578 = vadd.f32 %v2188, %v2456
      %v2579 = vadd.f32 %v2189, %v2461
      %v2580 = vadd.f32 %v2190, %v2466
      %v2581 = vadd.f32 %v2191, %v2471
      %v2582 = vadd.f32 %v2192, %v2476
      %v2583 = vadd.f32 %v2193, %v2481
      %v2584 = vadd.f32 %v2194, %v2486
      %v2585 = vadd.f32 %v2195, %v2491
      %v2586 = vadd.f32 %v2196, %v2496
      %v2587 = vadd.f32 %v2197, %v2501
      %v2588 = vadd.f32 %v2198, %v2506
      %v2589 = vadd.f32 %v2199, %v2511
      %v2590 = vadd.f32 %v2200, %v2516
      %v2591 = vadd.f32 %v2201, %v2521
      %v2592 = vadd.f32 %v2202, %v2526
      %v2593 = vadd.f32 %v2203, %v2531
      %v2594 = vadd.f32 %v2204, %v2536
      %v2595 = vadd.f32 %v2205, %v2541
      %v2596 = vadd.f32 %v2206, %v2546
      %v2597 = vadd.f32 %v2207, %v2551
      %v2598 = vadd.f32 %v2208, %v2556
      %v2599 = vadd.f32 %v2209, %v2561
      %v2600 = vadd.f32 %v2210, %v2566
      %s2601 = sadd.s32 %s318, 2
      %s2602 = smul.u32 %s2601, 24
      %s2603 = scalar_lea.vmem %s282, %s2602
      %v2604 = vld [vmem:[%s2603] sm:$0xff]
      %v2605 = vld [vmem:[%s2603 + $0x8] sm:$0xff]
      %v2606 = vld [vmem:[%s2603 + $0x18] sm:$0xff]
      %v2607 = vld [vmem:[%s2603 + $0x20] sm:$0xff]
      %v2608 = vld [vmem:[%s2603 + $0x30] sm:$0xff]
      %v2609 = vld [vmem:[%s2603 + $0x38] sm:$0xff]
      %v2610 = vld [vmem:[%s2603 + $0x48] sm:$0xff]
      %v2611 = vld [vmem:[%s2603 + $0x50] sm:$0xff]
      %v2612 = vld [vmem:[%s2603 + $0x60] sm:$0xff]
      %v2613 = vld [vmem:[%s2603 + $0x68] sm:$0xff]
      %v2614 = vld [vmem:[%s2603 + $0x78] sm:$0xff]
      %v2615 = vld [vmem:[%s2603 + $0x80] sm:$0xff]
      %v2616 = vld [vmem:[%s2603 + $0x90] sm:$0xff]
      %v2617 = vld [vmem:[%s2603 + $0x98] sm:$0xff]
      %v2618 = vld [vmem:[%s2603 + $0xa8] sm:$0xff]
      %v2619 = vld [vmem:[%s2603 + $0xb0] sm:$0xff]
      %v2620 = vld [vmem:[%s2603 + $0xc0] sm:$0xff]
      %v2621 = vld [vmem:[%s2603 + $0xc8] sm:$0xff]
      %v2622 = vld [vmem:[%s2603 + $0xd8] sm:$0xff]
      %v2623 = vld [vmem:[%s2603 + $0xe0] sm:$0xff]
      %v2624 = vld [vmem:[%s2603 + $0xf0] sm:$0xff]
      %v2625 = vld [vmem:[%s2603 + $0xf8] sm:$0xff]
      %v2626 = vld [vmem:[%s2603 + $0x108] sm:$0xff]
      %v2627 = vld [vmem:[%s2603 + $0x110] sm:$0xff]
      %v2628 = vld [vmem:[%s2603 + $0x120] sm:$0xff]
      %v2629 = vld [vmem:[%s2603 + $0x128] sm:$0xff]
      %v2630 = vld [vmem:[%s2603 + $0x138] sm:$0xff]
      %v2631 = vld [vmem:[%s2603 + $0x140] sm:$0xff]
      %v2632 = vld [vmem:[%s2603 + $0x150] sm:$0xff]
      %v2633 = vld [vmem:[%s2603 + $0x158] sm:$0xff]
      %v2634 = vld [vmem:[%s2603 + $0x168] sm:$0xff]
      %v2635 = vld [vmem:[%s2603 + $0x170] sm:$0xff]
      %s2636 = scalar_lea.vmem %s294, 24
      %v2637 = vld [vmem:[%s2636] sm:$0xf]
      %v2639 = vsel %vm388, %v2604, 0
      %v2642 = vsel %vm388, %v2605, 0
      %v2645 = vsel %vm388, %v2606, 0
      %v2648 = vsel %vm388, %v2607, 0
      %v2651 = vsel %vm388, %v2608, 0
      %v2654 = vsel %vm388, %v2609, 0
      %v2657 = vsel %vm388, %v2610, 0
      %v2660 = vsel %vm388, %v2611, 0
      %v2663 = vsel %vm388, %v2612, 0
      %v2666 = vsel %vm388, %v2613, 0
      %v2669 = vsel %vm388, %v2614, 0
      %v2672 = vsel %vm388, %v2615, 0
      %v2675 = vsel %vm388, %v2616, 0
      %v2678 = vsel %vm388, %v2617, 0
      %v2681 = vsel %vm388, %v2618, 0
      %v2684 = vsel %vm388, %v2619, 0
      %v2687 = vsel %vm388, %v2620, 0
      %v2690 = vsel %vm388, %v2621, 0
      %v2693 = vsel %vm388, %v2622, 0
      %v2696 = vsel %vm388, %v2623, 0
      %v2699 = vsel %vm388, %v2624, 0
      %v2702 = vsel %vm388, %v2625, 0
      %v2705 = vsel %vm388, %v2626, 0
      %v2708 = vsel %vm388, %v2627, 0
      %v2711 = vsel %vm388, %v2628, 0
      %v2714 = vsel %vm388, %v2629, 0
      %v2717 = vsel %vm388, %v2630, 0
      %v2720 = vsel %vm388, %v2631, 0
      %v2723 = vsel %vm388, %v2632, 0
      %v2726 = vsel %vm388, %v2633, 0
      %v2729 = vsel %vm388, %v2634, 0
      %v2732 = vsel %vm388, %v2635, 0
      %v2735 = vsel %vm485, %v2637, 0
      %2737 = vmatprep.subr.mxu0 0.0
      %2738 = vmatpush1.msra.mxu0 %v2735
      %2739 = vmatprep.subr.mxu0 0.0
      %2740 = vmatpush1.msra.mxu0 0.0
      %2741 = vmatprep.subr.mxu0 0.0
      %2742 = vmatpush1.msra.mxu0 0.0
      %2743 = vmatprep.subr.mxu0 0.0
      %2744 = vmatpush1.msra.mxu0 0.0
      %2745 = vmatprep.subr.mxu0 0.0
      %2746 = vmatpush1.msra.mxu0 0.0
      %2747 = vmatprep.subr.mxu0 0.0
      %2748 = vmatpush1.msra.mxu0 0.0
      %2749 = vmatprep.subr.mxu0 0.0
      %2750 = vmatpush1.msra.mxu0 0.0
      %2751 = vmatprep.subr.mxu0 0.0
      %2752 = vmatpush1.msra.mxu0 0.0
      %2753 = vmatprep.subr.mxu0 0.0
      %2754 = vmatpush1.msra.mxu0 0.0
      %2755 = vmatprep.subr.mxu0 0.0
      %2756 = vmatpush1.msra.mxu0 0.0
      %2757 = vmatprep.subr.mxu0 0.0
      %2758 = vmatpush1.msra.mxu0 0.0
      %2759 = vmatprep.subr.mxu0 0.0
      %2760 = vmatpush1.msra.mxu0 0.0
      %2761 = vmatprep.subr.mxu0 0.0
      %2762 = vmatpush1.msra.mxu0 0.0
      %2763 = vmatprep.subr.mxu0 0.0
      %2764 = vmatpush1.msra.mxu0 0.0
      %2765 = vmatprep.subr.mxu0 0.0
      %2766 = vmatpush1.msra.mxu0 0.0
      %2767 = vmatprep.subr.mxu0 0.0
      %2768 = vmatpush1.msra.mxu0 0.0
      %2769 = vmatprep.subr.mxu0 0.0
      %2770 = vmatpush1.msra.mxu0 0.0
      %2771 = vmatprep.subr.mxu0 0.0
      %2772 = vmatpush1.msra.mxu0 0.0
      %2773 = vmatprep.subr.mxu0 0.0
      %2774 = vmatpush1.msra.mxu0 0.0
      %2775 = vmatprep.subr.mxu0 0.0
      %2776 = vmatpush1.msra.mxu0 0.0
      %2777 = vmatprep.subr.mxu0 0.0
      %2778 = vmatpush1.msra.mxu0 0.0
      %2779 = vmatprep.subr.mxu0 0.0
      %2780 = vmatpush1.msra.mxu0 0.0
      %2781 = vmatprep.subr.mxu0 0.0
      %2782 = vmatpush1.msra.mxu0 0.0
      %2783 = vmatprep.subr.mxu0 0.0
      %2784 = vmatpush1.msra.mxu0 0.0
      %2785 = vmatprep.subr.mxu0 0.0
      %2786 = vmatpush1.msra.mxu0 0.0
      %2787 = vmatprep.subr.mxu0 0.0
      %2788 = vmatpush1.msra.mxu0 0.0
      %2789 = vmatprep.subr.mxu0 0.0
      %2790 = vmatpush1.msra.mxu0 0.0
      %2791 = vmatprep.subr.mxu0 0.0
      %2792 = vmatpush1.msra.mxu0 0.0
      %2793 = vmatprep.subr.mxu0 0.0
      %2794 = vmatpush1.msra.mxu0 0.0
      %2795 = vmatprep.subr.mxu0 0.0
      %2796 = vmatpush1.msra.mxu0 0.0
      %2797 = vmatprep.subr.mxu0 0.0
      %2798 = vmatpush1.msra.mxu0 0.0
      %2799 = vmatprep.subr.mxu0 0.0
      %2800 = vmatpush1.msra.mxu0 0.0
      %2801 = vmatprep.mubr.f32.mxu0 0.0
      %2802 = vmatmul.mubr.f32.gmra.mrb[0].mxu0 %v2639
      %v2803 = vpop.f32.mrb[0].mxu0
      %v2804 = vadd.f32 0.0, %v2803
      %v2805 = vpop.f32.mrb[0].mxu0
      %2806 = vmatprep.mubr.f32.mxu0 0.0
      %2807 = vmatmul.mubr.f32.gmra.mrb[0].mxu0 %v2642
      %v2808 = vpop.f32.mrb[0].mxu0
      %v2809 = vadd.f32 0.0, %v2808
      %v2810 = vpop.f32.mrb[0].mxu0
      %2811 = vmatprep.mubr.f32.mxu0 0.0
      %2812 = vmatmul.mubr.f32.gmra.mrb[0].mxu0 %v2645
      %v2813 = vpop.f32.mrb[0].mxu0
      %v2814 = vadd.f32 0.0, %v2813
      %v2815 = vpop.f32.mrb[0].mxu0
      %2816 = vmatprep.mubr.f32.mxu0 0.0
      %2817 = vmatmul.mubr.f32.gmra.mrb[0].mxu0 %v2648
      %v2818 = vpop.f32.mrb[0].mxu0
      %v2819 = vadd.f32 0.0, %v2818
      %v2820 = vpop.f32.mrb[0].mxu0
      %2821 = vmatprep.mubr.f32.mxu0 0.0
      %2822 = vmatmul.mubr.f32.gmra.mrb[0].mxu0 %v2651
      %v2823 = vpop.f32.mrb[0].mxu0
      %v2824 = vadd.f32 0.0, %v2823
      %v2825 = vpop.f32.mrb[0].mxu0
      %2826 = vmatprep.mubr.f32.mxu0 0.0
      %2827 = vmatmul.mubr.f32.gmra.mrb[0].mxu0 %v2654
      %v2828 = vpop.f32.mrb[0].mxu0
      %v2829 = vadd.f32 0.0, %v2828
      %v2830 = vpop.f32.mrb[0].mxu0
      %2831 = vmatprep.mubr.f32.mxu0 0.0
      %2832 = vmatmul.mubr.f32.gmra.mrb[0].mxu0 %v2657
      %v2833 = vpop.f32.mrb[0].mxu0
      %v2834 = vadd.f32 0.0, %v2833
      %v2835 = vpop.f32.mrb[0].mxu0
      %2836 = vmatprep.mubr.f32.mxu0 0.0
      %2837 = vmatmul.mubr.f32.gmra.mrb[0].mxu0 %v2660
      %v2838 = vpop.f32.mrb[0].mxu0
      %v2839 = vadd.f32 0.0, %v2838
      %v2840 = vpop.f32.mrb[0].mxu0
      %2841 = vmatprep.mubr.f32.mxu0 0.0
      %2842 = vmatmul.mubr.f32.gmra.mrb[0].mxu0 %v2663
      %v2843 = vpop.f32.mrb[0].mxu0
      %v2844 = vadd.f32 0.0, %v2843
      %v2845 = vpop.f32.mrb[0].mxu0
      %2846 = vmatprep.mubr.f32.mxu0 0.0
      %2847 = vmatmul.mubr.f32.gmra.mrb[0].mxu0 %v2666
      %v2848 = vpop.f32.mrb[0].mxu0
      %v2849 = vadd.f32 0.0, %v2848
      %v2850 = vpop.f32.mrb[0].mxu0
      %2851 = vmatprep.mubr.f32.mxu0 0.0
      %2852 = vmatmul.mubr.f32.gmra.mrb[0].mxu0 %v2669
      %v2853 = vpop.f32.mrb[0].mxu0
      %v2854 = vadd.f32 0.0, %v2853
      %v2855 = vpop.f32.mrb[0].mxu0
      %2856 = vmatprep.mubr.f32.mxu0 0.0
      %2857 = vmatmul.mubr.f32.gmra.mrb[0].mxu0 %v2672
      %v2858 = vpop.f32.mrb[0].mxu0
      %v2859 = vadd.f32 0.0, %v2858
      %v2860 = vpop.f32.mrb[0].mxu0
      %2861 = vmatprep.mubr.f32.mxu0 0.0
      %2862 = vmatmul.mubr.f32.gmra.mrb[0].mxu0 %v2675
      %v2863 = vpop.f32.mrb[0].mxu0
      %v2864 = vadd.f32 0.0, %v2863
      %v2865 = vpop.f32.mrb[0].mxu0
      %2866 = vmatprep.mubr.f32.mxu0 0.0
      %2867 = vmatmul.mubr.f32.gmra.mrb[0].mxu0 %v2678
      %v2868 = vpop.f32.mrb[0].mxu0
      %v2869 = vadd.f32 0.0, %v2868
      %v2870 = vpop.f32.mrb[0].mxu0
      %2871 = vmatprep.mubr.f32.mxu0 0.0
      %2872 = vmatmul.mubr.f32.gmra.mrb[0].mxu0 %v2681
      %v2873 = vpop.f32.mrb[0].mxu0
      %v2874 = vadd.f32 0.0, %v2873
      %v2875 = vpop.f32.mrb[0].mxu0
      %2876 = vmatprep.mubr.f32.mxu0 0.0
      %2877 = vmatmul.mubr.f32.gmra.mrb[0].mxu0 %v2684
      %v2878 = vpop.f32.mrb[0].mxu0
      %v2879 = vadd.f32 0.0, %v2878
      %v2880 = vpop.f32.mrb[0].mxu0
      %2881 = vmatprep.mubr.f32.mxu0 0.0
      %2882 = vmatmul.mubr.f32.gmra.mrb[0].mxu0 %v2687
      %v2883 = vpop.f32.mrb[0].mxu0
      %v2884 = vadd.f32 0.0, %v2883
      %v2885 = vpop.f32.mrb[0].mxu0
      %2886 = vmatprep.mubr.f32.mxu0 0.0
      %2887 = vmatmul.mubr.f32.gmra.mrb[0].mxu0 %v2690
      %v2888 = vpop.f32.mrb[0].mxu0
      %v2889 = vadd.f32 0.0, %v2888
      %v2890 = vpop.f32.mrb[0].mxu0
      %2891 = vmatprep.mubr.f32.mxu0 0.0
      %2892 = vmatmul.mubr.f32.gmra.mrb[0].mxu0 %v2693
      %v2893 = vpop.f32.mrb[0].mxu0
      %v2894 = vadd.f32 0.0, %v2893
      %v2895 = vpop.f32.mrb[0].mxu0
      %2896 = vmatprep.mubr.f32.mxu0 0.0
      %2897 = vmatmul.mubr.f32.gmra.mrb[0].mxu0 %v2696
      %v2898 = vpop.f32.mrb[0].mxu0
      %v2899 = vadd.f32 0.0, %v2898
      %v2900 = vpop.f32.mrb[0].mxu0
      %2901 = vmatprep.mubr.f32.mxu0 0.0
      %2902 = vmatmul.mubr.f32.gmra.mrb[0].mxu0 %v2699
      %v2903 = vpop.f32.mrb[0].mxu0
      %v2904 = vadd.f32 0.0, %v2903
      %v2905 = vpop.f32.mrb[0].mxu0
      %2906 = vmatprep.mubr.f32.mxu0 0.0
      %2907 = vmatmul.mubr.f32.gmra.mrb[0].mxu0 %v2702
      %v2908 = vpop.f32.mrb[0].mxu0
      %v2909 = vadd.f32 0.0, %v2908
      %v2910 = vpop.f32.mrb[0].mxu0
      %2911 = vmatprep.mubr.f32.mxu0 0.0
      %2912 = vmatmul.mubr.f32.gmra.mrb[0].mxu0 %v2705
      %v2913 = vpop.f32.mrb[0].mxu0
      %v2914 = vadd.f32 0.0, %v2913
      %v2915 = vpop.f32.mrb[0].mxu0
      %2916 = vmatprep.mubr.f32.mxu0 0.0
      %2917 = vmatmul.mubr.f32.gmra.mrb[0].mxu0 %v2708
      %v2918 = vpop.f32.mrb[0].mxu0
      %v2919 = vadd.f32 0.0, %v2918
      %v2920 = vpop.f32.mrb[0].mxu0
      %2921 = vmatprep.mubr.f32.mxu0 0.0
      %2922 = vmatmul.mubr.f32.gmra.mrb[0].mxu0 %v2711
      %v2923 = vpop.f32.mrb[0].mxu0
      %v2924 = vadd.f32 0.0, %v2923
      %v2925 = vpop.f32.mrb[0].mxu0
      %2926 = vmatprep.mubr.f32.mxu0 0.0
      %2927 = vmatmul.mubr.f32.gmra.mrb[0].mxu0 %v2714
      %v2928 = vpop.f32.mrb[0].mxu0
      %v2929 = vadd.f32 0.0, %v2928
      %v2930 = vpop.f32.mrb[0].mxu0
      %2931 = vmatprep.mubr.f32.mxu0 0.0
      %2932 = vmatmul.mubr.f32.gmra.mrb[0].mxu0 %v2717
      %v2933 = vpop.f32.mrb[0].mxu0
      %v2934 = vadd.f32 0.0, %v2933
      %v2935 = vpop.f32.mrb[0].mxu0
      %2936 = vmatprep.mubr.f32.mxu0 0.0
      %2937 = vmatmul.mubr.f32.gmra.mrb[0].mxu0 %v2720
      %v2938 = vpop.f32.mrb[0].mxu0
      %v2939 = vadd.f32 0.0, %v2938
      %v2940 = vpop.f32.mrb[0].mxu0
      %2941 = vmatprep.mubr.f32.mxu0 0.0
      %2942 = vmatmul.mubr.f32.gmra.mrb[0].mxu0 %v2723
      %v2943 = vpop.f32.mrb[0].mxu0
      %v2944 = vadd.f32 0.0, %v2943
      %v2945 = vpop.f32.mrb[0].mxu0
      %2946 = vmatprep.mubr.f32.mxu0 0.0
      %2947 = vmatmul.mubr.f32.gmra.mrb[0].mxu0 %v2726
      %v2948 = vpop.f32.mrb[0].mxu0
      %v2949 = vadd.f32 0.0, %v2948
      %v2950 = vpop.f32.mrb[0].mxu0
      %2951 = vmatprep.mubr.f32.mxu0 0.0
      %2952 = vmatmul.mubr.f32.gmra.mrb[0].mxu0 %v2729
      %v2953 = vpop.f32.mrb[0].mxu0
      %v2954 = vadd.f32 0.0, %v2953
      %v2955 = vpop.f32.mrb[0].mxu0
      %2956 = vmatprep.mubr.f32.mxu0 0.0
      %2957 = vmatmul.mubr.f32.gmra.mrb[0].mxu0 %v2732
      %v2958 = vpop.f32.mrb[0].mxu0
      %v2959 = vadd.f32 0.0, %v2958
      %v2960 = vpop.f32.mrb[0].mxu0
      %2961 = vdwg.mxu0
      %v2962 = vadd.f32 %v2569, %v2804
      %v2963 = vadd.f32 %v2570, %v2809
      %v2964 = vadd.f32 %v2571, %v2814
      %v2965 = vadd.f32 %v2572, %v2819
      %v2966 = vadd.f32 %v2573, %v2824
      %v2967 = vadd.f32 %v2574, %v2829
      %v2968 = vadd.f32 %v2575, %v2834
      %v2969 = vadd.f32 %v2576, %v2839
      %v2970 = vadd.f32 %v2577, %v2844
      %v2971 = vadd.f32 %v2578, %v2849
      %v2972 = vadd.f32 %v2579, %v2854
      %v2973 = vadd.f32 %v2580, %v2859
      %v2974 = vadd.f32 %v2581, %v2864
      %v2975 = vadd.f32 %v2582, %v2869
      %v2976 = vadd.f32 %v2583, %v2874
      %v2977 = vadd.f32 %v2584, %v2879
      %v2978 = vadd.f32 %v2585, %v2884
      %v2979 = vadd.f32 %v2586, %v2889
      %v2980 = vadd.f32 %v2587, %v2894
      %v2981 = vadd.f32 %v2588, %v2899
      %v2982 = vadd.f32 %v2589, %v2904
      %v2983 = vadd.f32 %v2590, %v2909
      %v2984 = vadd.f32 %v2591, %v2914
      %v2985 = vadd.f32 %v2592, %v2919
      %v2986 = vadd.f32 %v2593, %v2924
      %v2987 = vadd.f32 %v2594, %v2929
      %v2988 = vadd.f32 %v2595, %v2934
      %v2989 = vadd.f32 %v2596, %v2939
      %v2990 = vadd.f32 %v2597, %v2944
      %v2991 = vadd.f32 %v2598, %v2949
      %v2992 = vadd.f32 %v2599, %v2954
      %v2993 = vadd.f32 %v2600, %v2959
      %v2994 = vld [vmem:[%s2603 + $0x1] sm:$0xff]
      %v2995 = vld [vmem:[%s2603 + $0x9] sm:$0xff]
      %v2996 = vld [vmem:[%s2603 + $0x19] sm:$0xff]
      %v2997 = vld [vmem:[%s2603 + $0x21] sm:$0xff]
      %v2998 = vld [vmem:[%s2603 + $0x31] sm:$0xff]
      %v2999 = vld [vmem:[%s2603 + $0x39] sm:$0xff]
      %v3000 = vld [vmem:[%s2603 + $0x49] sm:$0xff]
      %v3001 = vld [vmem:[%s2603 + $0x51] sm:$0xff]
      %v3002 = vld [vmem:[%s2603 + $0x61] sm:$0xff]
      %v3003 = vld [vmem:[%s2603 + $0x69] sm:$0xff]
      %v3004 = vld [vmem:[%s2603 + $0x79] sm:$0xff]
      %v3005 = vld [vmem:[%s2603 + $0x81] sm:$0xff]
      %v3006 = vld [vmem:[%s2603 + $0x91] sm:$0xff]
      %v3007 = vld [vmem:[%s2603 + $0x99] sm:$0xff]
      %v3008 = vld [vmem:[%s2603 + $0xa9] sm:$0xff]
      %v3009 = vld [vmem:[%s2603 + $0xb1] sm:$0xff]
      %v3010 = vld [vmem:[%s2603 + $0xc1] sm:$0xff]
      %v3011 = vld [vmem:[%s2603 + $0xc9] sm:$0xff]
      %v3012 = vld [vmem:[%s2603 + $0xd9] sm:$0xff]
      %v3013 = vld [vmem:[%s2603 + $0xe1] sm:$0xff]
      %v3014 = vld [vmem:[%s2603 + $0xf1] sm:$0xff]
      %v3015 = vld [vmem:[%s2603 + $0xf9] sm:$0xff]
      %v3016 = vld [vmem:[%s2603 + $0x109] sm:$0xff]
      %v3017 = vld [vmem:[%s2603 + $0x111] sm:$0xff]
      %v3018 = vld [vmem:[%s2603 + $0x121] sm:$0xff]
      %v3019 = vld [vmem:[%s2603 + $0x129] sm:$0xff]
      %v3020 = vld [vmem:[%s2603 + $0x139] sm:$0xff]
      %v3021 = vld [vmem:[%s2603 + $0x141] sm:$0xff]
      %v3022 = vld [vmem:[%s2603 + $0x151] sm:$0xff]
      %v3023 = vld [vmem:[%s2603 + $0x159] sm:$0xff]
      %v3024 = vld [vmem:[%s2603 + $0x169] sm:$0xff]
      %v3025 = vld [vmem:[%s2603 + $0x171] sm:$0xff]
      %s3026 = scalar_lea.vmem %s294, 28
      %v3027 = vld [vmem:[%s3026] sm:$0xf]
      %v3029 = vsel %vm388, %v2994, 0
      %v3032 = vsel %vm388, %v2995, 0
      %v3035 = vsel %vm388, %v2996, 0
      %v3038 = vsel %vm388, %v2997, 0
      %v3041 = vsel %vm388, %v2998, 0
      %v3044 = vsel %vm388, %v2999, 0
      %v3047 = vsel %vm388, %v3000, 0
      %v3050 = vsel %vm388, %v3001, 0
      %v3053 = vsel %vm388, %v3002, 0
      %v3056 = vsel %vm388, %v3003, 0
      %v3059 = vsel %vm388, %v3004, 0
      %v3062 = vsel %vm388, %v3005, 0
      %v3065 = vsel %vm388, %v3006, 0
      %v3068 = vsel %vm388, %v3007, 0
      %v3071 = vsel %vm388, %v3008, 0
      %v3074 = vsel %vm388, %v3009, 0
      %v3077 = vsel %vm388, %v3010, 0
      %v3080 = vsel %vm388, %v3011, 0
      %v3083 = vsel %vm388, %v3012, 0
      %v3086 = vsel %vm388, %v3013, 0
      %v3089 = vsel %vm388, %v3014, 0
      %v3092 = vsel %vm388, %v3015, 0
      %v3095 = vsel %vm388, %v3016, 0
      %v3098 = vsel %vm388, %v3017, 0
      %v3101 = vsel %vm388, %v3018, 0
      %v3104 = vsel %vm388, %v3019, 0
      %v3107 = vsel %vm388, %v3020, 0
      %v3110 = vsel %vm388, %v3021, 0
      %v3113 = vsel %vm388, %v3022, 0
      %v3116 = vsel %vm388, %v3023, 0
      %v3119 = vsel %vm388, %v3024, 0
      %v3122 = vsel %vm388, %v3025, 0
      %v3125 = vsel %vm485, %v3027, 0
      %3127 = vmatprep.subr.mxu0 0.0
      %3128 = vmatpush1.msra.mxu0 %v3125
      %3129 = vmatprep.subr.mxu0 0.0
      %3130 = vmatpush1.msra.mxu0 0.0
      %3131 = vmatprep.subr.mxu0 0.0
      %3132 = vmatpush1.msra.mxu0 0.0
      %3133 = vmatprep.subr.mxu0 0.0
      %3134 = vmatpush1.msra.mxu0 0.0
      %3135 = vmatprep.subr.mxu0 0.0
      %3136 = vmatpush1.msra.mxu0 0.0
      %3137 = vmatprep.subr.mxu0 0.0
      %3138 = vmatpush1.msra.mxu0 0.0
      %3139 = vmatprep.subr.mxu0 0.0
      %3140 = vmatpush1.msra.mxu0 0.0
      %3141 = vmatprep.subr.mxu0 0.0
      %3142 = vmatpush1.msra.mxu0 0.0
      %3143 = vmatprep.subr.mxu0 0.0
      %3144 = vmatpush1.msra.mxu0 0.0
      %3145 = vmatprep.subr.mxu0 0.0
      %3146 = vmatpush1.msra.mxu0 0.0
      %3147 = vmatprep.subr.mxu0 0.0
      %3148 = vmatpush1.msra.mxu0 0.0
      %3149 = vmatprep.subr.mxu0 0.0
      %3150 = vmatpush1.msra.mxu0 0.0
      %3151 = vmatprep.subr.mxu0 0.0
      %3152 = vmatpush1.msra.mxu0 0.0
      %3153 = vmatprep.subr.mxu0 0.0
      %3154 = vmatpush1.msra.mxu0 0.0
      %3155 = vmatprep.subr.mxu0 0.0
      %3156 = vmatpush1.msra.mxu0 0.0
      %3157 = vmatprep.subr.mxu0 0.0
      %3158 = vmatpush1.msra.mxu0 0.0
      %3159 = vmatprep.subr.mxu0 0.0
      %3160 = vmatpush1.msra.mxu0 0.0
      %3161 = vmatprep.subr.mxu0 0.0
      %3162 = vmatpush1.msra.mxu0 0.0
      %3163 = vmatprep.subr.mxu0 0.0
      %3164 = vmatpush1.msra.mxu0 0.0
      %3165 = vmatprep.subr.mxu0 0.0
      %3166 = vmatpush1.msra.mxu0 0.0
      %3167 = vmatprep.subr.mxu0 0.0
      %3168 = vmatpush1.msra.mxu0 0.0
      %3169 = vmatprep.subr.mxu0 0.0
      %3170 = vmatpush1.msra.mxu0 0.0
      %3171 = vmatprep.subr.mxu0 0.0
      %3172 = vmatpush1.msra.mxu0 0.0
      %3173 = vmatprep.subr.mxu0 0.0
      %3174 = vmatpush1.msra.mxu0 0.0
      %3175 = vmatprep.subr.mxu0 0.0
      %3176 = vmatpush1.msra.mxu0 0.0
      %3177 = vmatprep.subr.mxu0 0.0
      %3178 = vmatpush1.msra.mxu0 0.0
      %3179 = vmatprep.subr.mxu0 0.0
      %3180 = vmatpush1.msra.mxu0 0.0
      %3181 = vmatprep.subr.mxu0 0.0
      %3182 = vmatpush1.msra.mxu0 0.0
      %3183 = vmatprep.subr.mxu0 0.0
      %3184 = vmatpush1.msra.mxu0 0.0
      %3185 = vmatprep.subr.mxu0 0.0
      %3186 = vmatpush1.msra.mxu0 0.0
      %3187 = vmatprep.subr.mxu0 0.0
      %3188 = vmatpush1.msra.mxu0 0.0
      %3189 = vmatprep.subr.mxu0 0.0
      %3190 = vmatpush1.msra.mxu0 0.0
      %3191 = vmatprep.mubr.f32.mxu0 0.0
      %3192 = vmatmul.mubr.f32.gmra.mrb[0].mxu0 %v3029
      %v3193 = vpop.f32.mrb[0].mxu0
      %v3194 = vadd.f32 0.0, %v3193
      %v3195 = vpop.f32.mrb[0].mxu0
      %3196 = vmatprep.mubr.f32.mxu0 0.0
      %3197 = vmatmul.mubr.f32.gmra.mrb[0].mxu0 %v3032
      %v3198 = vpop.f32.mrb[0].mxu0
      %v3199 = vadd.f32 0.0, %v3198
      %v3200 = vpop.f32.mrb[0].mxu0
      %3201 = vmatprep.mubr.f32.mxu0 0.0
      %3202 = vmatmul.mubr.f32.gmra.mrb[0].mxu0 %v3035
      %v3203 = vpop.f32.mrb[0].mxu0
      %v3204 = vadd.f32 0.0, %v3203
      %v3205 = vpop.f32.mrb[0].mxu0
      %3206 = vmatprep.mubr.f32.mxu0 0.0
      %3207 = vmatmul.mubr.f32.gmra.mrb[0].mxu0 %v3038
      %v3208 = vpop.f32.mrb[0].mxu0
      %v3209 = vadd.f32 0.0, %v3208
      %v3210 = vpop.f32.mrb[0].mxu0
      %3211 = vmatprep.mubr.f32.mxu0 0.0
      %3212 = vmatmul.mubr.f32.gmra.mrb[0].mxu0 %v3041
      %v3213 = vpop.f32.mrb[0].mxu0
      %v3214 = vadd.f32 0.0, %v3213
      %v3215 = vpop.f32.mrb[0].mxu0
      %3216 = vmatprep.mubr.f32.mxu0 0.0
      %3217 = vmatmul.mubr.f32.gmra.mrb[0].mxu0 %v3044
      %v3218 = vpop.f32.mrb[0].mxu0
      %v3219 = vadd.f32 0.0, %v3218
      %v3220 = vpop.f32.mrb[0].mxu0
      %3221 = vmatprep.mubr.f32.mxu0 0.0
      %3222 = vmatmul.mubr.f32.gmra.mrb[0].mxu0 %v3047
      %v3223 = vpop.f32.mrb[0].mxu0
      %v3224 = vadd.f32 0.0, %v3223
      %v3225 = vpop.f32.mrb[0].mxu0
      %3226 = vmatprep.mubr.f32.mxu0 0.0
      %3227 = vmatmul.mubr.f32.gmra.mrb[0].mxu0 %v3050
      %v3228 = vpop.f32.mrb[0].mxu0
      %v3229 = vadd.f32 0.0, %v3228
      %v3230 = vpop.f32.mrb[0].mxu0
      %3231 = vmatprep.mubr.f32.mxu0 0.0
      %3232 = vmatmul.mubr.f32.gmra.mrb[0].mxu0 %v3053
      %v3233 = vpop.f32.mrb[0].mxu0
      %v3234 = vadd.f32 0.0, %v3233
      %v3235 = vpop.f32.mrb[0].mxu0
      %3236 = vmatprep.mubr.f32.mxu0 0.0
      %3237 = vmatmul.mubr.f32.gmra.mrb[0].mxu0 %v3056
      %v3238 = vpop.f32.mrb[0].mxu0
      %v3239 = vadd.f32 0.0, %v3238
      %v3240 = vpop.f32.mrb[0].mxu0
      %3241 = vmatprep.mubr.f32.mxu0 0.0
      %3242 = vmatmul.mubr.f32.gmra.mrb[0].mxu0 %v3059
      %v3243 = vpop.f32.mrb[0].mxu0
      %v3244 = vadd.f32 0.0, %v3243
      %v3245 = vpop.f32.mrb[0].mxu0
      %3246 = vmatprep.mubr.f32.mxu0 0.0
      %3247 = vmatmul.mubr.f32.gmra.mrb[0].mxu0 %v3062
      %v3248 = vpop.f32.mrb[0].mxu0
      %v3249 = vadd.f32 0.0, %v3248
      %v3250 = vpop.f32.mrb[0].mxu0
      %3251 = vmatprep.mubr.f32.mxu0 0.0
      %3252 = vmatmul.mubr.f32.gmra.mrb[0].mxu0 %v3065
      %v3253 = vpop.f32.mrb[0].mxu0
      %v3254 = vadd.f32 0.0, %v3253
      %v3255 = vpop.f32.mrb[0].mxu0
      %3256 = vmatprep.mubr.f32.mxu0 0.0
      %3257 = vmatmul.mubr.f32.gmra.mrb[0].mxu0 %v3068
      %v3258 = vpop.f32.mrb[0].mxu0
      %v3259 = vadd.f32 0.0, %v3258
      %v3260 = vpop.f32.mrb[0].mxu0
      %3261 = vmatprep.mubr.f32.mxu0 0.0
      %3262 = vmatmul.mubr.f32.gmra.mrb[0].mxu0 %v3071
      %v3263 = vpop.f32.mrb[0].mxu0
      %v3264 = vadd.f32 0.0, %v3263
      %v3265 = vpop.f32.mrb[0].mxu0
      %3266 = vmatprep.mubr.f32.mxu0 0.0
      %3267 = vmatmul.mubr.f32.gmra.mrb[0].mxu0 %v3074
      %v3268 = vpop.f32.mrb[0].mxu0
      %v3269 = vadd.f32 0.0, %v3268
      %v3270 = vpop.f32.mrb[0].mxu0
      %3271 = vmatprep.mubr.f32.mxu0 0.0
      %3272 = vmatmul.mubr.f32.gmra.mrb[0].mxu0 %v3077
      %v3273 = vpop.f32.mrb[0].mxu0
      %v3274 = vadd.f32 0.0, %v3273
      %v3275 = vpop.f32.mrb[0].mxu0
      %3276 = vmatprep.mubr.f32.mxu0 0.0
      %3277 = vmatmul.mubr.f32.gmra.mrb[0].mxu0 %v3080
      %v3278 = vpop.f32.mrb[0].mxu0
      %v3279 = vadd.f32 0.0, %v3278
      %v3280 = vpop.f32.mrb[0].mxu0
      %3281 = vmatprep.mubr.f32.mxu0 0.0
      %3282 = vmatmul.mubr.f32.gmra.mrb[0].mxu0 %v3083
      %v3283 = vpop.f32.mrb[0].mxu0
      %v3284 = vadd.f32 0.0, %v3283
      %v3285 = vpop.f32.mrb[0].mxu0
      %3286 = vmatprep.mubr.f32.mxu0 0.0
      %3287 = vmatmul.mubr.f32.gmra.mrb[0].mxu0 %v3086
      %v3288 = vpop.f32.mrb[0].mxu0
      %v3289 = vadd.f32 0.0, %v3288
      %v3290 = vpop.f32.mrb[0].mxu0
      %3291 = vmatprep.mubr.f32.mxu0 0.0
      %3292 = vmatmul.mubr.f32.gmra.mrb[0].mxu0 %v3089
      %v3293 = vpop.f32.mrb[0].mxu0
      %v3294 = vadd.f32 0.0, %v3293
      %v3295 = vpop.f32.mrb[0].mxu0
      %3296 = vmatprep.mubr.f32.mxu0 0.0
      %3297 = vmatmul.mubr.f32.gmra.mrb[0].mxu0 %v3092
      %v3298 = vpop.f32.mrb[0].mxu0
      %v3299 = vadd.f32 0.0, %v3298
      %v3300 = vpop.f32.mrb[0].mxu0
      %3301 = vmatprep.mubr.f32.mxu0 0.0
      %3302 = vmatmul.mubr.f32.gmra.mrb[0].mxu0 %v3095
      %v3303 = vpop.f32.mrb[0].mxu0
      %v3304 = vadd.f32 0.0, %v3303
      %v3305 = vpop.f32.mrb[0].mxu0
      %3306 = vmatprep.mubr.f32.mxu0 0.0
      %3307 = vmatmul.mubr.f32.gmra.mrb[0].mxu0 %v3098
      %v3308 = vpop.f32.mrb[0].mxu0
      %v3309 = vadd.f32 0.0, %v3308
      %v3310 = vpop.f32.mrb[0].mxu0
      %3311 = vmatprep.mubr.f32.mxu0 0.0
      %3312 = vmatmul.mubr.f32.gmra.mrb[0].mxu0 %v3101
      %v3313 = vpop.f32.mrb[0].mxu0
      %v3314 = vadd.f32 0.0, %v3313
      %v3315 = vpop.f32.mrb[0].mxu0
      %3316 = vmatprep.mubr.f32.mxu0 0.0
      %3317 = vmatmul.mubr.f32.gmra.mrb[0].mxu0 %v3104
      %v3318 = vpop.f32.mrb[0].mxu0
      %v3319 = vadd.f32 0.0, %v3318
      %v3320 = vpop.f32.mrb[0].mxu0
      %3321 = vmatprep.mubr.f32.mxu0 0.0
      %3322 = vmatmul.mubr.f32.gmra.mrb[0].mxu0 %v3107
      %v3323 = vpop.f32.mrb[0].mxu0
      %v3324 = vadd.f32 0.0, %v3323
      %v3325 = vpop.f32.mrb[0].mxu0
      %3326 = vmatprep.mubr.f32.mxu0 0.0
      %3327 = vmatmul.mubr.f32.gmra.mrb[0].mxu0 %v3110
      %v3328 = vpop.f32.mrb[0].mxu0
      %v3329 = vadd.f32 0.0, %v3328
      %v3330 = vpop.f32.mrb[0].mxu0
      %3331 = vmatprep.mubr.f32.mxu0 0.0
      %3332 = vmatmul.mubr.f32.gmra.mrb[0].mxu0 %v3113
      %v3333 = vpop.f32.mrb[0].mxu0
      %v3334 = vadd.f32 0.0, %v3333
      %v3335 = vpop.f32.mrb[0].mxu0
      %3336 = vmatprep.mubr.f32.mxu0 0.0
      %3337 = vmatmul.mubr.f32.gmra.mrb[0].mxu0 %v3116
      %v3338 = vpop.f32.mrb[0].mxu0
      %v3339 = vadd.f32 0.0, %v3338
      %v3340 = vpop.f32.mrb[0].mxu0
      %3341 = vmatprep.mubr.f32.mxu0 0.0
      %3342 = vmatmul.mubr.f32.gmra.mrb[0].mxu0 %v3119
      %v3343 = vpop.f32.mrb[0].mxu0
      %v3344 = vadd.f32 0.0, %v3343
      %v3345 = vpop.f32.mrb[0].mxu0
      %3346 = vmatprep.mubr.f32.mxu0 0.0
      %3347 = vmatmul.mubr.f32.gmra.mrb[0].mxu0 %v3122
      %v3348 = vpop.f32.mrb[0].mxu0
      %v3349 = vadd.f32 0.0, %v3348
      %v3350 = vpop.f32.mrb[0].mxu0
      %3351 = vdwg.mxu0
      %v3352 = vadd.f32 %v2962, %v3194
      %v3353 = vadd.f32 %v2963, %v3199
      %v3354 = vadd.f32 %v2964, %v3204
      %v3355 = vadd.f32 %v2965, %v3209
      %v3356 = vadd.f32 %v2966, %v3214
      %v3357 = vadd.f32 %v2967, %v3219
      %v3358 = vadd.f32 %v2968, %v3224
      %v3359 = vadd.f32 %v2969, %v3229
      %v3360 = vadd.f32 %v2970, %v3234
      %v3361 = vadd.f32 %v2971, %v3239
      %v3362 = vadd.f32 %v2972, %v3244
      %v3363 = vadd.f32 %v2973, %v3249
      %v3364 = vadd.f32 %v2974, %v3254
      %v3365 = vadd.f32 %v2975, %v3259
      %v3366 = vadd.f32 %v2976, %v3264
      %v3367 = vadd.f32 %v2977, %v3269
      %v3368 = vadd.f32 %v2978, %v3274
      %v3369 = vadd.f32 %v2979, %v3279
      %v3370 = vadd.f32 %v2980, %v3284
      %v3371 = vadd.f32 %v2981, %v3289
      %v3372 = vadd.f32 %v2982, %v3294
      %v3373 = vadd.f32 %v2983, %v3299
      %v3374 = vadd.f32 %v2984, %v3304
      %v3375 = vadd.f32 %v2985, %v3309
      %v3376 = vadd.f32 %v2986, %v3314
      %v3377 = vadd.f32 %v2987, %v3319
      %v3378 = vadd.f32 %v2988, %v3324
      %v3379 = vadd.f32 %v2989, %v3329
      %v3380 = vadd.f32 %v2990, %v3334
      %v3381 = vadd.f32 %v2991, %v3339
      %v3382 = vadd.f32 %v2992, %v3344
      %v3383 = vadd.f32 %v2993, %v3349
      %v3384 = vld [vmem:[%s2603 + $0x2] sm:$0xff]
      %v3385 = vld [vmem:[%s2603 + $0xa] sm:$0xff]
      %v3386 = vld [vmem:[%s2603 + $0x1a] sm:$0xff]
      %v3387 = vld [vmem:[%s2603 + $0x22] sm:$0xff]
      %v3388 = vld [vmem:[%s2603 + $0x32] sm:$0xff]
      %v3389 = vld [vmem:[%s2603 + $0x3a] sm:$0xff]
      %v3390 = vld [vmem:[%s2603 + $0x4a] sm:$0xff]
      %v3391 = vld [vmem:[%s2603 + $0x52] sm:$0xff]
      %v3392 = vld [vmem:[%s2603 + $0x62] sm:$0xff]
      %v3393 = vld [vmem:[%s2603 + $0x6a] sm:$0xff]
      %v3394 = vld [vmem:[%s2603 + $0x7a] sm:$0xff]
      %v3395 = vld [vmem:[%s2603 + $0x82] sm:$0xff]
      %v3396 = vld [vmem:[%s2603 + $0x92] sm:$0xff]
      %v3397 = vld [vmem:[%s2603 + $0x9a] sm:$0xff]
      %v3398 = vld [vmem:[%s2603 + $0xaa] sm:$0xff]
      %v3399 = vld [vmem:[%s2603 + $0xb2] sm:$0xff]
      %v3400 = vld [vmem:[%s2603 + $0xc2] sm:$0xff]
      %v3401 = vld [vmem:[%s2603 + $0xca] sm:$0xff]
      %v3402 = vld [vmem:[%s2603 + $0xda] sm:$0xff]
      %v3403 = vld [vmem:[%s2603 + $0xe2] sm:$0xff]
      %v3404 = vld [vmem:[%s2603 + $0xf2] sm:$0xff]
      %v3405 = vld [vmem:[%s2603 + $0xfa] sm:$0xff]
      %v3406 = vld [vmem:[%s2603 + $0x10a] sm:$0xff]
      %v3407 = vld [vmem:[%s2603 + $0x112] sm:$0xff]
      %v3408 = vld [vmem:[%s2603 + $0x122] sm:$0xff]
      %v3409 = vld [vmem:[%s2603 + $0x12a] sm:$0xff]
      %v3410 = vld [vmem:[%s2603 + $0x13a] sm:$0xff]
      %v3411 = vld [vmem:[%s2603 + $0x142] sm:$0xff]
      %v3412 = vld [vmem:[%s2603 + $0x152] sm:$0xff]
      %v3413 = vld [vmem:[%s2603 + $0x15a] sm:$0xff]
      %v3414 = vld [vmem:[%s2603 + $0x16a] sm:$0xff]
      %v3415 = vld [vmem:[%s2603 + $0x172] sm:$0xff]
      %s3416 = scalar_lea.vmem %s294, 32
      %v3417 = vld [vmem:[%s3416] sm:$0xf]
      %v3419 = vsel %vm388, %v3384, 0
      %v3422 = vsel %vm388, %v3385, 0
      %v3425 = vsel %vm388, %v3386, 0
      %v3428 = vsel %vm388, %v3387, 0
      %v3431 = vsel %vm388, %v3388, 0
      %v3434 = vsel %vm388, %v3389, 0
      %v3437 = vsel %vm388, %v3390, 0
      %v3440 = vsel %vm388, %v3391, 0
      %v3443 = vsel %vm388, %v3392, 0
      %v3446 = vsel %vm388, %v3393, 0
      %v3449 = vsel %vm388, %v3394, 0
      %v3452 = vsel %vm388, %v3395, 0
      %v3455 = vsel %vm388, %v3396, 0
      %v3458 = vsel %vm388, %v3397, 0
      %v3461 = vsel %vm388, %v3398, 0
      %v3464 = vsel %vm388, %v3399, 0
      %v3467 = vsel %vm388, %v3400, 0
      %v3470 = vsel %vm388, %v3401, 0
      %v3473 = vsel %vm388, %v3402, 0
      %v3476 = vsel %vm388, %v3403, 0
      %v3479 = vsel %vm388, %v3404, 0
      %v3482 = vsel %vm388, %v3405, 0
      %v3485 = vsel %vm388, %v3406, 0
      %v3488 = vsel %vm388, %v3407, 0
      %v3491 = vsel %vm388, %v3408, 0
      %v3494 = vsel %vm388, %v3409, 0
      %v3497 = vsel %vm388, %v3410, 0
      %v3500 = vsel %vm388, %v3411, 0
      %v3503 = vsel %vm388, %v3412, 0
      %v3506 = vsel %vm388, %v3413, 0
      %v3509 = vsel %vm388, %v3414, 0
      %v3512 = vsel %vm388, %v3415, 0
      %v3515 = vsel %vm485, %v3417, 0
      %3517 = vmatprep.subr.mxu0 0.0
      %3518 = vmatpush1.msra.mxu0 %v3515
      %3519 = vmatprep.subr.mxu0 0.0
      %3520 = vmatpush1.msra.mxu0 0.0
      %3521 = vmatprep.subr.mxu0 0.0
      %3522 = vmatpush1.msra.mxu0 0.0
      %3523 = vmatprep.subr.mxu0 0.0
      %3524 = vmatpush1.msra.mxu0 0.0
      %3525 = vmatprep.subr.mxu0 0.0
      %3526 = vmatpush1.msra.mxu0 0.0
      %3527 = vmatprep.subr.mxu0 0.0
      %3528 = vmatpush1.msra.mxu0 0.0
      %3529 = vmatprep.subr.mxu0 0.0
      %3530 = vmatpush1.msra.mxu0 0.0
      %3531 = vmatprep.subr.mxu0 0.0
      %3532 = vmatpush1.msra.mxu0 0.0
      %3533 = vmatprep.subr.mxu0 0.0
      %3534 = vmatpush1.msra.mxu0 0.0
      %3535 = vmatprep.subr.mxu0 0.0
      %3536 = vmatpush1.msra.mxu0 0.0
      %3537 = vmatprep.subr.mxu0 0.0
      %3538 = vmatpush1.msra.mxu0 0.0
      %3539 = vmatprep.subr.mxu0 0.0
      %3540 = vmatpush1.msra.mxu0 0.0
      %3541 = vmatprep.subr.mxu0 0.0
      %3542 = vmatpush1.msra.mxu0 0.0
      %3543 = vmatprep.subr.mxu0 0.0
      %3544 = vmatpush1.msra.mxu0 0.0
      %3545 = vmatprep.subr.mxu0 0.0
      %3546 = vmatpush1.msra.mxu0 0.0
      %3547 = vmatprep.subr.mxu0 0.0
      %3548 = vmatpush1.msra.mxu0 0.0
      %3549 = vmatprep.subr.mxu0 0.0
      %3550 = vmatpush1.msra.mxu0 0.0
      %3551 = vmatprep.subr.mxu0 0.0
      %3552 = vmatpush1.msra.mxu0 0.0
      %3553 = vmatprep.subr.mxu0 0.0
      %3554 = vmatpush1.msra.mxu0 0.0
      %3555 = vmatprep.subr.mxu0 0.0
      %3556 = vmatpush1.msra.mxu0 0.0
      %3557 = vmatprep.subr.mxu0 0.0
      %3558 = vmatpush1.msra.mxu0 0.0
      %3559 = vmatprep.subr.mxu0 0.0
      %3560 = vmatpush1.msra.mxu0 0.0
      %3561 = vmatprep.subr.mxu0 0.0
      %3562 = vmatpush1.msra.mxu0 0.0
      %3563 = vmatprep.subr.mxu0 0.0
      %3564 = vmatpush1.msra.mxu0 0.0
      %3565 = vmatprep.subr.mxu0 0.0
      %3566 = vmatpush1.msra.mxu0 0.0
      %3567 = vmatprep.subr.mxu0 0.0
      %3568 = vmatpush1.msra.mxu0 0.0
      %3569 = vmatprep.subr.mxu0 0.0
      %3570 = vmatpush1.msra.mxu0 0.0
      %3571 = vmatprep.subr.mxu0 0.0
      %3572 = vmatpush1.msra.mxu0 0.0
      %3573 = vmatprep.subr.mxu0 0.0
      %3574 = vmatpush1.msra.mxu0 0.0
      %3575 = vmatprep.subr.mxu0 0.0
      %3576 = vmatpush1.msra.mxu0 0.0
      %3577 = vmatprep.subr.mxu0 0.0
      %3578 = vmatpush1.msra.mxu0 0.0
      %3579 = vmatprep.subr.mxu0 0.0
      %3580 = vmatpush1.msra.mxu0 0.0
      %3581 = vmatprep.mubr.f32.mxu0 0.0
      %3582 = vmatmul.mubr.f32.gmra.mrb[0].mxu0 %v3419
      %v3583 = vpop.f32.mrb[0].mxu0
      %v3584 = vadd.f32 0.0, %v3583
      %v3585 = vpop.f32.mrb[0].mxu0
      %3586 = vmatprep.mubr.f32.mxu0 0.0
      %3587 = vmatmul.mubr.f32.gmra.mrb[0].mxu0 %v3422
      %v3588 = vpop.f32.mrb[0].mxu0
      %v3589 = vadd.f32 0.0, %v3588
      %v3590 = vpop.f32.mrb[0].mxu0
      %3591 = vmatprep.mubr.f32.mxu0 0.0
      %3592 = vmatmul.mubr.f32.gmra.mrb[0].mxu0 %v3425
      %v3593 = vpop.f32.mrb[0].mxu0
      %v3594 = vadd.f32 0.0, %v3593
      %v3595 = vpop.f32.mrb[0].mxu0
      %3596 = vmatprep.mubr.f32.mxu0 0.0
      %3597 = vmatmul.mubr.f32.gmra.mrb[0].mxu0 %v3428
      %v3598 = vpop.f32.mrb[0].mxu0
      %v3599 = vadd.f32 0.0, %v3598
      %v3600 = vpop.f32.mrb[0].mxu0
      %3601 = vmatprep.mubr.f32.mxu0 0.0
      %3602 = vmatmul.mubr.f32.gmra.mrb[0].mxu0 %v3431
      %v3603 = vpop.f32.mrb[0].mxu0
      %v3604 = vadd.f32 0.0, %v3603
      %v3605 = vpop.f32.mrb[0].mxu0
      %3606 = vmatprep.mubr.f32.mxu0 0.0
      %3607 = vmatmul.mubr.f32.gmra.mrb[0].mxu0 %v3434
      %v3608 = vpop.f32.mrb[0].mxu0
      %v3609 = vadd.f32 0.0, %v3608
      %v3610 = vpop.f32.mrb[0].mxu0
      %3611 = vmatprep.mubr.f32.mxu0 0.0
      %3612 = vmatmul.mubr.f32.gmra.mrb[0].mxu0 %v3437
      %v3613 = vpop.f32.mrb[0].mxu0
      %v3614 = vadd.f32 0.0, %v3613
      %v3615 = vpop.f32.mrb[0].mxu0
      %3616 = vmatprep.mubr.f32.mxu0 0.0
      %3617 = vmatmul.mubr.f32.gmra.mrb[0].mxu0 %v3440
      %v3618 = vpop.f32.mrb[0].mxu0
      %v3619 = vadd.f32 0.0, %v3618
      %v3620 = vpop.f32.mrb[0].mxu0
      %3621 = vmatprep.mubr.f32.mxu0 0.0
      %3622 = vmatmul.mubr.f32.gmra.mrb[0].mxu0 %v3443
      %v3623 = vpop.f32.mrb[0].mxu0
      %v3624 = vadd.f32 0.0, %v3623
      %v3625 = vpop.f32.mrb[0].mxu0
      %3626 = vmatprep.mubr.f32.mxu0 0.0
      %3627 = vmatmul.mubr.f32.gmra.mrb[0].mxu0 %v3446
      %v3628 = vpop.f32.mrb[0].mxu0
      %v3629 = vadd.f32 0.0, %v3628
      %v3630 = vpop.f32.mrb[0].mxu0
      %3631 = vmatprep.mubr.f32.mxu0 0.0
      %3632 = vmatmul.mubr.f32.gmra.mrb[0].mxu0 %v3449
      %v3633 = vpop.f32.mrb[0].mxu0
      %v3634 = vadd.f32 0.0, %v3633
      %v3635 = vpop.f32.mrb[0].mxu0
      %3636 = vmatprep.mubr.f32.mxu0 0.0
      %3637 = vmatmul.mubr.f32.gmra.mrb[0].mxu0 %v3452
      %v3638 = vpop.f32.mrb[0].mxu0
      %v3639 = vadd.f32 0.0, %v3638
      %v3640 = vpop.f32.mrb[0].mxu0
      %3641 = vmatprep.mubr.f32.mxu0 0.0
      %3642 = vmatmul.mubr.f32.gmra.mrb[0].mxu0 %v3455
      %v3643 = vpop.f32.mrb[0].mxu0
      %v3644 = vadd.f32 0.0, %v3643
      %v3645 = vpop.f32.mrb[0].mxu0
      %3646 = vmatprep.mubr.f32.mxu0 0.0
      %3647 = vmatmul.mubr.f32.gmra.mrb[0].mxu0 %v3458
      %v3648 = vpop.f32.mrb[0].mxu0
      %v3649 = vadd.f32 0.0, %v3648
      %v3650 = vpop.f32.mrb[0].mxu0
      %3651 = vmatprep.mubr.f32.mxu0 0.0
      %3652 = vmatmul.mubr.f32.gmra.mrb[0].mxu0 %v3461
      %v3653 = vpop.f32.mrb[0].mxu0
      %v3654 = vadd.f32 0.0, %v3653
      %v3655 = vpop.f32.mrb[0].mxu0
      %3656 = vmatprep.mubr.f32.mxu0 0.0
      %3657 = vmatmul.mubr.f32.gmra.mrb[0].mxu0 %v3464
      %v3658 = vpop.f32.mrb[0].mxu0
      %v3659 = vadd.f32 0.0, %v3658
      %v3660 = vpop.f32.mrb[0].mxu0
      %3661 = vmatprep.mubr.f32.mxu0 0.0
      %3662 = vmatmul.mubr.f32.gmra.mrb[0].mxu0 %v3467
      %v3663 = vpop.f32.mrb[0].mxu0
      %v3664 = vadd.f32 0.0, %v3663
      %v3665 = vpop.f32.mrb[0].mxu0
      %3666 = vmatprep.mubr.f32.mxu0 0.0
      %3667 = vmatmul.mubr.f32.gmra.mrb[0].mxu0 %v3470
      %v3668 = vpop.f32.mrb[0].mxu0
      %v3669 = vadd.f32 0.0, %v3668
      %v3670 = vpop.f32.mrb[0].mxu0
      %3671 = vmatprep.mubr.f32.mxu0 0.0
      %3672 = vmatmul.mubr.f32.gmra.mrb[0].mxu0 %v3473
      %v3673 = vpop.f32.mrb[0].mxu0
      %v3674 = vadd.f32 0.0, %v3673
      %v3675 = vpop.f32.mrb[0].mxu0
      %3676 = vmatprep.mubr.f32.mxu0 0.0
      %3677 = vmatmul.mubr.f32.gmra.mrb[0].mxu0 %v3476
      %v3678 = vpop.f32.mrb[0].mxu0
      %v3679 = vadd.f32 0.0, %v3678
      %v3680 = vpop.f32.mrb[0].mxu0
      %3681 = vmatprep.mubr.f32.mxu0 0.0
      %3682 = vmatmul.mubr.f32.gmra.mrb[0].mxu0 %v3479
      %v3683 = vpop.f32.mrb[0].mxu0
      %v3684 = vadd.f32 0.0, %v3683
      %v3685 = vpop.f32.mrb[0].mxu0
      %3686 = vmatprep.mubr.f32.mxu0 0.0
      %3687 = vmatmul.mubr.f32.gmra.mrb[0].mxu0 %v3482
      %v3688 = vpop.f32.mrb[0].mxu0
      %v3689 = vadd.f32 0.0, %v3688
      %v3690 = vpop.f32.mrb[0].mxu0
      %3691 = vmatprep.mubr.f32.mxu0 0.0
      %3692 = vmatmul.mubr.f32.gmra.mrb[0].mxu0 %v3485
      %v3693 = vpop.f32.mrb[0].mxu0
      %v3694 = vadd.f32 0.0, %v3693
      %v3695 = vpop.f32.mrb[0].mxu0
      %3696 = vmatprep.mubr.f32.mxu0 0.0
      %3697 = vmatmul.mubr.f32.gmra.mrb[0].mxu0 %v3488
      %v3698 = vpop.f32.mrb[0].mxu0
      %v3699 = vadd.f32 0.0, %v3698
      %v3700 = vpop.f32.mrb[0].mxu0
      %3701 = vmatprep.mubr.f32.mxu0 0.0
      %3702 = vmatmul.mubr.f32.gmra.mrb[0].mxu0 %v3491
      %v3703 = vpop.f32.mrb[0].mxu0
      %v3704 = vadd.f32 0.0, %v3703
      %v3705 = vpop.f32.mrb[0].mxu0
      %3706 = vmatprep.mubr.f32.mxu0 0.0
      %3707 = vmatmul.mubr.f32.gmra.mrb[0].mxu0 %v3494
      %v3708 = vpop.f32.mrb[0].mxu0
      %v3709 = vadd.f32 0.0, %v3708
      %v3710 = vpop.f32.mrb[0].mxu0
      %3711 = vmatprep.mubr.f32.mxu0 0.0
      %3712 = vmatmul.mubr.f32.gmra.mrb[0].mxu0 %v3497
      %v3713 = vpop.f32.mrb[0].mxu0
      %v3714 = vadd.f32 0.0, %v3713
      %v3715 = vpop.f32.mrb[0].mxu0
      %3716 = vmatprep.mubr.f32.mxu0 0.0
      %3717 = vmatmul.mubr.f32.gmra.mrb[0].mxu0 %v3500
      %v3718 = vpop.f32.mrb[0].mxu0
      %v3719 = vadd.f32 0.0, %v3718
      %v3720 = vpop.f32.mrb[0].mxu0
      %3721 = vmatprep.mubr.f32.mxu0 0.0
      %3722 = vmatmul.mubr.f32.gmra.mrb[0].mxu0 %v3503
      %v3723 = vpop.f32.mrb[0].mxu0
      %v3724 = vadd.f32 0.0, %v3723
      %v3725 = vpop.f32.mrb[0].mxu0
      %3726 = vmatprep.mubr.f32.mxu0 0.0
      %3727 = vmatmul.mubr.f32.gmra.mrb[0].mxu0 %v3506
      %v3728 = vpop.f32.mrb[0].mxu0
      %v3729 = vadd.f32 0.0, %v3728
      %v3730 = vpop.f32.mrb[0].mxu0
      %3731 = vmatprep.mubr.f32.mxu0 0.0
      %3732 = vmatmul.mubr.f32.gmra.mrb[0].mxu0 %v3509
      %v3733 = vpop.f32.mrb[0].mxu0
      %v3734 = vadd.f32 0.0, %v3733
      %v3735 = vpop.f32.mrb[0].mxu0
      %3736 = vmatprep.mubr.f32.mxu0 0.0
      %3737 = vmatmul.mubr.f32.gmra.mrb[0].mxu0 %v3512
      %v3738 = vpop.f32.mrb[0].mxu0
      %v3739 = vadd.f32 0.0, %v3738
      %v3740 = vpop.f32.mrb[0].mxu0
      %3741 = vdwg.mxu0
      %v3742 = vadd.f32 %v3352, %v3584
      %v3743 = vadd.f32 %v3353, %v3589
      %v3744 = vadd.f32 %v3354, %v3594
      %v3745 = vadd.f32 %v3355, %v3599
      %v3746 = vadd.f32 %v3356, %v3604
      %v3747 = vadd.f32 %v3357, %v3609
      %v3748 = vadd.f32 %v3358, %v3614
      %v3749 = vadd.f32 %v3359, %v3619
      %v3750 = vadd.f32 %v3360, %v3624
      %v3751 = vadd.f32 %v3361, %v3629
      %v3752 = vadd.f32 %v3362, %v3634
      %v3753 = vadd.f32 %v3363, %v3639
      %v3754 = vadd.f32 %v3364, %v3644
      %v3755 = vadd.f32 %v3365, %v3649
      %v3756 = vadd.f32 %v3366, %v3654
      %v3757 = vadd.f32 %v3367, %v3659
      %v3758 = vadd.f32 %v3368, %v3664
      %v3759 = vadd.f32 %v3369, %v3669
      %v3760 = vadd.f32 %v3370, %v3674
      %v3761 = vadd.f32 %v3371, %v3679
      %v3762 = vadd.f32 %v3372, %v3684
      %v3763 = vadd.f32 %v3373, %v3689
      %v3764 = vadd.f32 %v3374, %v3694
      %v3765 = vadd.f32 %v3375, %v3699
      %v3766 = vadd.f32 %v3376, %v3704
      %v3767 = vadd.f32 %v3377, %v3709
      %v3768 = vadd.f32 %v3378, %v3714
      %v3769 = vadd.f32 %v3379, %v3719
      %v3770 = vadd.f32 %v3380, %v3724
      %v3771 = vadd.f32 %v3381, %v3729
      %v3772 = vadd.f32 %v3382, %v3734
      %v3773 = vadd.f32 %v3383, %v3739
      %v3774 = vld [vmem:[%s300] sm:$0x1]
      %v3776 = vlaneseq
      %v3777 = vshrl.u32 %v3776, 7
      %v3778 = vsub.s32 0, %v3777
      %v3779 = vrot.slane %v3774, %v3778
      %v3781 = vadd.f32 %v3742, %v3779
      %v3782 = vadd.f32 %v3743, %v3779
      %v3783 = vadd.f32 %v3744, %v3779
      %v3784 = vadd.f32 %v3745, %v3779
      %v3785 = vadd.f32 %v3746, %v3779
      %v3786 = vadd.f32 %v3747, %v3779
      %v3787 = vadd.f32 %v3748, %v3779
      %v3788 = vadd.f32 %v3749, %v3779
      %v3789 = vadd.f32 %v3750, %v3779
      %v3790 = vadd.f32 %v3751, %v3779
      %v3791 = vadd.f32 %v3752, %v3779
      %v3792 = vadd.f32 %v3753, %v3779
      %v3793 = vadd.f32 %v3754, %v3779
      %v3794 = vadd.f32 %v3755, %v3779
      %v3795 = vadd.f32 %v3756, %v3779
      %v3796 = vadd.f32 %v3757, %v3779
      %v3797 = vadd.f32 %v3758, %v3779
      %v3798 = vadd.f32 %v3759, %v3779
      %v3799 = vadd.f32 %v3760, %v3779
      %v3800 = vadd.f32 %v3761, %v3779
      %v3801 = vadd.f32 %v3762, %v3779
      %v3802 = vadd.f32 %v3763, %v3779
      %v3803 = vadd.f32 %v3764, %v3779
      %v3804 = vadd.f32 %v3765, %v3779
      %v3805 = vadd.f32 %v3766, %v3779
      %v3806 = vadd.f32 %v3767, %v3779
      %v3807 = vadd.f32 %v3768, %v3779
      %v3808 = vadd.f32 %v3769, %v3779
      %v3809 = vadd.f32 %v3770, %v3779
      %v3810 = vadd.f32 %v3771, %v3779
      %v3811 = vadd.f32 %v3772, %v3779
      %v3812 = vadd.f32 %v3773, %v3779
      %vm3813 = vcmask 64512
      %3814 = vst.msk [vmem:[%s316] sm:$0xff] %vm3813, %v3781
      %3815 = vst.msk [vmem:[%s316 + $0x8] sm:$0xff] %vm3813, %v3782
      %3816 = vst.msk [vmem:[%s316 + $0x10] sm:$0xff] %vm3813, %v3783
      %3817 = vst.msk [vmem:[%s316 + $0x18] sm:$0xff] %vm3813, %v3784
      %3818 = vst.msk [vmem:[%s316 + $0x20] sm:$0xff] %vm3813, %v3785
      %3819 = vst.msk [vmem:[%s316 + $0x28] sm:$0xff] %vm3813, %v3786
      %3820 = vst.msk [vmem:[%s316 + $0x30] sm:$0xff] %vm3813, %v3787
      %3821 = vst.msk [vmem:[%s316 + $0x38] sm:$0xff] %vm3813, %v3788
      %3822 = vst.msk [vmem:[%s316 + $0x40] sm:$0xff] %vm3813, %v3789
      %3823 = vst.msk [vmem:[%s316 + $0x48] sm:$0xff] %vm3813, %v3790
      %3824 = vst.msk [vmem:[%s316 + $0x50] sm:$0xff] %vm3813, %v3791
      %3825 = vst.msk [vmem:[%s316 + $0x58] sm:$0xff] %vm3813, %v3792
      %3826 = vst.msk [vmem:[%s316 + $0x60] sm:$0xff] %vm3813, %v3793
      %3827 = vst.msk [vmem:[%s316 + $0x68] sm:$0xff] %vm3813, %v3794
      %3828 = vst.msk [vmem:[%s316 + $0x70] sm:$0xff] %vm3813, %v3795
      %3829 = vst.msk [vmem:[%s316 + $0x78] sm:$0xff] %vm3813, %v3796
      %3830 = vst.msk [vmem:[%s316 + $0x80] sm:$0xff] %vm3813, %v3797
      %3831 = vst.msk [vmem:[%s316 + $0x88] sm:$0xff] %vm3813, %v3798
      %3832 = vst.msk [vmem:[%s316 + $0x90] sm:$0xff] %vm3813, %v3799
      %3833 = vst.msk [vmem:[%s316 + $0x98] sm:$0xff] %vm3813, %v3800
      %3834 = vst.msk [vmem:[%s316 + $0xa0] sm:$0xff] %vm3813, %v3801
      %3835 = vst.msk [vmem:[%s316 + $0xa8] sm:$0xff] %vm3813, %v3802
      %3836 = vst.msk [vmem:[%s316 + $0xb0] sm:$0xff] %vm3813, %v3803
      %3837 = vst.msk [vmem:[%s316 + $0xb8] sm:$0xff] %vm3813, %v3804
      %3838 = vst.msk [vmem:[%s316 + $0xc0] sm:$0xff] %vm3813, %v3805
      %3839 = vst.msk [vmem:[%s316 + $0xc8] sm:$0xff] %vm3813, %v3806
      %3840 = vst.msk [vmem:[%s316 + $0xd0] sm:$0xff] %vm3813, %v3807
      %3841 = vst.msk [vmem:[%s316 + $0xd8] sm:$0xff] %vm3813, %v3808
      %3842 = vst.msk [vmem:[%s316 + $0xe0] sm:$0xff] %vm3813, %v3809
      %3843 = vst.msk [vmem:[%s316 + $0xe8] sm:$0xff] %vm3813, %v3810
      %3844 = vst.msk [vmem:[%s316 + $0xf0] sm:$0xff] %vm3813, %v3811
      %3845 = vst.msk [vmem:[%s316 + $0xf8] sm:$0xff] %vm3813, %v3812
      %s3846 = smul.u32 32, %s24
      %p3847 = scmp.lt.s32.totalorder %s23, 1
      %s3848 = scalar_select %p3847, %s23, 1
      %p3849 = scmp.lt.s32.totalorder %s21, 0
      %s3850 = scalar_select %p3849, %s21, 0
      %p3851 = scmp.lt.s32.totalorder %s3846, 31
      %s3852 = scalar_select %p3851, %s3846, 31
      %p3853 = scmp.lt.s32.totalorder %s22, 0
      %s3854 = scalar_select %p3853, %s22, 0
      %s3855 = sadd.s32 %s3854, %s3852
      %s3856 = smul.addr %s3850, 32
      %s3857 = sadd.s32 %s3855, %s3856
      %s3858 = smul.addr %s3848, 32
      %s3859 = sadd.s32 %s3857, %s3858
      %s3860 = smul.addr %s3859, 8
      %s3861 = scalar_lea.vmem %s3, %s3860
      // Predicated region
      $region33: #{tpu_custom_call.1} parent=31 // pred_check
        %p3862 = pneg %p159
      $region34: #{tpu_custom_call.1} parent=31 // pred_check_branch
        %3864 = sbr.rel (%p3862) target = $region36
      $region35: #{tpu_custom_call.1} parent=31 // pred_region
        %s3865 = smul.u32 32, %s24
      $region36: #{tpu_custom_call.1} parent=31 // pred_fallthru
        _
    $region32: #{tpu_custom_call.1} parent=5 // pred_fallthru
      _
    %p3866 = scmp.le.s32.totalorder 2, %s9
    // Predicated region
    $region37: #{tpu_custom_call.1} parent=5 // pred_check
      %p3867 = pneg %p3866
    $region38: #{tpu_custom_call.1} parent=5 // pred_check_branch
      %3869 = sbr.rel (%p3867) target = $region40
    $region39: #{tpu_custom_call.1} parent=5 // pred_region
      %s3870 = ssub.s32 %s9, 2
      // Predicated region
      $region41: #{tpu_custom_call.1} parent=39 // pred_check
        %p3871 = pneg %p165
      $region42: #{tpu_custom_call.1} parent=39 // pred_check_branch
        %3873 = sbr.rel (%p3871) target = $region44
      $region43: #{tpu_custom_call.1} parent=39 // pred_region
        %s3874 = smul.u32 32, %s29
        %p3875 = scmp.lt.s32.totalorder %s28, 1
        %s3876 = scalar_select %p3875, %s28, 1
        %p3877 = scmp.lt.s32.totalorder %s26, 0
        %s3878 = scalar_select %p3877, %s26, 0
        %p3879 = scmp.lt.s32.totalorder %s3874, 31
        %s3880 = scalar_select %p3879, %s3874, 31
        %p3881 = scmp.lt.s32.totalorder %s27, 0
        %s3882 = scalar_select %p3881, %s27, 0
        %s3883 = sadd.s32 %s3882, %s3880
        %s3884 = smul.addr %s3878, 32
        %s3885 = sadd.s32 %s3883, %s3884
        %s3886 = smul.addr %s3876, 32
        %s3887 = sadd.s32 %s3885, %s3886
        %s3888 = smul.addr %s3887, 8
        %s3889 = scalar_lea.vmem %s3, %s3888
      $region44: #{tpu_custom_call.1} parent=39 // pred_fallthru
        _
    $region40: #{tpu_custom_call.1} parent=5 // pred_fallthru
      _
  $region6: #{tpu_custom_call.1} parent=0 // loop_footer
    %s13 = sadd.s32 1, %s9
  $region7: #{tpu_custom_call.1} parent=0 // loop_footer_branch
    %8 = sbr.rel target = $region3
  $region8: #{tpu_custom_call.1} parent=0 // loop_exit
    _

</llo_original>
